<compile_context>
chip_gen: v7x
topology: tpu7x:2x2x1
jax: 0.10.0
libtpu: 0.0.40
codegen_flags: <defaults>
</compile_context>

<pallas_src>
import math
import functools

import jax
import jax.numpy as jnp
from jax.experimental import pallas as pl
from jax.experimental.pallas import tpu as pltpu

NINF = -1000000.0
LN_EPS = 1e-5


def _layer_norm(v, w, b):
    # single-pass variance (E[x^2] - mu^2)
    mu = jnp.mean(v, axis=-1, keepdims=True)
    mu2 = jnp.mean(v * v, axis=-1, keepdims=True)
    var = jnp.maximum(mu2 - mu * mu, 0.0)
    return (v - mu) * jax.lax.rsqrt(var + LN_EPS) * w + b


# ----------------------------------------------------------------------------
# Kernel: one grid step = (batch sub-block s, transformer layer l).
# x is carried across the layer axis in a VMEM scratch.
# ----------------------------------------------------------------------------
def _attnhp_layer_kernel(emb_ref, t_ref, lens_ref, wp_ref, c3_ref,
                         wq_ref, wk_ref, wv_ref, bq_ref, bk_ref, bv_ref,
                         wo_ref, b6_ref, w1_ref, b1_ref, w2_ref,
                         o_ref, x_ref,
                         *, nhead, d_model, dim_value, n_layers, use_ff, mm_dtype):
    Bs, L, Din = emb_ref.shape
    D = d_model
    Dv = dim_value
    M = Bs * L
    l = pl.program_id(1)

    # ---- l == 0: input projection + positional encoding -> residual stream ----
    @pl.when(l == 0)
    def _init():
        emb = emb_ref[...].reshape(M, Din).astype(mm_dtype)
        t = t_ref[...].reshape(M, 1)
        proj_b = c3_ref[0:1, :]
        inv_denum = c3_ref[1:2, :]
        phase = c3_ref[2:3, :]
        # cat([sin(a), cos(a)]) == sin(a_full + phase): single EUP pass
        pe = jnp.sin(t * inv_denum + phase)
        x0 = jnp.dot(emb, wp_ref[...], preferred_element_type=jnp.float32)
        x_ref[...] = x0 + proj_b + pe

    x = x_ref[...]                                           # (M, D) f32

    # ---- attention mask rebuilt in-kernel from seq_lens (no (B,L,L) DMA) ----
    lens = lens_ref[...]                                     # (Bs, 1, 1) int32
    kpos = jax.lax.broadcasted_iota(jnp.int32, (Bs, L, L), 2)
    qpos = jax.lax.broadcasted_iota(jnp.int32, (Bs, L, L), 1)
    invalid = jnp.logical_or(kpos >= lens, qpos <= kpos)     # padding OR causal
    bias = jnp.where(invalid, NINF, 0.0)                     # additive score bias
    # a query row has no valid key iff q == 0 or seq_len == 0 (valid keys: k < min(q, len))
    q1 = jax.lax.broadcasted_iota(jnp.int32, (Bs, L, 1), 1)
    allinv = jnp.logical_or(q1 < 1, lens < 1).astype(jnp.float32).reshape(M, 1)

    xm = x.astype(mm_dtype)
    res = None
    for h in range(nhead):                                   # head-major refs: free leading-axis index
        qh = jnp.dot(xm, wq_ref[h], preferred_element_type=jnp.float32) + bq_ref[h]  # pre-scaled
        kh = jnp.dot(xm, wk_ref[h], preferred_element_type=jnp.float32) + bk_ref[h]
        vh = jnp.dot(xm, wv_ref[h], preferred_element_type=jnp.float32) + bv_ref[h]
        q3 = qh.astype(mm_dtype).reshape(Bs, L, D)
        k3 = kh.astype(mm_dtype).reshape(Bs, L, D)
        w = jnp.einsum("bqd,bkd->bqk", q3, k3,
                       preferred_element_type=jnp.float32) + bias          # (Bs, L, L)
        m = jnp.max(w, axis=-1, keepdims=True)
        e = jnp.exp(w - m)
        p = e * pl.reciprocal(jnp.sum(e, axis=-1, keepdims=True), approx=True)
        ho = jnp.einsum("bqk,bkv->bqv", p.astype(mm_dtype),
                        vh.astype(mm_dtype).reshape(Bs, L, Dv),
                        preferred_element_type=jnp.float32)                # (Bs, L, Dv)
        contrib = jnp.dot(ho.reshape(M, Dv).astype(mm_dtype), wo_ref[h],
                          preferred_element_type=jnp.float32)              # (M, D)
        res = contrib if res is None else res + contrib

    res = res + b6_ref[0:1, :]                               # out_proj bias
    res = jnp.where(allinv > 0.5, 0.0, res)                  # zero rows with no valid key
    x = _layer_norm(x + res, b6_ref[1:2, :], b6_ref[2:3, :])

    if use_ff:
        ff = jnp.dot(x.astype(mm_dtype), w1_ref[...], preferred_element_type=jnp.float32)
        ff = jnp.maximum(ff + b1_ref[...], 0.0)
        ff = jnp.dot(ff.astype(mm_dtype), w2_ref[...], preferred_element_type=jnp.float32)
        x = _layer_norm(x + ff + b6_ref[3:4, :], b6_ref[4:5, :], b6_ref[5:6, :])

    x_ref[...] = x                                           # carry to next layer

    @pl.when(l == n_layers - 1)
    def _write():
        o_ref[...] = x                                       # lane-dense (Bs*L, D) slab


# ----------------------------------------------------------------------------
# Wrapper: host-side weight restacking + one pallas_call.
# ----------------------------------------------------------------------------
def attnhp_forward(embeddings, times, seq_lens, params, *, nhead, dim_value, use_ff,
                   pos_m=1.0, pos_M=2000.0, num_splits=None, mm_dtype=jnp.float32):
    embeddings = embeddings.astype(jnp.float32)
    times = times.astype(jnp.float32)
    B, L, Din = embeddings.shape
    D = params["proj_w"].shape[1]
    layers = params["layers"]
    NL = len(layers)
    Dv = dim_value
    scale = 1.0 / math.sqrt(D)
    dff = layers[0]["w1"].shape[1] if use_ff else 8

    # --- head-major weight restacking; fold 1/sqrt(D) into the q projection ---
    def split_cols(w, n, dh):          # (Din, n*dh) -> (n, Din, dh)
        return jnp.transpose(w.reshape(w.shape[0], n, dh), (1, 0, 2))

    wq_l, wk_l, wv_l, bq_l, bk_l, bv_l = [], [], [], [], [], []
    wo_l, b6_l, w1_l, b1_l, w2_l = [], [], [], [], []
    for lp in layers:
        win, binb = lp["win"], lp["bin"][0]
        wq_l.append(split_cols(win[:, :nhead * D], nhead, D) * scale)
        wk_l.append(split_cols(win[:, nhead * D:2 * nhead * D], nhead, D))
        wv_l.append(split_cols(win[:, 2 * nhead * D:], nhead, Dv))
        bq_l.append(binb[:nhead * D].reshape(nhead, 1, D) * scale)
        bk_l.append(binb[nhead * D:2 * nhead * D].reshape(nhead, 1, D))
        bv_l.append(binb[2 * nhead * D:].reshape(nhead, 1, Dv))
        wo_l.append(lp["wout"].reshape(nhead, Dv, D))
        if use_ff:
            b6_l.append(jnp.concatenate([lp["bout"], lp["n1w"], lp["n1b"],
                                         lp["b2"], lp["n2w"], lp["n2b"]], axis=0))
            w1_l.append(lp["w1"]); b1_l.append(lp["b1"]); w2_l.append(lp["w2"])
        else:
            b6_l.append(jnp.concatenate([lp["bout"], lp["n1w"], lp["n1b"],
                                         jnp.zeros((1, D), jnp.float32),
                                         jnp.ones((1, D), jnp.float32),
                                         jnp.zeros((1, D), jnp.float32)], axis=0))
            w1_l.append(jnp.zeros((D, dff), jnp.float32))
            b1_l.append(jnp.zeros((1, dff), jnp.float32))
            w2_l.append(jnp.zeros((dff, D), jnp.float32))

    wq_all = jnp.stack(wq_l).astype(mm_dtype)        # (NL, nhead, D, D)
    wk_all = jnp.stack(wk_l).astype(mm_dtype)
    wv_all = jnp.stack(wv_l).astype(mm_dtype)        # (NL, nhead, D, Dv)
    bq_all = jnp.stack(bq_l); bk_all = jnp.stack(bk_l); bv_all = jnp.stack(bv_l)
    wo_all = jnp.stack(wo_l).astype(mm_dtype)        # (NL, nhead, Dv, D)
    b6_all = jnp.stack(b6_l)                         # (NL, 6, D)
    w1_all = jnp.stack(w1_l).astype(mm_dtype)        # (NL, D, dff)
    b1_all = jnp.stack(b1_l)                         # (NL, 1, dff)
    w2_all = jnp.stack(w2_l).astype(mm_dtype)        # (NL, dff, D)

    # --- positional-encoder constants (reciprocal + pi/2-phase trick) ---
    dlin = jnp.linspace(0.0, 1.0, D // 2, dtype=jnp.float32)
    denum = pos_m * (5.0 * pos_M / pos_m) ** dlin
    inv_denum = jnp.concatenate([1.0 / denum, 1.0 / denum])
    phase = jnp.concatenate([jnp.zeros(D // 2, jnp.float32),
                             jnp.full((D // 2,), jnp.pi / 2, jnp.float32)])
    c3 = jnp.stack([params["proj_b"][0], inv_denum, phase], axis=0)          # (3, D)

    # --- batch split: sized by VMEM budget, floor of 2 on 2-TC (v7x) chips ---
    try:
        kind = jax.devices()[0].device_kind.lower()
    except Exception:
        kind = ""
    if num_splits is None:
        min_splits = 2 if ("v7" in kind and B >= 2) else 1
        per_be = 4 * L * (Din + 1 + 6 * D + 3 * L + nhead * Dv + (dff if use_ff else 0))
        budget = 8 << 20
        num_splits = 1
        for s in range(1, B + 1):
            if B % s:
                continue
            if s != 1 and ((B // s) * L) % 8 != 0:
                continue
            num_splits = s
            if s >= min_splits and (B // s) * per_be <= budget:
                break
    assert B % num_splits == 0
    Bs = B // num_splits

    try:
        cap = int(getattr(pltpu.get_tpu_info(), "vmem_capacity_bytes", 64 << 20))
    except Exception:
        cap = 64 << 20
    vmem_limit = max(32 << 20, min(cap - cap // 4, 112 << 20))

    lens3 = seq_lens.astype(jnp.int32).reshape(B, 1, 1)

    sub3 = lambda s, l: (s, 0, 0)
    lay4 = lambda s, l: (l, 0, 0, 0)
    lay3 = lambda s, l: (l, 0, 0)
    fix2 = lambda s, l: (0, 0)

    out = pl.pallas_call(
        functools.partial(_attnhp_layer_kernel, nhead=nhead, d_model=D, dim_value=Dv,
                          n_layers=NL, use_ff=use_ff, mm_dtype=mm_dtype),
        out_shape=jax.ShapeDtypeStruct((B * L, D), jnp.float32),
        grid=(num_splits, NL),
        in_specs=[
            pl.BlockSpec((Bs, L, Din), sub3),            # embeddings
            pl.BlockSpec((Bs, L, 1), sub3),              # times
            pl.BlockSpec((Bs, 1, 1), sub3),              # seq_lens (int32)
            pl.BlockSpec((Din, D), fix2),                # input projection W^T
            pl.BlockSpec((3, D), fix2),                  # [proj_b; 1/denum; phase]
            pl.BlockSpec((None, nhead, D, D), lay4),     # Wq (scaled), head-major
            pl.BlockSpec((None, nhead, D, D), lay4),     # Wk
            pl.BlockSpec((None, nhead, D, Dv), lay4),    # Wv
            pl.BlockSpec((None, nhead, 1, D), lay4),     # bq (scaled)
            pl.BlockSpec((None, nhead, 1, D), lay4),     # bk
            pl.BlockSpec((None, nhead, 1, Dv), lay4),    # bv
            pl.BlockSpec((None, nhead, Dv, D), lay4),    # Wout, head-major
            pl.BlockSpec((None, 6, D), lay3),            # [bout,n1w,n1b,b2,n2w,n2b]
            pl.BlockSpec((None, D, dff), lay3),          # linear1 W^T
            pl.BlockSpec((None, 1, dff), lay3),          # linear1 b
            pl.BlockSpec((None, dff, D), lay3),          # linear2 W^T
        ],
        out_specs=pl.BlockSpec((Bs * L, D), lambda s, l: (s, 0)),
        scratch_shapes=[pltpu.VMEM((Bs * L, D), jnp.float32)],   # residual-stream carry
        compiler_params=pltpu.CompilerParams(
            dimension_semantics=("parallel", "arbitrary"),
            vmem_limit_bytes=vmem_limit),
    )(embeddings, times.reshape(B, L, 1), lens3, params["proj_w"].astype(mm_dtype), c3,
      wq_all, wk_all, wv_all, bq_all, bk_all, bv_all, wo_all, b6_all, w1_all, b1_all, w2_all)

    return out.reshape(B, L, D)


# ----------------------------------------------------------------------------
# Pure-JAX reference (semantics copied from the PyTorch module, eval mode)
# ----------------------------------------------------------------------------
def _ref_layer(x, mask, attn_mask, p, nhead, d_model, dim_value, use_ff):
    B, L, _ = x.shape
    proj = x @ p["win"] + p["bin"][0]
    q = proj[..., :nhead * d_model].reshape(B, L, nhead, d_model)
    k = proj[..., nhead * d_model:2 * nhead * d_model].reshape(B, L, nhead, d_model)
    v = proj[..., 2 * nhead * d_model:].reshape(B, L, nhead, dim_value)
    outs = []
    for i in range(nhead):
        w = jnp.einsum("bld,bmd->blm", q[:, :, i], k[:, :, i]) / math.sqrt(d_model)
        w = jnp.where(mask[:, None, :], NINF, w)
        w = jnp.where(attn_mask[None], NINF, w)
        w = jax.nn.softmax(w, axis=-1)
        outs.append(jnp.einsum("blm,bmd->bld", w, v[:, :, i]))
    result = jnp.concatenate(outs, -1) @ p["wout"] + p["bout"][0]
    invalid = jnp.logical_or(mask[:, None, :], attn_mask[None])
    invalid = jnp.all(invalid, axis=2, keepdims=True)
    result = jnp.where(invalid, 0.0, result)

    def ln(val, w, b):
        mu = val.mean(-1, keepdims=True)
        var = ((val - mu) ** 2).mean(-1, keepdims=True)
        return (val - mu) / jnp.sqrt(var + LN_EPS) * w[0] + b[0]

    h = ln(x + result, p["n1w"], p["n1b"])
    if use_ff:
        ff = jnp.maximum(h @ p["w1"] + p["b1"][0], 0.0) @ p["w2"] + p["b2"][0]
        h = ln(h + ff, p["n2w"], p["n2b"])
    return h


def attnhp_reference(embeddings, times, seq_lens, params, *, nhead, dim_value, use_ff,
                     pos_m=1.0, pos_M=2000.0):
    B, L, _ = embeddings.shape
    D = params["proj_w"].shape[1]
    d = jnp.linspace(0.0, 1.0, D // 2, dtype=jnp.float32)
    denum = pos_m * (5.0 * pos_M / pos_m) ** d
    args = times[..., None] / denum
    pe = jnp.concatenate([jnp.sin(args), jnp.cos(args)], -1)
    x = embeddings @ params["proj_w"] + params["proj_b"][0] + pe
    pos = jnp.arange(L)[None, :]
    mask = pos >= seq_lens[:, None]
    rng = jnp.arange(L)
    attn_mask = rng[:, None] <= rng[None, :]
    for lp in params["layers"]:
        x = _ref_layer(x, mask, attn_mask, lp, nhead, D, dim_value, use_ff)
    return x


# ----------------------------------------------------------------------------
# Deterministic parameter construction
# ----------------------------------------------------------------------------
def make_params(key, input_size, hidden, nhead, n_layers, dim_feedforward, dim_value):
    def lin(k, fan_in, fan_out):
        kw, kb = jax.random.split(k)
        lim = 1.0 / math.sqrt(fan_in)
        w = jax.random.uniform(kw, (fan_in, fan_out), jnp.float32, -lim, lim)  # already W^T
        b = jax.random.uniform(kb, (1, fan_out), jnp.float32, -lim, lim)
        return w, b

    keys = jax.random.split(key, 2 + n_layers)
    proj_w, proj_b = lin(keys[0], input_size, hidden)
    layers = []
    dproj = 2 * nhead * hidden + nhead * dim_value
    for i in range(n_layers):
        ks = jax.random.split(keys[2 + i], 4)
        win, bin_ = lin(ks[0], hidden, dproj)
        wout, bout = lin(ks[1], nhead * dim_value, hidden)
        w1, b1 = lin(ks[2], hidden, dim_feedforward)
        w2, b2 = lin(ks[3], dim_feedforward, hidden)
        layers.append(dict(
            win=win, bin=bin_, wout=wout, bout=bout,
            n1w=jnp.ones((1, hidden), jnp.float32), n1b=jnp.zeros((1, hidden), jnp.float32),
            w1=w1, b1=b1, w2=w2, b2=b2,
            n2w=jnp.ones((1, hidden), jnp.float32), n2b=jnp.zeros((1, hidden), jnp.float32),
        ))
    return dict(proj_w=proj_w, proj_b=proj_b, layers=layers)


if __name__ == "__main__":
    # model config
    INPUT_SIZE, HIDDEN, NHEAD, NLAYERS = 16, 32, 2, 2
    DIM_FF, DIM_VALUE = HIDDEN, HIDDEN          # PyTorch defaults (None -> d_model)
    B, L = 2, 8

    key = jax.random.PRNGKey(0)
    k_emb, k_time, k_par = jax.random.split(key, 3)

    embeddings = jax.random.normal(k_emb, (B, L, INPUT_SIZE), jnp.float32)
    times = jnp.cumsum(jax.random.uniform(k_time, (B, L), jnp.float32, 0.1, 2.0), axis=1)
    seq_lens = jnp.array([L, 5], dtype=jnp.int32)

    params = make_params(k_par, INPUT_SIZE, HIDDEN, NHEAD, NLAYERS, DIM_FF, DIM_VALUE)

    # f32 path (strict correctness check against the pure-JAX reference)
    fwd = jax.jit(functools.partial(attnhp_forward, nhead=NHEAD, dim_value=DIM_VALUE,
                                    use_ff=DIM_FF > 0))
    out = jax.block_until_ready(fwd(embeddings, times, seq_lens, params))

    ref = jax.block_until_ready(attnhp_reference(embeddings, times, seq_lens, params,
                                                 nhead=NHEAD, dim_value=DIM_VALUE,
                                                 use_ff=DIM_FF > 0))

    assert out.shape == (B, L, HIDDEN)
    # tolerance covers the EUP approx reciprocal in the softmax denominator
    assert bool(jnp.allclose(out, ref, rtol=2e-3, atol=2e-3)), "mismatch vs reference (f32)"

    # bf16-weight path (v6e/v7x MXU-rate, half the weight DMA bytes); loose sanity check
    fwd_bf16 = jax.jit(functools.partial(attnhp_forward, nhead=NHEAD, dim_value=DIM_VALUE,
                                         use_ff=DIM_FF > 0, mm_dtype=jnp.bfloat16))
    out_bf16 = jax.block_until_ready(fwd_bf16(embeddings, times, seq_lens, params))
    assert bool(jnp.all(jnp.isfinite(out_bf16)))
    assert float(jnp.max(jnp.abs(out_bf16 - ref))) < 0.25, "bf16 path diverged"

    print("KERNEL_OK")
</pallas_src>

<mosaic_0001>
module attributes {stable_mosaic.version = 11 : i64} {
  func.func @_attnhp_layer_kernel(%arg0: i32, %arg1: i32, %arg2: memref<2x8x16xf32, #tpu.memory_space<vmem>>, %arg3: memref<2x8x1xf32, #tpu.memory_space<vmem>>, %arg4: memref<2x1x1xi32, #tpu.memory_space<vmem>>, %arg5: memref<16x32xf32, #tpu.memory_space<vmem>>, %arg6: memref<3x32xf32, #tpu.memory_space<vmem>>, %arg7: memref<1x2x32x32xf32, #tpu.memory_space<vmem>>, %arg8: memref<1x2x32x32xf32, #tpu.memory_space<vmem>>, %arg9: memref<1x2x32x32xf32, #tpu.memory_space<vmem>>, %arg10: memref<1x2x1x32xf32, #tpu.memory_space<vmem>>, %arg11: memref<1x2x1x32xf32, #tpu.memory_space<vmem>>, %arg12: memref<1x2x1x32xf32, #tpu.memory_space<vmem>>, %arg13: memref<1x2x32x32xf32, #tpu.memory_space<vmem>>, %arg14: memref<1x6x32xf32, #tpu.memory_space<vmem>>, %arg15: memref<1x32x32xf32, #tpu.memory_space<vmem>>, %arg16: memref<1x1x32xf32, #tpu.memory_space<vmem>>, %arg17: memref<1x32x32xf32, #tpu.memory_space<vmem>>, %arg18: memref<16x32xf32, #tpu.memory_space<vmem>>, %arg19: memref<16x32xf32, #tpu.memory_space<vmem>>) attributes {dimension_semantics = [#tpu.dimension_semantics<parallel>, #tpu.dimension_semantics<arbitrary>], iteration_bounds = array<i64: 1, 2>, scalar_prefetch = 0 : i64, scratch_operands = 1 : i64, tpu.core_type = #tpu.core_type<tc>, window_params = [{transform_indices = @transform_0, window_bounds = array<i64: 2, 8, 16>}, {transform_indices = @transform_1, window_bounds = array<i64: 2, 8, 1>}, {transform_indices = @transform_2, window_bounds = array<i64: 2, 1, 1>}, {pipeline_mode = #tpu.pipeline_mode<synchronous>, transform_indices = @transform_3, window_bounds = array<i64: 16, 32>}, {pipeline_mode = #tpu.pipeline_mode<synchronous>, transform_indices = @transform_4, window_bounds = array<i64: 3, 32>}, {transform_indices = @transform_5, window_bounds = array<i64: 1, 2, 32, 32>}, {transform_indices = @transform_6, window_bounds = array<i64: 1, 2, 32, 32>}, {transform_indices = @transform_7, window_bounds = array<i64: 1, 2, 32, 32>}, {transform_indices = @transform_8, window_bounds = array<i64: 1, 2, 1, 32>}, {transform_indices = @transform_9, window_bounds = array<i64: 1, 2, 1, 32>}, {transform_indices = @transform_10, window_bounds = array<i64: 1, 2, 1, 32>}, {transform_indices = @transform_11, window_bounds = array<i64: 1, 2, 32, 32>}, {transform_indices = @transform_12, window_bounds = array<i64: 1, 6, 32>}, {transform_indices = @transform_13, window_bounds = array<i64: 1, 32, 32>}, {transform_indices = @transform_14, window_bounds = array<i64: 1, 1, 32>}, {transform_indices = @transform_15, window_bounds = array<i64: 1, 32, 32>}, {transform_indices = @transform_16, window_bounds = array<i64: 16, 32>}]} {
    %c0_i32 = arith.constant 0 : i32
    %0 = arith.cmpi eq, %arg1, %c0_i32 : i32
    %1 = arith.extui %0 : i1 to i32
    %c0_i32_0 = arith.constant 0 : i32
    %2 = arith.cmpi ne, %1, %c0_i32_0 : i32
    scf.if %2 {
      %c0_122 = arith.constant 0 : index
      %c0_123 = arith.constant 0 : index
      %c0_124 = arith.constant 0 : index
      %195 = vector.load %arg2[%c0_122, %c0_123, %c0_124] : memref<2x8x16xf32, #tpu.memory_space<vmem>>, vector<2x8x16xf32>
      %196 = vector.shape_cast %195 : vector<2x8x16xf32> to vector<16x16xf32>
      %c0_125 = arith.constant 0 : index
      %c0_126 = arith.constant 0 : index
      %c0_127 = arith.constant 0 : index
      %197 = vector.load %arg3[%c0_125, %c0_126, %c0_127] : memref<2x8x1xf32, #tpu.memory_space<vmem>>, vector<2x8x1xf32>
      %198 = vector.shape_cast %197 : vector<2x8x1xf32> to vector<16x1xf32>
      %c0_128 = arith.constant 0 : index
      %c0_129 = arith.constant 0 : index
      %199 = vector.load %arg6[%c0_128, %c0_129] : memref<3x32xf32, #tpu.memory_space<vmem>>, vector<1x32xf32>
      %c1_130 = arith.constant 1 : index
      %c0_131 = arith.constant 0 : index
      %200 = vector.load %arg6[%c1_130, %c0_131] : memref<3x32xf32, #tpu.memory_space<vmem>>, vector<1x32xf32>
      %c2_132 = arith.constant 2 : index
      %c0_133 = arith.constant 0 : index
      %201 = vector.load %arg6[%c2_132, %c0_133] : memref<3x32xf32, #tpu.memory_space<vmem>>, vector<1x32xf32>
      %202 = vector.broadcast %198 : vector<16x1xf32> to vector<16x32xf32>
      %203 = vector.broadcast %200 : vector<1x32xf32> to vector<16x32xf32>
      %204 = arith.mulf %202, %203 : vector<16x32xf32>
      %205 = vector.broadcast %201 : vector<1x32xf32> to vector<16x32xf32>
      %206 = arith.addf %204, %205 : vector<16x32xf32>
      %207 = math.sin %206 : vector<16x32xf32>
      %c0_134 = arith.constant 0 : index
      %c0_135 = arith.constant 0 : index
      %208 = vector.load %arg5[%c0_134, %c0_135] : memref<16x32xf32, #tpu.memory_space<vmem>>, vector<16x32xf32>
      %cst_136 = arith.constant dense<0.000000e+00> : vector<16x32xf32>
      %209 = tpu.matmul %196, %208, %cst_136 {dimension_numbers = #tpu.dot_dimension_numbers<[1], [0], [0], [1], [0, 0, 1, 1], [], []>} : vector<16x16xf32>, vector<16x32xf32>, vector<16x32xf32> -> vector<16x32xf32>
      %210 = vector.broadcast %199 : vector<1x32xf32> to vector<16x32xf32>
      %211 = arith.addf %209, %210 : vector<16x32xf32>
      %212 = arith.addf %211, %207 : vector<16x32xf32>
      %c0_137 = arith.constant 0 : index
      %c0_138 = arith.constant 0 : index
      %213 = vector.load %arg19[%c0_137, %c0_138] : memref<16x32xf32, #tpu.memory_space<vmem>>, vector<16x32xf32>
      tpu.vector_store %arg19[%c0_137, %c0_138], %212 {strides = array<i32>} : memref<16x32xf32, #tpu.memory_space<vmem>>, vector<16x32xf32>,
    } else {
    }
    %c0 = arith.constant 0 : index
    %c0_1 = arith.constant 0 : index
    %3 = vector.load %arg19[%c0, %c0_1] : memref<16x32xf32, #tpu.memory_space<vmem>>, vector<16x32xf32>
    %c0_2 = arith.constant 0 : index
    %c0_3 = arith.constant 0 : index
    %c0_4 = arith.constant 0 : index
    %4 = vector.load %arg4[%c0_2, %c0_3, %c0_4] : memref<2x1x1xi32, #tpu.memory_space<vmem>>, vector<2x1x1xi32>
    %5 = tpu.iota {dimensions = array<i32: 2>} : vector<2x8x8xi32>
    %6 = tpu.iota {dimensions = array<i32: 1>} : vector<2x8x8xi32>
    %7 = vector.broadcast %4 : vector<2x1x1xi32> to vector<2x8x8xi32>
    %8 = arith.cmpi sge, %5, %7 : vector<2x8x8xi32>
    %9 = arith.cmpi sle, %6, %5 : vector<2x8x8xi32>
    %10 = arith.ori %8, %9 : vector<2x8x8xi1>
    %cst = arith.constant -1.000000e+06 : f32
    %cst_5 = arith.constant 0.000000e+00 : f32
    %11 = vector.broadcast %cst : f32 to vector<2x8x8xf32>
    %12 = vector.broadcast %cst_5 : f32 to vector<2x8x8xf32>
    %13 = arith.select %10, %11, %12 : vector<2x8x8xi1>, vector<2x8x8xf32>
    %14 = tpu.iota {dimensions = array<i32: 1>} : vector<2x8x1xi32>
    %c1_i32 = arith.constant 1 : i32
    %15 = vector.broadcast %c1_i32 : i32 to vector<2x8x1xi32>
    %16 = arith.cmpi slt, %14, %15 : vector<2x8x1xi32>
    %c1_i32_6 = arith.constant 1 : i32
    %17 = vector.broadcast %c1_i32_6 : i32 to vector<2x1x1xi32>
    %18 = arith.cmpi slt, %4, %17 : vector<2x1x1xi32>
    %19 = vector.broadcast %18 : vector<2x1x1xi1> to vector<2x8x1xi1>
    %20 = arith.ori %16, %19 : vector<2x8x1xi1>
    %21 = arith.extui %20 : vector<2x8x1xi1> to vector<2x8x1xi32>
    %22 = arith.sitofp %21 : vector<2x8x1xi32> to vector<2x8x1xf32>
    %23 = vector.shape_cast %22 : vector<2x8x1xf32> to vector<16x1xf32>
    %c0_7 = arith.constant 0 : index
    %c0_8 = arith.constant 0 : index
    %c0_9 = arith.constant 0 : index
    %c0_10 = arith.constant 0 : index
    %24 = vector.load %arg7[%c0_7, %c0_8, %c0_9, %c0_10] : memref<1x2x32x32xf32, #tpu.memory_space<vmem>>, vector<1x1x32x32xf32>
    %25 = vector.shape_cast %24 : vector<1x1x32x32xf32> to vector<32x32xf32>
    %cst_11 = arith.constant dense<0.000000e+00> : vector<16x32xf32>
    %26 = tpu.matmul %3, %25, %cst_11 {dimension_numbers = #tpu.dot_dimension_numbers<[1], [0], [0], [1], [0, 0, 1, 1], [], []>} : vector<16x32xf32>, vector<32x32xf32>, vector<16x32xf32> -> vector<16x32xf32>
    %c0_12 = arith.constant 0 : index
    %c0_13 = arith.constant 0 : index
    %c0_14 = arith.constant 0 : index
    %c0_15 = arith.constant 0 : index
    %27 = vector.load %arg10[%c0_12, %c0_13, %c0_14, %c0_15] : memref<1x2x1x32xf32, #tpu.memory_space<vmem>>, vector<1x1x1x32xf32>
    %28 = vector.shape_cast %27 : vector<1x1x1x32xf32> to vector<1x32xf32>
    %29 = vector.broadcast %28 : vector<1x32xf32> to vector<16x32xf32>
    %30 = arith.addf %26, %29 : vector<16x32xf32>
    %c0_16 = arith.constant 0 : index
    %c0_17 = arith.constant 0 : index
    %c0_18 = arith.constant 0 : index
    %c0_19 = arith.constant 0 : index
    %31 = vector.load %arg8[%c0_16, %c0_17, %c0_18, %c0_19] : memref<1x2x32x32xf32, #tpu.memory_space<vmem>>, vector<1x1x32x32xf32>
    %32 = vector.shape_cast %31 : vector<1x1x32x32xf32> to vector<32x32xf32>
    %cst_20 = arith.constant dense<0.000000e+00> : vector<16x32xf32>
    %33 = tpu.matmul %3, %32, %cst_20 {dimension_numbers = #tpu.dot_dimension_numbers<[1], [0], [0], [1], [0, 0, 1, 1], [], []>} : vector<16x32xf32>, vector<32x32xf32>, vector<16x32xf32> -> vector<16x32xf32>
    %c0_21 = arith.constant 0 : index
    %c0_22 = arith.constant 0 : index
    %c0_23 = arith.constant 0 : index
    %c0_24 = arith.constant 0 : index
    %34 = vector.load %arg11[%c0_21, %c0_22, %c0_23, %c0_24] : memref<1x2x1x32xf32, #tpu.memory_space<vmem>>, vector<1x1x1x32xf32>
    %35 = vector.shape_cast %34 : vector<1x1x1x32xf32> to vector<1x32xf32>
    %36 = vector.broadcast %35 : vector<1x32xf32> to vector<16x32xf32>
    %37 = arith.addf %33, %36 : vector<16x32xf32>
    %c0_25 = arith.constant 0 : index
    %c0_26 = arith.constant 0 : index
    %c0_27 = arith.constant 0 : index
    %c0_28 = arith.constant 0 : index
    %38 = vector.load %arg9[%c0_25, %c0_26, %c0_27, %c0_28] : memref<1x2x32x32xf32, #tpu.memory_space<vmem>>, vector<1x1x32x32xf32>
    %39 = vector.shape_cast %38 : vector<1x1x32x32xf32> to vector<32x32xf32>
    %cst_29 = arith.constant dense<0.000000e+00> : vector<16x32xf32>
    %40 = tpu.matmul %3, %39, %cst_29 {dimension_numbers = #tpu.dot_dimension_numbers<[1], [0], [0], [1], [0, 0, 1, 1], [], []>} : vector<16x32xf32>, vector<32x32xf32>, vector<16x32xf32> -> vector<16x32xf32>
    %c0_30 = arith.constant 0 : index
    %c0_31 = arith.constant 0 : index
    %c0_32 = arith.constant 0 : index
    %c0_33 = arith.constant 0 : index
    %41 = vector.load %arg12[%c0_30, %c0_31, %c0_32, %c0_33] : memref<1x2x1x32xf32, #tpu.memory_space<vmem>>, vector<1x1x1x32xf32>
    %42 = vector.shape_cast %41 : vector<1x1x1x32xf32> to vector<1x32xf32>
    %43 = vector.broadcast %42 : vector<1x32xf32> to vector<16x32xf32>
    %44 = arith.addf %40, %43 : vector<16x32xf32>
    %45 = vector.shape_cast %30 : vector<16x32xf32> to vector<2x8x32xf32>
    %46 = vector.shape_cast %37 : vector<16x32xf32> to vector<2x8x32xf32>
    "tpu.trace_start"() <{level = 10 : i32, message = "bqd,bkd->bqk"}> : () -> ()
    %cst_34 = arith.constant dense<0.000000e+00> : vector<2x8x8xf32>
    %47 = tpu.matmul %45, %46, %cst_34 {dimension_numbers = #tpu.dot_dimension_numbers<[2], [2], [1], [1], [0, 0, 0, 1, 1, 1], [0], [0]>} : vector<2x8x32xf32>, vector<2x8x32xf32>, vector<2x8x8xf32> -> vector<2x8x8xf32>
    "tpu.trace_stop"() : () -> ()
    %48 = arith.addf %47, %13 : vector<2x8x8xf32>
    %cst_35 = arith.constant dense<0xFF800000> : vector<2x8xf32>
    %49 = vector.multi_reduction <maximumf>, %48, %cst_35 [2] : vector<2x8x8xf32> to vector<2x8xf32>
    %50 = vector.shape_cast %49 : vector<2x8xf32> to vector<2x8x1xf32>
    %51 = vector.broadcast %50 : vector<2x8x1xf32> to vector<2x8x8xf32>
    %52 = arith.subf %48, %51 : vector<2x8x8xf32>
    %53 = math.exp %52 : vector<2x8x8xf32>
    %cst_36 = arith.constant dense<0.000000e+00> : vector<2x8xf32>
    %54 = vector.multi_reduction <add>, %53, %cst_36 [2] : vector<2x8x8xf32> to vector<2x8xf32>
    %55 = vector.shape_cast %54 : vector<2x8xf32> to vector<2x8x1xf32>
    %56 = tpu.reciprocal %55 {approx = true} : vector<2x8x1xf32> -> vector<2x8x1xf32>
    %57 = vector.broadcast %56 : vector<2x8x1xf32> to vector<2x8x8xf32>
    %58 = arith.mulf %53, %57 : vector<2x8x8xf32>
    %59 = vector.shape_cast %44 : vector<16x32xf32> to vector<2x8x32xf32>
    "tpu.trace_start"() <{level = 10 : i32, message = "bqk,bkv->bqv"}> : () -> ()
    %cst_37 = arith.constant dense<0.000000e+00> : vector<2x8x32xf32>
    %60 = tpu.matmul %58, %59, %cst_37 {dimension_numbers = #tpu.dot_dimension_numbers<[2], [1], [1], [2], [0, 0, 0, 1, 1, 2], [0], [0]>} : vector<2x8x8xf32>, vector<2x8x32xf32>, vector<2x8x32xf32> -> vector<2x8x32xf32>
    "tpu.trace_stop"() : () -> ()
    %61 = vector.shape_cast %60 : vector<2x8x32xf32> to vector<16x32xf32>
    %c0_38 = arith.constant 0 : index
    %c0_39 = arith.constant 0 : index
    %c0_40 = arith.constant 0 : index
    %c0_41 = arith.constant 0 : index
    %62 = vector.load %arg13[%c0_38, %c0_39, %c0_40, %c0_41] : memref<1x2x32x32xf32, #tpu.memory_space<vmem>>, vector<1x1x32x32xf32>
    %63 = vector.shape_cast %62 : vector<1x1x32x32xf32> to vector<32x32xf32>
    %cst_42 = arith.constant dense<0.000000e+00> : vector<16x32xf32>
    %64 = tpu.matmul %61, %63, %cst_42 {dimension_numbers = #tpu.dot_dimension_numbers<[1], [0], [0], [1], [0, 0, 1, 1], [], []>} : vector<16x32xf32>, vector<32x32xf32>, vector<16x32xf32> -> vector<16x32xf32>
    %c0_43 = arith.constant 0 : index
    %c1 = arith.constant 1 : index
    %c0_44 = arith.constant 0 : index
    %c0_45 = arith.constant 0 : index
    %65 = vector.load %arg7[%c0_43, %c1, %c0_44, %c0_45] : memref<1x2x32x32xf32, #tpu.memory_space<vmem>>, vector<1x1x32x32xf32>
    %66 = vector.shape_cast %65 : vector<1x1x32x32xf32> to vector<32x32xf32>
    %cst_46 = arith.constant dense<0.000000e+00> : vector<16x32xf32>
    %67 = tpu.matmul %3, %66, %cst_46 {dimension_numbers = #tpu.dot_dimension_numbers<[1], [0], [0], [1], [0, 0, 1, 1], [], []>} : vector<16x32xf32>, vector<32x32xf32>, vector<16x32xf32> -> vector<16x32xf32>
    %c0_47 = arith.constant 0 : index
    %c1_48 = arith.constant 1 : index
    %c0_49 = arith.constant 0 : index
    %c0_50 = arith.constant 0 : index
    %68 = vector.load %arg10[%c0_47, %c1_48, %c0_49, %c0_50] : memref<1x2x1x32xf32, #tpu.memory_space<vmem>>, vector<1x1x1x32xf32>
    %69 = vector.shape_cast %68 : vector<1x1x1x32xf32> to vector<1x32xf32>
    %70 = vector.broadcast %69 : vector<1x32xf32> to vector<16x32xf32>
    %71 = arith.addf %67, %70 : vector<16x32xf32>
    %c0_51 = arith.constant 0 : index
    %c1_52 = arith.constant 1 : index
    %c0_53 = arith.constant 0 : index
    %c0_54 = arith.constant 0 : index
    %72 = vector.load %arg8[%c0_51, %c1_52, %c0_53, %c0_54] : memref<1x2x32x32xf32, #tpu.memory_space<vmem>>, vector<1x1x32x32xf32>
    %73 = vector.shape_cast %72 : vector<1x1x32x32xf32> to vector<32x32xf32>
    %cst_55 = arith.constant dense<0.000000e+00> : vector<16x32xf32>
    %74 = tpu.matmul %3, %73, %cst_55 {dimension_numbers = #tpu.dot_dimension_numbers<[1], [0], [0], [1], [0, 0, 1, 1], [], []>} : vector<16x32xf32>, vector<32x32xf32>, vector<16x32xf32> -> vector<16x32xf32>
    %c0_56 = arith.constant 0 : index
    %c1_57 = arith.constant 1 : index
    %c0_58 = arith.constant 0 : index
    %c0_59 = arith.constant 0 : index
    %75 = vector.load %arg11[%c0_56, %c1_57, %c0_58, %c0_59] : memref<1x2x1x32xf32, #tpu.memory_space<vmem>>, vector<1x1x1x32xf32>
    %76 = vector.shape_cast %75 : vector<1x1x1x32xf32> to vector<1x32xf32>
    %77 = vector.broadcast %76 : vector<1x32xf32> to vector<16x32xf32>
    %78 = arith.addf %74, %77 : vector<16x32xf32>
    %c0_60 = arith.constant 0 : index
    %c1_61 = arith.constant 1 : index
    %c0_62 = arith.constant 0 : index
    %c0_63 = arith.constant 0 : index
    %79 = vector.load %arg9[%c0_60, %c1_61, %c0_62, %c0_63] : memref<1x2x32x32xf32, #tpu.memory_space<vmem>>, vector<1x1x32x32xf32>
    %80 = vector.shape_cast %79 : vector<1x1x32x32xf32> to vector<32x32xf32>
    %cst_64 = arith.constant dense<0.000000e+00> : vector<16x32xf32>
    %81 = tpu.matmul %3, %80, %cst_64 {dimension_numbers = #tpu.dot_dimension_numbers<[1], [0], [0], [1], [0, 0, 1, 1], [], []>} : vector<16x32xf32>, vector<32x32xf32>, vector<16x32xf32> -> vector<16x32xf32>
    %c0_65 = arith.constant 0 : index
    %c1_66 = arith.constant 1 : index
    %c0_67 = arith.constant 0 : index
    %c0_68 = arith.constant 0 : index
    %82 = vector.load %arg12[%c0_65, %c1_66, %c0_67, %c0_68] : memref<1x2x1x32xf32, #tpu.memory_space<vmem>>, vector<1x1x1x32xf32>
    %83 = vector.shape_cast %82 : vector<1x1x1x32xf32> to vector<1x32xf32>
    %84 = vector.broadcast %83 : vector<1x32xf32> to vector<16x32xf32>
    %85 = arith.addf %81, %84 : vector<16x32xf32>
    %86 = vector.shape_cast %71 : vector<16x32xf32> to vector<2x8x32xf32>
    %87 = vector.shape_cast %78 : vector<16x32xf32> to vector<2x8x32xf32>
    "tpu.trace_start"() <{level = 10 : i32, message = "bqd,bkd->bqk"}> : () -> ()
    %cst_69 = arith.constant dense<0.000000e+00> : vector<2x8x8xf32>
    %88 = tpu.matmul %86, %87, %cst_69 {dimension_numbers = #tpu.dot_dimension_numbers<[2], [2], [1], [1], [0, 0, 0, 1, 1, 1], [0], [0]>} : vector<2x8x32xf32>, vector<2x8x32xf32>, vector<2x8x8xf32> -> vector<2x8x8xf32>
    "tpu.trace_stop"() : () -> ()
    %89 = arith.addf %88, %13 : vector<2x8x8xf32>
    %cst_70 = arith.constant dense<0xFF800000> : vector<2x8xf32>
    %90 = vector.multi_reduction <maximumf>, %89, %cst_70 [2] : vector<2x8x8xf32> to vector<2x8xf32>
    %91 = vector.shape_cast %90 : vector<2x8xf32> to vector<2x8x1xf32>
    %92 = vector.broadcast %91 : vector<2x8x1xf32> to vector<2x8x8xf32>
    %93 = arith.subf %89, %92 : vector<2x8x8xf32>
    %94 = math.exp %93 : vector<2x8x8xf32>
    %cst_71 = arith.constant dense<0.000000e+00> : vector<2x8xf32>
    %95 = vector.multi_reduction <add>, %94, %cst_71 [2] : vector<2x8x8xf32> to vector<2x8xf32>
    %96 = vector.shape_cast %95 : vector<2x8xf32> to vector<2x8x1xf32>
    %97 = tpu.reciprocal %96 {approx = true} : vector<2x8x1xf32> -> vector<2x8x1xf32>
    %98 = vector.broadcast %97 : vector<2x8x1xf32> to vector<2x8x8xf32>
    %99 = arith.mulf %94, %98 : vector<2x8x8xf32>
    %100 = vector.shape_cast %85 : vector<16x32xf32> to vector<2x8x32xf32>
    "tpu.trace_start"() <{level = 10 : i32, message = "bqk,bkv->bqv"}> : () -> ()
    %cst_72 = arith.constant dense<0.000000e+00> : vector<2x8x32xf32>
    %101 = tpu.matmul %99, %100, %cst_72 {dimension_numbers = #tpu.dot_dimension_numbers<[2], [1], [1], [2], [0, 0, 0, 1, 1, 2], [0], [0]>} : vector<2x8x8xf32>, vector<2x8x32xf32>, vector<2x8x32xf32> -> vector<2x8x32xf32>
    "tpu.trace_stop"() : () -> ()
    %102 = vector.shape_cast %101 : vector<2x8x32xf32> to vector<16x32xf32>
    %c0_73 = arith.constant 0 : index
    %c1_74 = arith.constant 1 : index
    %c0_75 = arith.constant 0 : index
    %c0_76 = arith.constant 0 : index
    %103 = vector.load %arg13[%c0_73, %c1_74, %c0_75, %c0_76] : memref<1x2x32x32xf32, #tpu.memory_space<vmem>>, vector<1x1x32x32xf32>
    %104 = vector.shape_cast %103 : vector<1x1x32x32xf32> to vector<32x32xf32>
    %cst_77 = arith.constant dense<0.000000e+00> : vector<16x32xf32>
    %105 = tpu.matmul %102, %104, %cst_77 {dimension_numbers = #tpu.dot_dimension_numbers<[1], [0], [0], [1], [0, 0, 1, 1], [], []>} : vector<16x32xf32>, vector<32x32xf32>, vector<16x32xf32> -> vector<16x32xf32>
    %106 = arith.addf %64, %105 : vector<16x32xf32>
    %c0_78 = arith.constant 0 : index
    %c0_79 = arith.constant 0 : index
    %c0_80 = arith.constant 0 : index
    %107 = vector.load %arg14[%c0_78, %c0_79, %c0_80] : memref<1x6x32xf32, #tpu.memory_space<vmem>>, vector<1x1x32xf32>
    %108 = vector.shape_cast %107 : vector<1x1x32xf32> to vector<1x32xf32>
    %109 = vector.broadcast %108 : vector<1x32xf32> to vector<16x32xf32>
    %110 = arith.addf %106, %109 : vector<16x32xf32>
    %cst_81 = arith.constant 5.000000e-01 : f32
    %111 = vector.broadcast %cst_81 : f32 to vector<16x1xf32>
    %112 = arith.cmpf ogt, %23, %111 : vector<16x1xf32>
    %cst_82 = arith.constant 0.000000e+00 : f32
    %113 = vector.shape_cast %112 : vector<16x1xi1> to vector<16x1xi1>
    %114 = vector.broadcast %113 : vector<16x1xi1> to vector<16x32xi1>
    %115 = vector.broadcast %cst_82 : f32 to vector<16x32xf32>
    %116 = arith.select %114, %115, %110 : vector<16x32xi1>, vector<16x32xf32>
    %117 = arith.addf %3, %116 : vector<16x32xf32>
    %c0_83 = arith.constant 0 : index
    %c1_84 = arith.constant 1 : index
    %c0_85 = arith.constant 0 : index
    %118 = vector.load %arg14[%c0_83, %c1_84, %c0_85] : memref<1x6x32xf32, #tpu.memory_space<vmem>>, vector<1x1x32xf32>
    %119 = vector.shape_cast %118 : vector<1x1x32xf32> to vector<1x32xf32>
    %c0_86 = arith.constant 0 : index
    %c2 = arith.constant 2 : index
    %c0_87 = arith.constant 0 : index
    %120 = vector.load %arg14[%c0_86, %c2, %c0_87] : memref<1x6x32xf32, #tpu.memory_space<vmem>>, vector<1x1x32xf32>
    %121 = vector.shape_cast %120 : vector<1x1x32xf32> to vector<1x32xf32>
    %cst_88 = arith.constant dense<0.000000e+00> : vector<16xf32>
    %122 = vector.multi_reduction <add>, %117, %cst_88 [1] : vector<16x32xf32> to vector<16xf32>
    %123 = vector.shape_cast %122 : vector<16xf32> to vector<16x1xf32>
    %cst_89 = arith.constant 3.200000e+01 : f32
    %124 = vector.broadcast %cst_89 : f32 to vector<16x1xf32>
    %125 = arith.divf %123, %124 : vector<16x1xf32>
    %126 = arith.mulf %117, %117 : vector<16x32xf32>
    %cst_90 = arith.constant dense<0.000000e+00> : vector<16xf32>
    %127 = vector.multi_reduction <add>, %126, %cst_90 [1] : vector<16x32xf32> to vector<16xf32>
    %128 = vector.shape_cast %127 : vector<16xf32> to vector<16x1xf32>
    %cst_91 = arith.constant 3.200000e+01 : f32
    %129 = vector.broadcast %cst_91 : f32 to vector<16x1xf32>
    %130 = arith.divf %128, %129 : vector<16x1xf32>
    %131 = arith.mulf %125, %125 : vector<16x1xf32>
    %132 = arith.subf %130, %131 : vector<16x1xf32>
    %cst_92 = arith.constant 0.000000e+00 : f32
    %133 = vector.broadcast %cst_92 : f32 to vector<16x1xf32>
    %134 = arith.maximumf %132, %133 : vector<16x1xf32>
    %135 = vector.broadcast %125 : vector<16x1xf32> to vector<16x32xf32>
    %136 = arith.subf %117, %135 : vector<16x32xf32>
    %cst_93 = arith.constant 9.99999974E-6 : f32
    %137 = vector.broadcast %cst_93 : f32 to vector<16x1xf32>
    %138 = arith.addf %134, %137 : vector<16x1xf32>
    %139 = math.rsqrt %138 : vector<16x1xf32>
    %140 = vector.broadcast %139 : vector<16x1xf32> to vector<16x32xf32>
    %141 = arith.mulf %136, %140 : vector<16x32xf32>
    %142 = vector.broadcast %119 : vector<1x32xf32> to vector<16x32xf32>
    %143 = arith.mulf %141, %142 : vector<16x32xf32>
    %144 = vector.broadcast %121 : vector<1x32xf32> to vector<16x32xf32>
    %145 = arith.addf %143, %144 : vector<16x32xf32>
    %c0_94 = arith.constant 0 : index
    %c0_95 = arith.constant 0 : index
    %c0_96 = arith.constant 0 : index
    %146 = vector.load %arg15[%c0_94, %c0_95, %c0_96] : memref<1x32x32xf32, #tpu.memory_space<vmem>>, vector<1x32x32xf32>
    %147 = vector.shape_cast %146 : vector<1x32x32xf32> to vector<32x32xf32>
    %cst_97 = arith.constant dense<0.000000e+00> : vector<16x32xf32>
    %148 = tpu.matmul %145, %147, %cst_97 {dimension_numbers = #tpu.dot_dimension_numbers<[1], [0], [0], [1], [0, 0, 1, 1], [], []>} : vector<16x32xf32>, vector<32x32xf32>, vector<16x32xf32> -> vector<16x32xf32>
    %c0_98 = arith.constant 0 : index
    %c0_99 = arith.constant 0 : index
    %c0_100 = arith.constant 0 : index
    %149 = vector.load %arg16[%c0_98, %c0_99, %c0_100] : memref<1x1x32xf32, #tpu.memory_space<vmem>>, vector<1x1x32xf32>
    %150 = vector.shape_cast %149 : vector<1x1x32xf32> to vector<1x32xf32>
    %151 = vector.broadcast %150 : vector<1x32xf32> to vector<16x32xf32>
    %152 = arith.addf %148, %151 : vector<16x32xf32>
    %cst_101 = arith.constant 0.000000e+00 : f32
    %153 = vector.broadcast %cst_101 : f32 to vector<16x32xf32>
    %154 = arith.maximumf %152, %153 : vector<16x32xf32>
    %c0_102 = arith.constant 0 : index
    %c0_103 = arith.constant 0 : index
    %c0_104 = arith.constant 0 : index
    %155 = vector.load %arg17[%c0_102, %c0_103, %c0_104] : memref<1x32x32xf32, #tpu.memory_space<vmem>>, vector<1x32x32xf32>
    %156 = vector.shape_cast %155 : vector<1x32x32xf32> to vector<32x32xf32>
    %cst_105 = arith.constant dense<0.000000e+00> : vector<16x32xf32>
    %157 = tpu.matmul %154, %156, %cst_105 {dimension_numbers = #tpu.dot_dimension_numbers<[1], [0], [0], [1], [0, 0, 1, 1], [], []>} : vector<16x32xf32>, vector<32x32xf32>, vector<16x32xf32> -> vector<16x32xf32>
    %158 = arith.addf %145, %157 : vector<16x32xf32>
    %c0_106 = arith.constant 0 : index
    %c3 = arith.constant 3 : index
    %c0_107 = arith.constant 0 : index
    %159 = vector.load %arg14[%c0_106, %c3, %c0_107] : memref<1x6x32xf32, #tpu.memory_space<vmem>>, vector<1x1x32xf32>
    %160 = vector.shape_cast %159 : vector<1x1x32xf32> to vector<1x32xf32>
    %161 = vector.broadcast %160 : vector<1x32xf32> to vector<16x32xf32>
    %162 = arith.addf %158, %161 : vector<16x32xf32>
    %c0_108 = arith.constant 0 : index
    %c4 = arith.constant 4 : index
    %c0_109 = arith.constant 0 : index
    %163 = vector.load %arg14[%c0_108, %c4, %c0_109] : memref<1x6x32xf32, #tpu.memory_space<vmem>>, vector<1x1x32xf32>
    %164 = vector.shape_cast %163 : vector<1x1x32xf32> to vector<1x32xf32>
    %c0_110 = arith.constant 0 : index
    %c5 = arith.constant 5 : index
    %c0_111 = arith.constant 0 : index
    %165 = vector.load %arg14[%c0_110, %c5, %c0_111] : memref<1x6x32xf32, #tpu.memory_space<vmem>>, vector<1x1x32xf32>
    %166 = vector.shape_cast %165 : vector<1x1x32xf32> to vector<1x32xf32>
    %cst_112 = arith.constant dense<0.000000e+00> : vector<16xf32>
    %167 = vector.multi_reduction <add>, %162, %cst_112 [1] : vector<16x32xf32> to vector<16xf32>
    %168 = vector.shape_cast %167 : vector<16xf32> to vector<16x1xf32>
    %cst_113 = arith.constant 3.200000e+01 : f32
    %169 = vector.broadcast %cst_113 : f32 to vector<16x1xf32>
    %170 = arith.divf %168, %169 : vector<16x1xf32>
    %171 = arith.mulf %162, %162 : vector<16x32xf32>
    %cst_114 = arith.constant dense<0.000000e+00> : vector<16xf32>
    %172 = vector.multi_reduction <add>, %171, %cst_114 [1] : vector<16x32xf32> to vector<16xf32>
    %173 = vector.shape_cast %172 : vector<16xf32> to vector<16x1xf32>
    %cst_115 = arith.constant 3.200000e+01 : f32
    %174 = vector.broadcast %cst_115 : f32 to vector<16x1xf32>
    %175 = arith.divf %173, %174 : vector<16x1xf32>
    %176 = arith.mulf %170, %170 : vector<16x1xf32>
    %177 = arith.subf %175, %176 : vector<16x1xf32>
    %cst_116 = arith.constant 0.000000e+00 : f32
    %178 = vector.broadcast %cst_116 : f32 to vector<16x1xf32>
    %179 = arith.maximumf %177, %178 : vector<16x1xf32>
    %180 = vector.broadcast %170 : vector<16x1xf32> to vector<16x32xf32>
    %181 = arith.subf %162, %180 : vector<16x32xf32>
    %cst_117 = arith.constant 9.99999974E-6 : f32
    %182 = vector.broadcast %cst_117 : f32 to vector<16x1xf32>
    %183 = arith.addf %179, %182 : vector<16x1xf32>
    %184 = math.rsqrt %183 : vector<16x1xf32>
    %185 = vector.broadcast %184 : vector<16x1xf32> to vector<16x32xf32>
    %186 = arith.mulf %181, %185 : vector<16x32xf32>
    %187 = vector.broadcast %164 : vector<1x32xf32> to vector<16x32xf32>
    %188 = arith.mulf %186, %187 : vector<16x32xf32>
    %189 = vector.broadcast %166 : vector<1x32xf32> to vector<16x32xf32>
    %190 = arith.addf %188, %189 : vector<16x32xf32>
    %c0_118 = arith.constant 0 : index
    %c0_119 = arith.constant 0 : index
    %191 = vector.load %arg19[%c0_118, %c0_119] : memref<16x32xf32, #tpu.memory_space<vmem>>, vector<16x32xf32>
    tpu.vector_store %arg19[%c0_118, %c0_119], %190 {strides = array<i32>} : memref<16x32xf32, #tpu.memory_space<vmem>>, vector<16x32xf32>,
    %c1_i32_120 = arith.constant 1 : i32
    %192 = arith.cmpi eq, %arg1, %c1_i32_120 : i32
    %193 = arith.extui %192 : i1 to i32
    %c0_i32_121 = arith.constant 0 : i32
    %194 = arith.cmpi ne, %193, %c0_i32_121 : i32
    scf.if %194 {
      %c0_122 = arith.constant 0 : index
      %c0_123 = arith.constant 0 : index
      %195 = vector.load %arg18[%c0_122, %c0_123] : memref<16x32xf32, #tpu.memory_space<vmem>>, vector<16x32xf32>
      tpu.vector_store %arg18[%c0_122, %c0_123], %190 {strides = array<i32>} : memref<16x32xf32, #tpu.memory_space<vmem>>, vector<16x32xf32>,
    } else {
    }
    return
  }
  func.func @transform_0(%arg0: i32, %arg1: i32) -> (i32, i32, i32) {
    %c0_i32 = arith.constant 0 : i32
    %c0_i32_0 = arith.constant 0 : i32
    %c0_i32_1 = arith.constant 0 : i32
    return %arg0, %c0_i32, %c0_i32_0 : i32, i32, i32
  }
  func.func @transform_1(%arg0: i32, %arg1: i32) -> (i32, i32, i32) {
    %c0_i32 = arith.constant 0 : i32
    %c0_i32_0 = arith.constant 0 : i32
    %c0_i32_1 = arith.constant 0 : i32
    return %arg0, %c0_i32, %c0_i32_0 : i32, i32, i32
  }
  func.func @transform_2(%arg0: i32, %arg1: i32) -> (i32, i32, i32) {
    %c0_i32 = arith.constant 0 : i32
    %c0_i32_0 = arith.constant 0 : i32
    %c0_i32_1 = arith.constant 0 : i32
    return %arg0, %c0_i32, %c0_i32_0 : i32, i32, i32
  }
  func.func @transform_3(%arg0: i32, %arg1: i32) -> (i32, i32) {
    %c0_i32 = arith.constant 0 : i32
    %c0_i32_0 = arith.constant 0 : i32
    %c0_i32_1 = arith.constant 0 : i32
    return %c0_i32, %c0_i32_0 : i32, i32
  }
  func.func @transform_4(%arg0: i32, %arg1: i32) -> (i32, i32) {
    %c0_i32 = arith.constant 0 : i32
    %c0_i32_0 = arith.constant 0 : i32
    %c0_i32_1 = arith.constant 0 : i32
    return %c0_i32, %c0_i32_0 : i32, i32
  }
  func.func @transform_5(%arg0: i32, %arg1: i32) -> (i32, i32, i32, i32) {
    %c0_i32 = arith.constant 0 : i32
    %c0_i32_0 = arith.constant 0 : i32
    %c0_i32_1 = arith.constant 0 : i32
    %c0_i32_2 = arith.constant 0 : i32
    return %arg1, %c0_i32, %c0_i32_0, %c0_i32_1 : i32, i32, i32, i32
  }
  func.func @transform_6(%arg0: i32, %arg1: i32) -> (i32, i32, i32, i32) {
    %c0_i32 = arith.constant 0 : i32
    %c0_i32_0 = arith.constant 0 : i32
    %c0_i32_1 = arith.constant 0 : i32
    %c0_i32_2 = arith.constant 0 : i32
    return %arg1, %c0_i32, %c0_i32_0, %c0_i32_1 : i32, i32, i32, i32
  }
  func.func @transform_7(%arg0: i32, %arg1: i32) -> (i32, i32, i32, i32) {
    %c0_i32 = arith.constant 0 : i32
    %c0_i32_0 = arith.constant 0 : i32
    %c0_i32_1 = arith.constant 0 : i32
    %c0_i32_2 = arith.constant 0 : i32
    return %arg1, %c0_i32, %c0_i32_0, %c0_i32_1 : i32, i32, i32, i32
  }
  func.func @transform_8(%arg0: i32, %arg1: i32) -> (i32, i32, i32, i32) {
    %c0_i32 = arith.constant 0 : i32
    %c0_i32_0 = arith.constant 0 : i32
    %c0_i32_1 = arith.constant 0 : i32
    %c0_i32_2 = arith.constant 0 : i32
    return %arg1, %c0_i32, %c0_i32_0, %c0_i32_1 : i32, i32, i32, i32
  }
  func.func @transform_9(%arg0: i32, %arg1: i32) -> (i32, i32, i32, i32) {
    %c0_i32 = arith.constant 0 : i32
    %c0_i32_0 = arith.constant 0 : i32
    %c0_i32_1 = arith.constant 0 : i32
    %c0_i32_2 = arith.constant 0 : i32
    return %arg1, %c0_i32, %c0_i32_0, %c0_i32_1 : i32, i32, i32, i32
  }
  func.func @transform_10(%arg0: i32, %arg1: i32) -> (i32, i32, i32, i32) {
    %c0_i32 = arith.constant 0 : i32
    %c0_i32_0 = arith.constant 0 : i32
    %c0_i32_1 = arith.constant 0 : i32
    %c0_i32_2 = arith.constant 0 : i32
    return %arg1, %c0_i32, %c0_i32_0, %c0_i32_1 : i32, i32, i32, i32
  }
  func.func @transform_11(%arg0: i32, %arg1: i32) -> (i32, i32, i32, i32) {
    %c0_i32 = arith.constant 0 : i32
    %c0_i32_0 = arith.constant 0 : i32
    %c0_i32_1 = arith.constant 0 : i32
    %c0_i32_2 = arith.constant 0 : i32
    return %arg1, %c0_i32, %c0_i32_0, %c0_i32_1 : i32, i32, i32, i32
  }
  func.func @transform_12(%arg0: i32, %arg1: i32) -> (i32, i32, i32) {
    %c0_i32 = arith.constant 0 : i32
    %c0_i32_0 = arith.constant 0 : i32
    %c0_i32_1 = arith.constant 0 : i32
    return %arg1, %c0_i32, %c0_i32_0 : i32, i32, i32
  }
  func.func @transform_13(%arg0: i32, %arg1: i32) -> (i32, i32, i32) {
    %c0_i32 = arith.constant 0 : i32
    %c0_i32_0 = arith.constant 0 : i32
    %c0_i32_1 = arith.constant 0 : i32
    return %arg1, %c0_i32, %c0_i32_0 : i32, i32, i32
  }
  func.func @transform_14(%arg0: i32, %arg1: i32) -> (i32, i32, i32) {
    %c0_i32 = arith.constant 0 : i32
    %c0_i32_0 = arith.constant 0 : i32
    %c0_i32_1 = arith.constant 0 : i32
    return %arg1, %c0_i32, %c0_i32_0 : i32, i32, i32
  }
  func.func @transform_15(%arg0: i32, %arg1: i32) -> (i32, i32, i32) {
    %c0_i32 = arith.constant 0 : i32
    %c0_i32_0 = arith.constant 0 : i32
    %c0_i32_1 = arith.constant 0 : i32
    return %arg1, %c0_i32, %c0_i32_0 : i32, i32, i32
  }
  func.func @transform_16(%arg0: i32, %arg1: i32) -> (i32, i32) {
    %c0_i32 = arith.constant 0 : i32
    %c0_i32_0 = arith.constant 0 : i32
    return %arg0, %c0_i32 : i32, i32
  }
}

</mosaic_0001>

<llo_original>
// kernel: attnhp_forward.1
$region0: #{attnhp_forward.1}
  #allocation0 [shape = 'u32[]', space=smem, size = 0x4, offset = 0x4, fixed_abs, tag = 'smem constant byte address 0x4 - core index']
  #allocation1 [shape = 'u32[144,128]{1,0:T(1,128)}', space=vmem, size = 0x12000, scoped, tag = 'internal scratch']
  #allocation2 [shape = 'f32[16,32]{1,0:T(8,128)}', space=vmem, size = 0x2000, scoped, tag = 'scratch operand']
  %s0 = inlined_call_operand.vmem [shape: f32[2,8,16], index: 0, kind: input, shape index: {}]
  %s1 = inlined_call_operand.vmem [shape: f32[2,8,1], index: 1, kind: input, shape index: {}]
  %s2 = inlined_call_operand.vmem [shape: s32[2,1,1], index: 2, kind: input, shape index: {}]
  %s3 = inlined_call_operand.vmem [shape: f32[16,32], index: 3, kind: input, shape index: {}]
  %s4 = inlined_call_operand.vmem [shape: f32[3,32], index: 4, kind: input, shape index: {}]
  %s5 = inlined_call_operand.vmem [shape: f32[2,2,32,32], index: 5, kind: input, shape index: {}]
  %s6 = inlined_call_operand.vmem [shape: f32[2,2,32,32], index: 6, kind: input, shape index: {}]
  %s7 = inlined_call_operand.vmem [shape: f32[2,2,32,32], index: 7, kind: input, shape index: {}]
  %s8 = inlined_call_operand.vmem [shape: f32[2,2,1,32], index: 8, kind: input, shape index: {}]
  %s9 = inlined_call_operand.vmem [shape: f32[2,2,1,32], index: 9, kind: input, shape index: {}]
  %s10 = inlined_call_operand.vmem [shape: f32[2,2,1,32], index: 10, kind: input, shape index: {}]
  %s11 = inlined_call_operand.vmem [shape: f32[2,2,32,32], index: 11, kind: input, shape index: {}]
  %s12 = inlined_call_operand.vmem [shape: f32[2,6,32], index: 12, kind: input, shape index: {}]
  %s13 = inlined_call_operand.vmem [shape: f32[2,32,32], index: 13, kind: input, shape index: {}]
  %s14 = inlined_call_operand.vmem [shape: f32[2,1,32], index: 14, kind: input, shape index: {}]
  %s15 = inlined_call_operand.vmem [shape: f32[2,32,32], index: 15, kind: input, shape index: {}]
  %s16 = inlined_call_operand.hbm [shape: f32[16,32], index: 16, kind: output, shape index: {}]
  %s17 = sld [smem:[#allocation0]]
  $region105: #{attnhp_forward.1} parent=0
    _
  %s19 = ssub.s32 1, %s17
  %s20 = scalar_select 0, %s19, %s17
  $region1: #{attnhp_forward.1} parent=0
    #allocation3 [shape = 'u8[8192]{0}', space=vmem, size = 0x2000, scoped, tag = 'output window, operand 0, single buffered']
    #allocation4 [shape = 's32[2]{0}', space=sflag, size = 0x8, scoped, tag = 'scoped memory for attnhp_forward.1']
    %21 = vsyncpa [#allocation4], 0
    loop: start=0, step=1, limit=4
    $region2: #{attnhp_forward.1} parent=1 // loop_pre_header
      _
    $region3: #{attnhp_forward.1} parent=1 // loop_header
      %s23 = sphi 0, %s27
      %p24 = scmp.ge.s32.totalorder %s23, 4
      %s30 = sphi 0, %s42
      %s31 = sphi 0, %s38
      %s32 = sphi 0, %s30
      %s33 = sphi 0, %s31
      %s34 = sphi 0, %s32
      %s35 = sphi 0, %s33
      %s45 = sphi 0, %s47
      %s48 = sphi 0, %s45
      %s49 = sphi 0, %s48
      %s65 = sphi 0, %s49
      %s71 = sphi 0, %s73
      %s74 = sphi 0, %s71
      %s75 = sphi 0, %s74
      %s91 = sphi 0, %s75
      %s97 = sphi 0, %s99
      %s100 = sphi 0, %s97
      %s101 = sphi 0, %s100
      %s117 = sphi 0, %s101
      %s121 = sphi 0, %s121
      %s123 = sphi 0, %s121
      %s124 = sphi 0, %s123
      %s138 = sphi 0, %s124
      %s142 = sphi 0, %s142
      %s144 = sphi 0, %s142
      %s145 = sphi 0, %s144
      %s159 = sphi 0, %s145
      %s165 = sphi 0, %s167
      %s168 = sphi 0, %s165
      %s169 = sphi 0, %s168
      %s185 = sphi 0, %s169
      %s191 = sphi 0, %s193
      %s194 = sphi 0, %s191
      %s195 = sphi 0, %s194
      %s211 = sphi 0, %s195
      %s217 = sphi 0, %s219
      %s220 = sphi 0, %s217
      %s221 = sphi 0, %s220
      %s237 = sphi 0, %s221
      %s243 = sphi 0, %s245
      %s246 = sphi 0, %s243
      %s247 = sphi 0, %s246
      %s263 = sphi 0, %s247
      %s269 = sphi 0, %s271
      %s272 = sphi 0, %s269
      %s273 = sphi 0, %s272
      %s289 = sphi 0, %s273
      %s295 = sphi 0, %s297
      %s298 = sphi 0, %s295
      %s299 = sphi 0, %s298
      %s315 = sphi 0, %s299
      %s321 = sphi 0, %s323
      %s324 = sphi 0, %s321
      %s325 = sphi 0, %s324
      %s341 = sphi 0, %s325
      %s347 = sphi 0, %s349
      %s350 = sphi 0, %s347
      %s351 = sphi 0, %s350
      %s367 = sphi 0, %s351
      %s373 = sphi 0, %s375
      %s376 = sphi 0, %s373
      %s377 = sphi 0, %s376
      %s393 = sphi 0, %s377
      %s399 = sphi 0, %s401
      %s402 = sphi 0, %s399
      %s403 = sphi 0, %s402
      %s419 = sphi 0, %s403
      %s425 = sphi 0, %s427
      %s428 = sphi 0, %s425
      %s429 = sphi 0, %s428
      %s445 = sphi 0, %s429
      %s451 = sphi 0, %s453
      %s454 = sphi 0, %s451
      %s455 = sphi 0, %s454
      %s471 = sphi 0, %s455
    $region4: #{attnhp_forward.1} parent=1 // loop_header_branch
      %26 = sbr.rel (%p24) target = $region8
    $region5: #{attnhp_forward.1} parent=1 // loop_body
      %s28 = ssub.s32 %s23, 1
      %s29 = ssub.s32 %s23, 2
      %s36 = sadd.s32 1, %s31
      %p37 = scmp.ge.s32.totalorder %s36, 2
      %s38 = scalar_select %p37, 0, %s36
      %s39 = sadd.s32 1, %s30
      %s40 = scalar_select %p37, %s39, %s30
      %p41 = scmp.ge.s32.totalorder %s40, 1
      %s42 = scalar_select %p41, 0, %s40
      %s43 = ssub.s32 %s30, %s42
      %p44 = scmp.eq.s32.totalorder %s43, 0
      %s46 = sadd.s32 %s45, 1
      %s47 = scalar_select %p44, %s45, %s46
      %p50 = pneg %p44
      %p51 = scmp.eq.s32.totalorder %s23, 1
      %p52 = por %p50, %p51
      %p53 = scmp.ne.s32.totalorder %s45, %s48
      %p54 = scmp.eq.s32.totalorder %s23, 0
      %p55 = por %p53, %p54
      %p56 = scmp.ne.s32.totalorder %s45, %s48
      %p57 = scmp.eq.s32.totalorder %s28, 1
      %p58 = por %p56, %p57
      %p59 = scmp.ne.s32.totalorder %s48, %s49
      %p60 = scmp.eq.s32.totalorder %s28, 0
      %p61 = por %p59, %p60
      %p62 = scmp.ne.s32.totalorder %s48, %s49
      %p63 = scmp.eq.s32.totalorder %s29, 1
      %p64 = por %p62, %p63
      %p66 = scmp.ne.s32.totalorder %s49, %s65
      %p67 = scmp.eq.s32.totalorder %s29, 0
      %p68 = por %p66, %p67
      %s69 = ssub.s32 %s30, %s42
      %p70 = scmp.eq.s32.totalorder %s69, 0
      %s72 = sadd.s32 %s71, 1
      %s73 = scalar_select %p70, %s71, %s72
      %p76 = pneg %p70
      %p77 = scmp.eq.s32.totalorder %s23, 1
      %p78 = por %p76, %p77
      %p79 = scmp.ne.s32.totalorder %s71, %s74
      %p80 = scmp.eq.s32.totalorder %s23, 0
      %p81 = por %p79, %p80
      %p82 = scmp.ne.s32.totalorder %s71, %s74
      %p83 = scmp.eq.s32.totalorder %s28, 1
      %p84 = por %p82, %p83
      %p85 = scmp.ne.s32.totalorder %s74, %s75
      %p86 = scmp.eq.s32.totalorder %s28, 0
      %p87 = por %p85, %p86
      %p88 = scmp.ne.s32.totalorder %s74, %s75
      %p89 = scmp.eq.s32.totalorder %s29, 1
      %p90 = por %p88, %p89
      %p92 = scmp.ne.s32.totalorder %s75, %s91
      %p93 = scmp.eq.s32.totalorder %s29, 0
      %p94 = por %p92, %p93
      %s95 = ssub.s32 %s30, %s42
      %p96 = scmp.eq.s32.totalorder %s95, 0
      %s98 = sadd.s32 %s97, 1
      %s99 = scalar_select %p96, %s97, %s98
      %p102 = pneg %p96
      %p103 = scmp.eq.s32.totalorder %s23, 1
      %p104 = por %p102, %p103
      %p105 = scmp.ne.s32.totalorder %s97, %s100
      %p106 = scmp.eq.s32.totalorder %s23, 0
      %p107 = por %p105, %p106
      %p108 = scmp.ne.s32.totalorder %s97, %s100
      %p109 = scmp.eq.s32.totalorder %s28, 1
      %p110 = por %p108, %p109
      %p111 = scmp.ne.s32.totalorder %s100, %s101
      %p112 = scmp.eq.s32.totalorder %s28, 0
      %p113 = por %p111, %p112
      %p114 = scmp.ne.s32.totalorder %s100, %s101
      %p115 = scmp.eq.s32.totalorder %s29, 1
      %p116 = por %p114, %p115
      %p118 = scmp.ne.s32.totalorder %s101, %s117
      %p119 = scmp.eq.s32.totalorder %s29, 0
      %p120 = por %p118, %p119
      %s122 = sadd.s32 %s121, 1
      %p125 = scmp.eq.s32.totalorder %s23, 1
      %p126 = scmp.ne.s32.totalorder %s121, %s123
      %p127 = scmp.eq.s32.totalorder %s23, 0
      %p128 = por %p126, %p127
      %p129 = scmp.ne.s32.totalorder %s121, %s123
      %p130 = scmp.eq.s32.totalorder %s28, 1
      %p131 = por %p129, %p130
      %p132 = scmp.ne.s32.totalorder %s123, %s124
      %p133 = scmp.eq.s32.totalorder %s28, 0
      %p134 = por %p132, %p133
      %p135 = scmp.ne.s32.totalorder %s123, %s124
      %p136 = scmp.eq.s32.totalorder %s29, 1
      %p137 = por %p135, %p136
      %p139 = scmp.ne.s32.totalorder %s124, %s138
      %p140 = scmp.eq.s32.totalorder %s29, 0
      %p141 = por %p139, %p140
      %s143 = sadd.s32 %s142, 1
      %p146 = scmp.eq.s32.totalorder %s23, 1
      %p147 = scmp.ne.s32.totalorder %s142, %s144
      %p148 = scmp.eq.s32.totalorder %s23, 0
      %p149 = por %p147, %p148
      %p150 = scmp.ne.s32.totalorder %s142, %s144
      %p151 = scmp.eq.s32.totalorder %s28, 1
      %p152 = por %p150, %p151
      %p153 = scmp.ne.s32.totalorder %s144, %s145
      %p154 = scmp.eq.s32.totalorder %s28, 0
      %p155 = por %p153, %p154
      %p156 = scmp.ne.s32.totalorder %s144, %s145
      %p157 = scmp.eq.s32.totalorder %s29, 1
      %p158 = por %p156, %p157
      %p160 = scmp.ne.s32.totalorder %s145, %s159
      %p161 = scmp.eq.s32.totalorder %s29, 0
      %p162 = por %p160, %p161
      %s163 = ssub.s32 %s31, %s38
      %p164 = scmp.eq.s32.totalorder %s163, 0
      %s166 = sadd.s32 %s165, 1
      %s167 = scalar_select %p164, %s165, %s166
      %p170 = pneg %p164
      %p171 = scmp.eq.s32.totalorder %s23, 1
      %p172 = por %p170, %p171
      %p173 = scmp.ne.s32.totalorder %s165, %s168
      %p174 = scmp.eq.s32.totalorder %s23, 0
      %p175 = por %p173, %p174
      %p176 = scmp.ne.s32.totalorder %s165, %s168
      %p177 = scmp.eq.s32.totalorder %s28, 1
      %p178 = por %p176, %p177
      %p179 = scmp.ne.s32.totalorder %s168, %s169
      %p180 = scmp.eq.s32.totalorder %s28, 0
      %p181 = por %p179, %p180
      %p182 = scmp.ne.s32.totalorder %s168, %s169
      %p183 = scmp.eq.s32.totalorder %s29, 1
      %p184 = por %p182, %p183
      %p186 = scmp.ne.s32.totalorder %s169, %s185
      %p187 = scmp.eq.s32.totalorder %s29, 0
      %p188 = por %p186, %p187
      %s189 = ssub.s32 %s31, %s38
      %p190 = scmp.eq.s32.totalorder %s189, 0
      %s192 = sadd.s32 %s191, 1
      %s193 = scalar_select %p190, %s191, %s192
      %p196 = pneg %p190
      %p197 = scmp.eq.s32.totalorder %s23, 1
      %p198 = por %p196, %p197
      %p199 = scmp.ne.s32.totalorder %s191, %s194
      %p200 = scmp.eq.s32.totalorder %s23, 0
      %p201 = por %p199, %p200
      %p202 = scmp.ne.s32.totalorder %s191, %s194
      %p203 = scmp.eq.s32.totalorder %s28, 1
      %p204 = por %p202, %p203
      %p205 = scmp.ne.s32.totalorder %s194, %s195
      %p206 = scmp.eq.s32.totalorder %s28, 0
      %p207 = por %p205, %p206
      %p208 = scmp.ne.s32.totalorder %s194, %s195
      %p209 = scmp.eq.s32.totalorder %s29, 1
      %p210 = por %p208, %p209
      %p212 = scmp.ne.s32.totalorder %s195, %s211
      %p213 = scmp.eq.s32.totalorder %s29, 0
      %p214 = por %p212, %p213
      %s215 = ssub.s32 %s31, %s38
      %p216 = scmp.eq.s32.totalorder %s215, 0
      %s218 = sadd.s32 %s217, 1
      %s219 = scalar_select %p216, %s217, %s218
      %p222 = pneg %p216
      %p223 = scmp.eq.s32.totalorder %s23, 1
      %p224 = por %p222, %p223
      %p225 = scmp.ne.s32.totalorder %s217, %s220
      %p226 = scmp.eq.s32.totalorder %s23, 0
      %p227 = por %p225, %p226
      %p228 = scmp.ne.s32.totalorder %s217, %s220
      %p229 = scmp.eq.s32.totalorder %s28, 1
      %p230 = por %p228, %p229
      %p231 = scmp.ne.s32.totalorder %s220, %s221
      %p232 = scmp.eq.s32.totalorder %s28, 0
      %p233 = por %p231, %p232
      %p234 = scmp.ne.s32.totalorder %s220, %s221
      %p235 = scmp.eq.s32.totalorder %s29, 1
      %p236 = por %p234, %p235
      %p238 = scmp.ne.s32.totalorder %s221, %s237
      %p239 = scmp.eq.s32.totalorder %s29, 0
      %p240 = por %p238, %p239
      %s241 = ssub.s32 %s31, %s38
      %p242 = scmp.eq.s32.totalorder %s241, 0
      %s244 = sadd.s32 %s243, 1
      %s245 = scalar_select %p242, %s243, %s244
      %p248 = pneg %p242
      %p249 = scmp.eq.s32.totalorder %s23, 1
      %p250 = por %p248, %p249
      %p251 = scmp.ne.s32.totalorder %s243, %s246
      %p252 = scmp.eq.s32.totalorder %s23, 0
      %p253 = por %p251, %p252
      %p254 = scmp.ne.s32.totalorder %s243, %s246
      %p255 = scmp.eq.s32.totalorder %s28, 1
      %p256 = por %p254, %p255
      %p257 = scmp.ne.s32.totalorder %s246, %s247
      %p258 = scmp.eq.s32.totalorder %s28, 0
      %p259 = por %p257, %p258
      %p260 = scmp.ne.s32.totalorder %s246, %s247
      %p261 = scmp.eq.s32.totalorder %s29, 1
      %p262 = por %p260, %p261
      %p264 = scmp.ne.s32.totalorder %s247, %s263
      %p265 = scmp.eq.s32.totalorder %s29, 0
      %p266 = por %p264, %p265
      %s267 = ssub.s32 %s31, %s38
      %p268 = scmp.eq.s32.totalorder %s267, 0
      %s270 = sadd.s32 %s269, 1
      %s271 = scalar_select %p268, %s269, %s270
      %p274 = pneg %p268
      %p275 = scmp.eq.s32.totalorder %s23, 1
      %p276 = por %p274, %p275
      %p277 = scmp.ne.s32.totalorder %s269, %s272
      %p278 = scmp.eq.s32.totalorder %s23, 0
      %p279 = por %p277, %p278
      %p280 = scmp.ne.s32.totalorder %s269, %s272
      %p281 = scmp.eq.s32.totalorder %s28, 1
      %p282 = por %p280, %p281
      %p283 = scmp.ne.s32.totalorder %s272, %s273
      %p284 = scmp.eq.s32.totalorder %s28, 0
      %p285 = por %p283, %p284
      %p286 = scmp.ne.s32.totalorder %s272, %s273
      %p287 = scmp.eq.s32.totalorder %s29, 1
      %p288 = por %p286, %p287
      %p290 = scmp.ne.s32.totalorder %s273, %s289
      %p291 = scmp.eq.s32.totalorder %s29, 0
      %p292 = por %p290, %p291
      %s293 = ssub.s32 %s31, %s38
      %p294 = scmp.eq.s32.totalorder %s293, 0
      %s296 = sadd.s32 %s295, 1
      %s297 = scalar_select %p294, %s295, %s296
      %p300 = pneg %p294
      %p301 = scmp.eq.s32.totalorder %s23, 1
      %p302 = por %p300, %p301
      %p303 = scmp.ne.s32.totalorder %s295, %s298
      %p304 = scmp.eq.s32.totalorder %s23, 0
      %p305 = por %p303, %p304
      %p306 = scmp.ne.s32.totalorder %s295, %s298
      %p307 = scmp.eq.s32.totalorder %s28, 1
      %p308 = por %p306, %p307
      %p309 = scmp.ne.s32.totalorder %s298, %s299
      %p310 = scmp.eq.s32.totalorder %s28, 0
      %p311 = por %p309, %p310
      %p312 = scmp.ne.s32.totalorder %s298, %s299
      %p313 = scmp.eq.s32.totalorder %s29, 1
      %p314 = por %p312, %p313
      %p316 = scmp.ne.s32.totalorder %s299, %s315
      %p317 = scmp.eq.s32.totalorder %s29, 0
      %p318 = por %p316, %p317
      %s319 = ssub.s32 %s31, %s38
      %p320 = scmp.eq.s32.totalorder %s319, 0
      %s322 = sadd.s32 %s321, 1
      %s323 = scalar_select %p320, %s321, %s322
      %p326 = pneg %p320
      %p327 = scmp.eq.s32.totalorder %s23, 1
      %p328 = por %p326, %p327
      %p329 = scmp.ne.s32.totalorder %s321, %s324
      %p330 = scmp.eq.s32.totalorder %s23, 0
      %p331 = por %p329, %p330
      %p332 = scmp.ne.s32.totalorder %s321, %s324
      %p333 = scmp.eq.s32.totalorder %s28, 1
      %p334 = por %p332, %p333
      %p335 = scmp.ne.s32.totalorder %s324, %s325
      %p336 = scmp.eq.s32.totalorder %s28, 0
      %p337 = por %p335, %p336
      %p338 = scmp.ne.s32.totalorder %s324, %s325
      %p339 = scmp.eq.s32.totalorder %s29, 1
      %p340 = por %p338, %p339
      %p342 = scmp.ne.s32.totalorder %s325, %s341
      %p343 = scmp.eq.s32.totalorder %s29, 0
      %p344 = por %p342, %p343
      %s345 = ssub.s32 %s31, %s38
      %p346 = scmp.eq.s32.totalorder %s345, 0
      %s348 = sadd.s32 %s347, 1
      %s349 = scalar_select %p346, %s347, %s348
      %p352 = pneg %p346
      %p353 = scmp.eq.s32.totalorder %s23, 1
      %p354 = por %p352, %p353
      %p355 = scmp.ne.s32.totalorder %s347, %s350
      %p356 = scmp.eq.s32.totalorder %s23, 0
      %p357 = por %p355, %p356
      %p358 = scmp.ne.s32.totalorder %s347, %s350
      %p359 = scmp.eq.s32.totalorder %s28, 1
      %p360 = por %p358, %p359
      %p361 = scmp.ne.s32.totalorder %s350, %s351
      %p362 = scmp.eq.s32.totalorder %s28, 0
      %p363 = por %p361, %p362
      %p364 = scmp.ne.s32.totalorder %s350, %s351
      %p365 = scmp.eq.s32.totalorder %s29, 1
      %p366 = por %p364, %p365
      %p368 = scmp.ne.s32.totalorder %s351, %s367
      %p369 = scmp.eq.s32.totalorder %s29, 0
      %p370 = por %p368, %p369
      %s371 = ssub.s32 %s31, %s38
      %p372 = scmp.eq.s32.totalorder %s371, 0
      %s374 = sadd.s32 %s373, 1
      %s375 = scalar_select %p372, %s373, %s374
      %p378 = pneg %p372
      %p379 = scmp.eq.s32.totalorder %s23, 1
      %p380 = por %p378, %p379
      %p381 = scmp.ne.s32.totalorder %s373, %s376
      %p382 = scmp.eq.s32.totalorder %s23, 0
      %p383 = por %p381, %p382
      %p384 = scmp.ne.s32.totalorder %s373, %s376
      %p385 = scmp.eq.s32.totalorder %s28, 1
      %p386 = por %p384, %p385
      %p387 = scmp.ne.s32.totalorder %s376, %s377
      %p388 = scmp.eq.s32.totalorder %s28, 0
      %p389 = por %p387, %p388
      %p390 = scmp.ne.s32.totalorder %s376, %s377
      %p391 = scmp.eq.s32.totalorder %s29, 1
      %p392 = por %p390, %p391
      %p394 = scmp.ne.s32.totalorder %s377, %s393
      %p395 = scmp.eq.s32.totalorder %s29, 0
      %p396 = por %p394, %p395
      %s397 = ssub.s32 %s31, %s38
      %p398 = scmp.eq.s32.totalorder %s397, 0
      %s400 = sadd.s32 %s399, 1
      %s401 = scalar_select %p398, %s399, %s400
      %p404 = pneg %p398
      %p405 = scmp.eq.s32.totalorder %s23, 1
      %p406 = por %p404, %p405
      %p407 = scmp.ne.s32.totalorder %s399, %s402
      %p408 = scmp.eq.s32.totalorder %s23, 0
      %p409 = por %p407, %p408
      %p410 = scmp.ne.s32.totalorder %s399, %s402
      %p411 = scmp.eq.s32.totalorder %s28, 1
      %p412 = por %p410, %p411
      %p413 = scmp.ne.s32.totalorder %s402, %s403
      %p414 = scmp.eq.s32.totalorder %s28, 0
      %p415 = por %p413, %p414
      %p416 = scmp.ne.s32.totalorder %s402, %s403
      %p417 = scmp.eq.s32.totalorder %s29, 1
      %p418 = por %p416, %p417
      %p420 = scmp.ne.s32.totalorder %s403, %s419
      %p421 = scmp.eq.s32.totalorder %s29, 0
      %p422 = por %p420, %p421
      %s423 = ssub.s32 %s31, %s38
      %p424 = scmp.eq.s32.totalorder %s423, 0
      %s426 = sadd.s32 %s425, 1
      %s427 = scalar_select %p424, %s425, %s426
      %p430 = pneg %p424
      %p431 = scmp.eq.s32.totalorder %s23, 1
      %p432 = por %p430, %p431
      %p433 = scmp.ne.s32.totalorder %s425, %s428
      %p434 = scmp.eq.s32.totalorder %s23, 0
      %p435 = por %p433, %p434
      %p436 = scmp.ne.s32.totalorder %s425, %s428
      %p437 = scmp.eq.s32.totalorder %s28, 1
      %p438 = por %p436, %p437
      %p439 = scmp.ne.s32.totalorder %s428, %s429
      %p440 = scmp.eq.s32.totalorder %s28, 0
      %p441 = por %p439, %p440
      %p442 = scmp.ne.s32.totalorder %s428, %s429
      %p443 = scmp.eq.s32.totalorder %s29, 1
      %p444 = por %p442, %p443
      %p446 = scmp.ne.s32.totalorder %s429, %s445
      %p447 = scmp.eq.s32.totalorder %s29, 0
      %p448 = por %p446, %p447
      %s449 = ssub.s32 %s30, %s42
      %p450 = scmp.eq.s32.totalorder %s449, 0
      %s452 = sadd.s32 %s451, 1
      %s453 = scalar_select %p450, %s451, %s452
      %p456 = pneg %p450
      %p457 = scmp.eq.s32.totalorder %s23, 1
      %p458 = por %p456, %p457
      %p459 = scmp.ne.s32.totalorder %s451, %s454
      %p460 = scmp.eq.s32.totalorder %s23, 0
      %p461 = por %p459, %p460
      %p462 = scmp.ne.s32.totalorder %s451, %s454
      %p463 = scmp.eq.s32.totalorder %s28, 1
      %p464 = por %p462, %p463
      %p465 = scmp.ne.s32.totalorder %s454, %s455
      %p466 = scmp.eq.s32.totalorder %s28, 0
      %p467 = por %p465, %p466
      %p468 = scmp.ne.s32.totalorder %s454, %s455
      %p469 = scmp.eq.s32.totalorder %s29, 1
      %p470 = por %p468, %p469
      %p472 = scmp.ne.s32.totalorder %s455, %s471
      %p473 = scmp.eq.s32.totalorder %s29, 0
      %p474 = por %p472, %p473
      %p475 = scmp.le.s32.totalorder 1, %s23
      %p476 = scmp.lt.s32.totalorder %s23, 3
      %p477 = pnand %p475, %p476
      %p478 = pneg %p477
      // Predicated region
      $region9: #{attnhp_forward.1} parent=5 // pred_check
        _
      $region10: #{attnhp_forward.1} parent=5 // pred_check_branch
        %480 = sbr.rel (%p477) target = $region12
      $region11: #{attnhp_forward.1} parent=5 // pred_region
        %s481 = ssub.s32 %s23, 1
        // Predicated region
        $region13: #{attnhp_forward.1} parent=11 // pred_check
          %p482 = pneg %p61
        $region14: #{attnhp_forward.1} parent=11 // pred_check_branch
          %484 = sbr.rel (%p482) target = $region16
        $region15: #{attnhp_forward.1} parent=11 // pred_region
          %s485 = smul.u32 2, %s32
          %p486 = scmp.lt.s32.totalorder %s485, 1
          %s487 = scalar_select %p486, %s485, 1
          %s488 = smul.addr %s487, 8
          %s489 = scalar_lea.vmem %s0, %s488
          %s490 = smul.u32 2, %s32
        $region16: #{attnhp_forward.1} parent=11 // pred_fallthru
          _
        // Predicated region
        $region17: #{attnhp_forward.1} parent=11 // pred_check
          %p491 = pneg %p87
        $region18: #{attnhp_forward.1} parent=11 // pred_check_branch
          %493 = sbr.rel (%p491) target = $region20
        $region19: #{attnhp_forward.1} parent=11 // pred_region
          %s494 = smul.u32 2, %s32
          %p495 = scmp.lt.s32.totalorder %s494, 1
          %s496 = scalar_select %p495, %s494, 1
          %s497 = smul.addr %s496, 8
          %s498 = scalar_lea.vmem %s1, %s497
          %s499 = smul.u32 2, %s32
        $region20: #{attnhp_forward.1} parent=11 // pred_fallthru
          _
        // Predicated region
        $region21: #{attnhp_forward.1} parent=11 // pred_check
          %p500 = pneg %p113
        $region22: #{attnhp_forward.1} parent=11 // pred_check_branch
          %502 = sbr.rel (%p500) target = $region24
        $region23: #{attnhp_forward.1} parent=11 // pred_region
          %s503 = smul.u32 2, %s32
          %p504 = scmp.lt.s32.totalorder %s503, 1
          %s505 = scalar_select %p504, %s503, 1
          %s506 = scalar_lea.vmem %s2, %s505
          %s507 = smul.u32 2, %s32
        $region24: #{attnhp_forward.1} parent=11 // pred_fallthru
          _
        // Predicated region
        $region25: #{attnhp_forward.1} parent=11 // pred_check
          %p508 = pneg %p134
        $region26: #{attnhp_forward.1} parent=11 // pred_check_branch
          %510 = sbr.rel (%p508) target = $region28
        $region27: #{attnhp_forward.1} parent=11 // pred_region
          _
        $region28: #{attnhp_forward.1} parent=11 // pred_fallthru
          _
        // Predicated region
        $region29: #{attnhp_forward.1} parent=11 // pred_check
          %p511 = pneg %p155
        $region30: #{attnhp_forward.1} parent=11 // pred_check_branch
          %513 = sbr.rel (%p511) target = $region32
        $region31: #{attnhp_forward.1} parent=11 // pred_region
          _
        $region32: #{attnhp_forward.1} parent=11 // pred_fallthru
          _
      $region12: #{attnhp_forward.1} parent=5 // pred_fallthru
        _
      %p514 = scmp.lt.s32.totalorder %s23, 2
      // Predicated region
      $region33: #{attnhp_forward.1} parent=5 // pred_check
        %p515 = pneg %p514
      $region34: #{attnhp_forward.1} parent=5 // pred_check_branch
        %517 = sbr.rel (%p515) target = $region36
      $region35: #{attnhp_forward.1} parent=5 // pred_region
        // Predicated region
        $region37: #{attnhp_forward.1} parent=35 // pred_check
          %p518 = pneg %p175
        $region38: #{attnhp_forward.1} parent=35 // pred_check_branch
          %520 = sbr.rel (%p518) target = $region40
        $region39: #{attnhp_forward.1} parent=35 // pred_region
          %p521 = scmp.lt.s32.totalorder %s31, 1
          %s522 = scalar_select %p521, %s31, 1
          %s523 = smul.addr %s522, 8
          %s524 = smul.addr %s523, 8
          %s525 = scalar_lea.vmem %s5, %s524
        $region40: #{attnhp_forward.1} parent=35 // pred_fallthru
          _
        // Predicated region
        $region41: #{attnhp_forward.1} parent=35 // pred_check
          %p526 = pneg %p201
        $region42: #{attnhp_forward.1} parent=35 // pred_check_branch
          %528 = sbr.rel (%p526) target = $region44
        $region43: #{attnhp_forward.1} parent=35 // pred_region
          %p529 = scmp.lt.s32.totalorder %s31, 1
          %s530 = scalar_select %p529, %s31, 1
          %s531 = smul.addr %s530, 8
          %s532 = smul.addr %s531, 8
          %s533 = scalar_lea.vmem %s6, %s532
        $region44: #{attnhp_forward.1} parent=35 // pred_fallthru
          _
        // Predicated region
        $region45: #{attnhp_forward.1} parent=35 // pred_check
          %p534 = pneg %p227
        $region46: #{attnhp_forward.1} parent=35 // pred_check_branch
          %536 = sbr.rel (%p534) target = $region48
        $region47: #{attnhp_forward.1} parent=35 // pred_region
          %p537 = scmp.lt.s32.totalorder %s31, 1
          %s538 = scalar_select %p537, %s31, 1
          %s539 = smul.addr %s538, 8
          %s540 = smul.addr %s539, 8
          %s541 = scalar_lea.vmem %s7, %s540
        $region48: #{attnhp_forward.1} parent=35 // pred_fallthru
          _
        // Predicated region
        $region49: #{attnhp_forward.1} parent=35 // pred_check
          %p542 = pneg %p253
        $region50: #{attnhp_forward.1} parent=35 // pred_check_branch
          %544 = sbr.rel (%p542) target = $region52
        $region51: #{attnhp_forward.1} parent=35 // pred_region
          %p545 = scmp.lt.s32.totalorder %s31, 1
          %s546 = scalar_select %p545, %s31, 1
          %s547 = smul.addr %s546, 2
          %s548 = scalar_lea.vmem %s8, %s547
        $region52: #{attnhp_forward.1} parent=35 // pred_fallthru
          _
        // Predicated region
        $region53: #{attnhp_forward.1} parent=35 // pred_check
          %p549 = pneg %p279
        $region54: #{attnhp_forward.1} parent=35 // pred_check_branch
          %551 = sbr.rel (%p549) target = $region56
        $region55: #{attnhp_forward.1} parent=35 // pred_region
          %p552 = scmp.lt.s32.totalorder %s31, 1
          %s553 = scalar_select %p552, %s31, 1
          %s554 = smul.addr %s553, 2
          %s555 = scalar_lea.vmem %s9, %s554
        $region56: #{attnhp_forward.1} parent=35 // pred_fallthru
          _
        // Predicated region
        $region57: #{attnhp_forward.1} parent=35 // pred_check
          %p556 = pneg %p305
        $region58: #{attnhp_forward.1} parent=35 // pred_check_branch
          %558 = sbr.rel (%p556) target = $region60
        $region59: #{attnhp_forward.1} parent=35 // pred_region
          %p559 = scmp.lt.s32.totalorder %s31, 1
          %s560 = scalar_select %p559, %s31, 1
          %s561 = smul.addr %s560, 2
          %s562 = scalar_lea.vmem %s10, %s561
        $region60: #{attnhp_forward.1} parent=35 // pred_fallthru
          _
        // Predicated region
        $region61: #{attnhp_forward.1} parent=35 // pred_check
          %p563 = pneg %p331
        $region62: #{attnhp_forward.1} parent=35 // pred_check_branch
          %565 = sbr.rel (%p563) target = $region64
        $region63: #{attnhp_forward.1} parent=35 // pred_region
          %p566 = scmp.lt.s32.totalorder %s31, 1
          %s567 = scalar_select %p566, %s31, 1
          %s568 = smul.addr %s567, 8
          %s569 = smul.addr %s568, 8
          %s570 = scalar_lea.vmem %s11, %s569
        $region64: #{attnhp_forward.1} parent=35 // pred_fallthru
          _
        // Predicated region
        $region65: #{attnhp_forward.1} parent=35 // pred_check
          %p571 = pneg %p357
        $region66: #{attnhp_forward.1} parent=35 // pred_check_branch
          %573 = sbr.rel (%p571) target = $region68
        $region67: #{attnhp_forward.1} parent=35 // pred_region
          %p574 = scmp.lt.s32.totalorder %s31, 1
          %s575 = scalar_select %p574, %s31, 1
          %s576 = smul.addr %s575, 8
          %s577 = scalar_lea.vmem %s12, %s576
        $region68: #{attnhp_forward.1} parent=35 // pred_fallthru
          _
        // Predicated region
        $region69: #{attnhp_forward.1} parent=35 // pred_check
          %p578 = pneg %p383
        $region70: #{attnhp_forward.1} parent=35 // pred_check_branch
          %580 = sbr.rel (%p578) target = $region72
        $region71: #{attnhp_forward.1} parent=35 // pred_region
          %p581 = scmp.lt.s32.totalorder %s31, 1
          %s582 = scalar_select %p581, %s31, 1
          %s583 = smul.addr %s582, 4
          %s584 = smul.addr %s583, 8
          %s585 = scalar_lea.vmem %s13, %s584
        $region72: #{attnhp_forward.1} parent=35 // pred_fallthru
          _
        // Predicated region
        $region73: #{attnhp_forward.1} parent=35 // pred_check
          %p586 = pneg %p409
        $region74: #{attnhp_forward.1} parent=35 // pred_check_branch
          %588 = sbr.rel (%p586) target = $region76
        $region75: #{attnhp_forward.1} parent=35 // pred_region
          %p589 = scmp.lt.s32.totalorder %s31, 1
          %s590 = scalar_select %p589, %s31, 1
          %s591 = scalar_lea.vmem %s14, %s590
        $region76: #{attnhp_forward.1} parent=35 // pred_fallthru
          _
        // Predicated region
        $region77: #{attnhp_forward.1} parent=35 // pred_check
          %p592 = pneg %p435
        $region78: #{attnhp_forward.1} parent=35 // pred_check_branch
          %594 = sbr.rel (%p592) target = $region80
        $region79: #{attnhp_forward.1} parent=35 // pred_region
          %p595 = scmp.lt.s32.totalorder %s31, 1
          %s596 = scalar_select %p595, %s31, 1
          %s597 = smul.addr %s596, 4
          %s598 = smul.addr %s597, 8
          %s599 = scalar_lea.vmem %s15, %s598
        $region80: #{attnhp_forward.1} parent=35 // pred_fallthru
          _
      $region36: #{attnhp_forward.1} parent=5 // pred_fallthru
        _
      %p600 = scmp.le.s32.totalorder 1, %s23
      %p601 = scmp.lt.s32.totalorder %s23, 3
      %p602 = pnand %p600, %p601
      %p603 = pneg %p602
      // Predicated region
      $region81: #{attnhp_forward.1} parent=5 // pred_check
        _
      $region82: #{attnhp_forward.1} parent=5 // pred_check_branch
        %605 = sbr.rel (%p602) target = $region84
      $region83: #{attnhp_forward.1} parent=5 // pred_region
        %s606 = ssub.s32 %s23, 1
        %s607 = smul.u32 2, %s32
        %p608 = scmp.lt.s32.totalorder %s607, 1
        %s609 = scalar_select %p608, %s607, 1
        %s610 = smul.addr %s609, 8
        %s611 = scalar_lea.vmem %s0, %s610
        %p612 = pneg %p61
        %p613 = pneg %p58
        %s614 = smul.u32 2, %s32
        %p615 = scmp.lt.s32.totalorder %s614, 1
        %s616 = scalar_select %p615, %s614, 1
        %s617 = smul.addr %s616, 8
        %s618 = scalar_lea.vmem %s1, %s617
        %p619 = pneg %p87
        %p620 = pneg %p84
        %s621 = smul.u32 2, %s32
        %p622 = scmp.lt.s32.totalorder %s621, 1
        %s623 = scalar_select %p622, %s621, 1
        %s624 = scalar_lea.vmem %s2, %s623
        %p625 = pneg %p113
        %p626 = pneg %p110
        %p627 = pneg %p134
        %p628 = pneg %p131
        %p629 = pneg %p155
        %p630 = pneg %p152
        %p631 = scmp.lt.s32.totalorder %s33, 1
        %s632 = scalar_select %p631, %s33, 1
        %s633 = smul.addr %s632, 8
        %s634 = smul.addr %s633, 8
        %s635 = scalar_lea.vmem %s5, %s634
        %p636 = pneg %p181
        %p637 = pneg %p178
        %p638 = scmp.lt.s32.totalorder %s33, 1
        %s639 = scalar_select %p638, %s33, 1
        %s640 = smul.addr %s639, 8
        %s641 = smul.addr %s640, 8
        %s642 = scalar_lea.vmem %s6, %s641
        %p643 = pneg %p207
        %p644 = pneg %p204
        %p645 = scmp.lt.s32.totalorder %s33, 1
        %s646 = scalar_select %p645, %s33, 1
        %s647 = smul.addr %s646, 8
        %s648 = smul.addr %s647, 8
        %s649 = scalar_lea.vmem %s7, %s648
        %p650 = pneg %p233
        %p651 = pneg %p230
        %p652 = scmp.lt.s32.totalorder %s33, 1
        %s653 = scalar_select %p652, %s33, 1
        %s654 = smul.addr %s653, 2
        %s655 = scalar_lea.vmem %s8, %s654
        %p656 = pneg %p259
        %p657 = pneg %p256
        %p658 = scmp.lt.s32.totalorder %s33, 1
        %s659 = scalar_select %p658, %s33, 1
        %s660 = smul.addr %s659, 2
        %s661 = scalar_lea.vmem %s9, %s660
        %p662 = pneg %p285
        %p663 = pneg %p282
        %p664 = scmp.lt.s32.totalorder %s33, 1
        %s665 = scalar_select %p664, %s33, 1
        %s666 = smul.addr %s665, 2
        %s667 = scalar_lea.vmem %s10, %s666
        %p668 = pneg %p311
        %p669 = pneg %p308
        %p670 = scmp.lt.s32.totalorder %s33, 1
        %s671 = scalar_select %p670, %s33, 1
        %s672 = smul.addr %s671, 8
        %s673 = smul.addr %s672, 8
        %s674 = scalar_lea.vmem %s11, %s673
        %p675 = pneg %p337
        %p676 = pneg %p334
        %p677 = scmp.lt.s32.totalorder %s33, 1
        %s678 = scalar_select %p677, %s33, 1
        %s679 = smul.addr %s678, 8
        %s680 = scalar_lea.vmem %s12, %s679
        %p681 = pneg %p363
        %p682 = pneg %p360
        %p683 = scmp.lt.s32.totalorder %s33, 1
        %s684 = scalar_select %p683, %s33, 1
        %s685 = smul.addr %s684, 4
        %s686 = smul.addr %s685, 8
        %s687 = scalar_lea.vmem %s13, %s686
        %p688 = pneg %p389
        %p689 = pneg %p386
        %p690 = scmp.lt.s32.totalorder %s33, 1
        %s691 = scalar_select %p690, %s33, 1
        %s692 = scalar_lea.vmem %s14, %s691
        %p693 = pneg %p415
        %p694 = pneg %p412
        %p695 = scmp.lt.s32.totalorder %s33, 1
        %s696 = scalar_select %p695, %s33, 1
        %s697 = smul.addr %s696, 4
        %s698 = smul.addr %s697, 8
        %s699 = scalar_lea.vmem %s15, %s698
        %p700 = pneg %p441
        %p701 = pneg %p438
        %p702 = pneg %p467
        %p703 = pneg %p464
        %s704 = smul.u32 2, %s32
        %p705 = scmp.lt.s32.totalorder %s704, 1
        %s706 = scalar_select %p705, %s704, 1
        %s707 = smul.addr %s706, 8
        %s708 = scalar_lea.vmem %s0, %s707
        %s709 = smul.u32 2, %s32
        %s710 = smul.u32 2, %s32
        %p711 = scmp.lt.s32.totalorder %s710, 1
        %s712 = scalar_select %p711, %s710, 1
        %s713 = smul.addr %s712, 8
        %s714 = scalar_lea.vmem %s1, %s713
        %s715 = smul.u32 2, %s32
        %s716 = smul.u32 2, %s32
        %p717 = scmp.lt.s32.totalorder %s716, 1
        %s718 = scalar_select %p717, %s716, 1
        %s719 = scalar_lea.vmem %s2, %s718
        %s720 = smul.u32 2, %s32
        %p721 = scmp.lt.s32.totalorder %s33, 1
        %s722 = scalar_select %p721, %s33, 1
        %s723 = smul.addr %s722, 8
        %s724 = smul.addr %s723, 8
        %s725 = scalar_lea.vmem %s5, %s724
        %p726 = scmp.lt.s32.totalorder %s33, 1
        %s727 = scalar_select %p726, %s33, 1
        %s728 = smul.addr %s727, 8
        %s729 = smul.addr %s728, 8
        %s730 = scalar_lea.vmem %s6, %s729
        %p731 = scmp.lt.s32.totalorder %s33, 1
        %s732 = scalar_select %p731, %s33, 1
        %s733 = smul.addr %s732, 8
        %s734 = smul.addr %s733, 8
        %s735 = scalar_lea.vmem %s7, %s734
        %p736 = scmp.lt.s32.totalorder %s33, 1
        %s737 = scalar_select %p736, %s33, 1
        %s738 = smul.addr %s737, 2
        %s739 = scalar_lea.vmem %s8, %s738
        %p740 = scmp.lt.s32.totalorder %s33, 1
        %s741 = scalar_select %p740, %s33, 1
        %s742 = smul.addr %s741, 2
        %s743 = scalar_lea.vmem %s9, %s742
        %p744 = scmp.lt.s32.totalorder %s33, 1
        %s745 = scalar_select %p744, %s33, 1
        %s746 = smul.addr %s745, 2
        %s747 = scalar_lea.vmem %s10, %s746
        %p748 = scmp.lt.s32.totalorder %s33, 1
        %s749 = scalar_select %p748, %s33, 1
        %s750 = smul.addr %s749, 8
        %s751 = smul.addr %s750, 8
        %s752 = scalar_lea.vmem %s11, %s751
        %p753 = scmp.lt.s32.totalorder %s33, 1
        %s754 = scalar_select %p753, %s33, 1
        %s755 = smul.addr %s754, 8
        %s756 = scalar_lea.vmem %s12, %s755
        %p757 = scmp.lt.s32.totalorder %s33, 1
        %s758 = scalar_select %p757, %s33, 1
        %s759 = smul.addr %s758, 4
        %s760 = smul.addr %s759, 8
        %s761 = scalar_lea.vmem %s13, %s760
        %p762 = scmp.lt.s32.totalorder %s33, 1
        %s763 = scalar_select %p762, %s33, 1
        %s764 = scalar_lea.vmem %s14, %s763
        %p765 = scmp.lt.s32.totalorder %s33, 1
        %s766 = scalar_select %p765, %s33, 1
        %s767 = smul.addr %s766, 4
        %s768 = smul.addr %s767, 8
        %s769 = scalar_lea.vmem %s15, %s768
        %s770 = smul.u32 2, %s32
        %p771 = scmp.eq.s32.totalorder %s33, 0
        // Predicated region
        $region85: #{attnhp_forward.1} parent=83 // pred_check
          %p772 = pneg %p771
        $region86: #{attnhp_forward.1} parent=83 // pred_check_branch
          %774 = sbr.rel (%p772) target = $region88
        $region87: #{attnhp_forward.1} parent=83 // pred_region
          %v775 = vld [vmem:[%s708] sm:$0xff]
          %v776 = vld [vmem:[%s708 + $0x8] sm:$0xff]
          %v777 = vld [vmem:[%s714] sm:$0xff]
          %v778 = vld [vmem:[%s714 + $0x8] sm:$0xff]
          %v779 = vld [vmem:[%s4] sm:$0x1]
          %v780 = vld [vmem:[%s4 + $0x1] sm:$0x1]
          %v781 = vld [vmem:[%s4 + $0x2] sm:$0x1]
          %783 = vset.pattern.permute.xlu0 0
          %784 = vperm.xlu0 %783, %v777
          %v785 = vpop.permute.xlu0 %784
          %788 = vset.pattern.permute.xlu0 0
          %789 = vperm.xlu0 %788, %v778
          %v790 = vpop.permute.xlu0 %789
          %v792 = vlaneseq
          %v793 = vshrl.u32 %v792, 7
          %v794 = vsub.s32 0, %v793
          %v795 = vrot.slane %v780, %v794
          %v796 = vmul.f32 %v785, %v795
          %v797 = vmul.f32 %v790, %v795
          %v798 = vlaneseq
          %v799 = vshrl.u32 %v798, 7
          %v800 = vsub.s32 0, %v799
          %v801 = vrot.slane %v781, %v800
          %v802 = vadd.f32 %v796, %v801
          %v803 = vadd.f32 %v797, %v801
          %v804 = vand.u32 2147483647, %v802
          %vm805 = vcmp.le.f32.partialorder %v804, 0.7853982
          %vm806 = vcmp.lt.s32.totalorder %v802, 0
          %v807 = vand.u32 %v802, 2139095040
          %v808 = vshrl.u32 %v807, 23
          %v809 = vsub.s32 %v808, 127
          %v810 = vand.u32 2147483647, %v802
          %v811 = vand.u32 %v810, 8388607
          %v812 = vor.u32 %v811, 8388608
          %v813 = vsub.s32 0, %v812
          %v814 = vadd.s32 %v809, 1
          %vm815 = vcmp.gt.s32.totalorder %v814, 0
          %v816 = vsel %vm815, %v814, 0
          %v817 = vshrl.u32 %v816, 5
          %v818 = vand.u32 %v816, 31
          %v819 = vsub.s32 32, %v818
          %v820 = vshrl.u32 683565275, %v819
          %v821 = vshll.u32 683565275, %v818
          %v822 = vshrl.u32 2475754826, %v819
          %v823 = vor.u32 %v821, %v822
          %v824 = vshll.u32 2475754826, %v818
          %v825 = vshrl.u32 2131351028, %v819
          %v826 = vor.u32 %v824, %v825
          %v827 = vshll.u32 2131351028, %v818
          %v828 = vshrl.u32 2102212464, %v819
          %v829 = vor.u32 %v827, %v828
          %v830 = vshll.u32 2102212464, %v818
          %v831 = vshrl.u32 920167782, %v819
          %v832 = vor.u32 %v830, %v831
          %v833 = vshll.u32 920167782, %v818
          %v834 = vshrl.u32 1326507024, %v819
          %v835 = vor.u32 %v833, %v834
          %vm836 = vcmp.lt.s32.totalorder %v817, 1
          %vm837 = vcmp.lt.s32.totalorder %v817, 2
          %vm838 = vcmp.lt.s32.totalorder %v817, 3
          %vm839 = vcmp.lt.s32.totalorder %v817, 4
          %v840 = vsel %vm836, %v820, %v823
          %v841 = vsel %vm839, %v829, 2102212464
          %v842 = vsel %vm838, %v826, %v841
          %v843 = vsel %vm837, %v840, %v842
          %v844 = vsel %vm836, %v823, %v826
          %v845 = vsel %vm839, %v832, 920167782
          %v846 = vsel %vm838, %v829, %v845
          %v847 = vsel %vm837, %v844, %v846
          %v848 = vsel %vm836, %v826, %v829
          %v849 = vsel %vm839, %v835, 1326507024
          %v850 = vsel %vm838, %v832, %v849
          %v851 = vsel %vm837, %v848, %v850
          %v852 = vshll.u32 %v812, 8
          %v853 = vmul.u32.u64.compose %v852, %v851
          %v854 = vextract.low.u32 %v853
          %v855 = vextract.high.u32 %v853
          %v856 = vmul.u32.u64.compose %v852, %v847
          %v857 = vextract.low.u32 %v856
          %v858 = vextract.high.u32 %v856
          %v859 = vmul.u32 %v852, %v843
          %v860 = vadd.s32 %v855, %v857
          %vm861 = vc.u32 %v855, %v857
          %v862 = vadd.s32 %v858, 1
          %v863 = vsel %vm861, %v862, %v858
          %v864 = vadd.s32 %v859, %v863
          %v865 = vadd.s32 %v864, 536870912
          %v866 = vshrl.u32 %v865, 30
          %v867 = vshll.u32 %v866, 30
          %v868 = vsub.s32 %v864, %v867
          %vm869 = vcmp.lt.s32.totalorder %v868, 0
          %v870 = vsub.s32 0, %v868
          %v871 = vsel %vm869, %v870, %v868
          %v872 = vclz %v871
          %v873 = vsub.s32 %v872, 2
          %vm874 = vcmp.gt.s32.totalorder 0, %v873
          %v875 = vsel %vm874, 0, %v873
          %v876 = vsub.s32 32, %v875
          %v877 = vshll.u32 %v868, %v875
          %v878 = vshrl.u32 %v860, %v876
          %v879 = vor.u32 %v877, %v878
          %v880 = vsub.s32 4294967266, %v875
          %v881 = vadd.s32 %v880, 127
          %v882 = vshll.u32 %v881, 23
          %v883 = vor.u32 4788187, %v882
          %v884 = vand.u32 2147483647, %v883
          %v886 = vcvt.s32.f32 %v879
          %v887 = vmul.f32 %v886, %v884
          %v888 = vxor.u32 %v887, 2147483648
          %v889 = vsel %vm806, %v888, %v887
          %v890 = vsub.s32 4, %v866
          %v891 = vsel %vm806, %v890, %v866
          %v892 = vsel %vm805, %v802, %v889
          %v893 = vsel %vm805, 0, %v891
          %v894 = vcosq.f32.pop %v892
          %v895 = vsinq.f32.pop %v892
          %vm896 = vweird.f32 %v802
          %v897 = vadd.s32 %v893, 3
          %v898 = vand.u32 %v897, 3
          %vm899 = vcmp.lt.s32.totalorder %v898, 2
          %vm900 = vcmp.eq.s32.totalorder %v898, 0
          %v901 = vxor.u32 %v895, 2147483648
          %v902 = vsel %vm900, %v894, %v901
          %vm903 = vcmp.eq.s32.totalorder %v898, 2
          %v904 = vxor.u32 %v894, 2147483648
          %v905 = vsel %vm903, %v904, %v895
          %v906 = vsel %vm899, %v902, %v905
          %v907 = vsel %vm896, nan, %v906
          %v908 = vand.u32 2147483647, %v803
          %vm909 = vcmp.le.f32.partialorder %v908, 0.7853982
          %vm910 = vcmp.lt.s32.totalorder %v803, 0
          %v911 = vand.u32 %v803, 2139095040
          %v912 = vshrl.u32 %v911, 23
          %v913 = vsub.s32 %v912, 127
          %v914 = vand.u32 2147483647, %v803
          %v915 = vand.u32 %v914, 8388607
          %v916 = vor.u32 %v915, 8388608
          %v917 = vsub.s32 0, %v916
          %v918 = vadd.s32 %v913, 1
          %vm919 = vcmp.gt.s32.totalorder %v918, 0
          %v920 = vsel %vm919, %v918, 0
          %v921 = vshrl.u32 %v920, 5
          %v922 = vand.u32 %v920, 31
          %v923 = vsub.s32 32, %v922
          %v924 = vshrl.u32 683565275, %v923
          %v925 = vshll.u32 683565275, %v922
          %v926 = vshrl.u32 2475754826, %v923
          %v927 = vor.u32 %v925, %v926
          %v928 = vshll.u32 2475754826, %v922
          %v929 = vshrl.u32 2131351028, %v923
          %v930 = vor.u32 %v928, %v929
          %v931 = vshll.u32 2131351028, %v922
          %v932 = vshrl.u32 2102212464, %v923
          %v933 = vor.u32 %v931, %v932
          %v934 = vshll.u32 2102212464, %v922
          %v935 = vshrl.u32 920167782, %v923
          %v936 = vor.u32 %v934, %v935
          %v937 = vshll.u32 920167782, %v922
          %v938 = vshrl.u32 1326507024, %v923
          %v939 = vor.u32 %v937, %v938
          %vm940 = vcmp.lt.s32.totalorder %v921, 1
          %vm941 = vcmp.lt.s32.totalorder %v921, 2
          %vm942 = vcmp.lt.s32.totalorder %v921, 3
          %vm943 = vcmp.lt.s32.totalorder %v921, 4
          %v944 = vsel %vm940, %v924, %v927
          %v945 = vsel %vm943, %v933, 2102212464
          %v946 = vsel %vm942, %v930, %v945
          %v947 = vsel %vm941, %v944, %v946
          %v948 = vsel %vm940, %v927, %v930
          %v949 = vsel %vm943, %v936, 920167782
          %v950 = vsel %vm942, %v933, %v949
          %v951 = vsel %vm941, %v948, %v950
          %v952 = vsel %vm940, %v930, %v933
          %v953 = vsel %vm943, %v939, 1326507024
          %v954 = vsel %vm942, %v936, %v953
          %v955 = vsel %vm941, %v952, %v954
          %v956 = vshll.u32 %v916, 8
          %v957 = vmul.u32.u64.compose %v956, %v955
          %v958 = vextract.low.u32 %v957
          %v959 = vextract.high.u32 %v957
          %v960 = vmul.u32.u64.compose %v956, %v951
          %v961 = vextract.low.u32 %v960
          %v962 = vextract.high.u32 %v960
          %v963 = vmul.u32 %v956, %v947
          %v964 = vadd.s32 %v959, %v961
          %vm965 = vc.u32 %v959, %v961
          %v966 = vadd.s32 %v962, 1
          %v967 = vsel %vm965, %v966, %v962
          %v968 = vadd.s32 %v963, %v967
          %v969 = vadd.s32 %v968, 536870912
          %v970 = vshrl.u32 %v969, 30
          %v971 = vshll.u32 %v970, 30
          %v972 = vsub.s32 %v968, %v971
          %vm973 = vcmp.lt.s32.totalorder %v972, 0
          %v974 = vsub.s32 0, %v972
          %v975 = vsel %vm973, %v974, %v972
          %v976 = vclz %v975
          %v977 = vsub.s32 %v976, 2
          %vm978 = vcmp.gt.s32.totalorder 0, %v977
          %v979 = vsel %vm978, 0, %v977
          %v980 = vsub.s32 32, %v979
          %v981 = vshll.u32 %v972, %v979
          %v982 = vshrl.u32 %v964, %v980
          %v983 = vor.u32 %v981, %v982
          %v984 = vsub.s32 4294967266, %v979
          %v985 = vadd.s32 %v984, 127
          %v986 = vshll.u32 %v985, 23
          %v987 = vor.u32 4788187, %v986
          %v988 = vand.u32 2147483647, %v987
          %v990 = vcvt.s32.f32 %v983
          %v991 = vmul.f32 %v990, %v988
          %v992 = vxor.u32 %v991, 2147483648
          %v993 = vsel %vm910, %v992, %v991
          %v994 = vsub.s32 4, %v970
          %v995 = vsel %vm910, %v994, %v970
          %v996 = vsel %vm909, %v803, %v993
          %v997 = vsel %vm909, 0, %v995
          %v998 = vcosq.f32.pop %v996
          %v999 = vsinq.f32.pop %v996
          %vm1000 = vweird.f32 %v803
          %v1001 = vadd.s32 %v997, 3
          %v1002 = vand.u32 %v1001, 3
          %vm1003 = vcmp.lt.s32.totalorder %v1002, 2
          %vm1004 = vcmp.eq.s32.totalorder %v1002, 0
          %v1005 = vxor.u32 %v999, 2147483648
          %v1006 = vsel %vm1004, %v998, %v1005
          %vm1007 = vcmp.eq.s32.totalorder %v1002, 2
          %v1008 = vxor.u32 %v998, 2147483648
          %v1009 = vsel %vm1007, %v1008, %v999
          %v1010 = vsel %vm1003, %v1006, %v1009
          %v1011 = vsel %vm1000, nan, %v1010
          %v1012 = vld [vmem:[%s3] sm:$0xff]
          %v1013 = vld [vmem:[%s3 + $0x8] sm:$0xff]
          %v1014 = vlaneseq
          %v1015 = vshrl.u32 %v1014, 7
          %v1016 = vsub.s32 0, %v1015
          %v1017 = vrot.slane %v779, %v1016
          %vm1018 = vcmask 130048
          %v1020 = vsel %vm1018, %v775, 0
          %v1023 = vsel %vm1018, %v776, 0
          %1025 = vmatprep.subr.mxu0 0.0
          %1026 = vmatpush1.msra.mxu0 %v1012
          %1027 = vmatprep.subr.mxu0 0.0
          %1028 = vmatpush1.msra.mxu0 %v1013
          %1029 = vmatprep.subr.mxu0 0.0
          %1030 = vmatpush1.msra.mxu0 0.0
          %1031 = vmatprep.subr.mxu0 0.0
          %1032 = vmatpush1.msra.mxu0 0.0
          %1033 = vmatprep.subr.mxu0 0.0
          %1034 = vmatpush1.msra.mxu0 0.0
          %1035 = vmatprep.subr.mxu0 0.0
          %1036 = vmatpush1.msra.mxu0 0.0
          %1037 = vmatprep.subr.mxu0 0.0
          %1038 = vmatpush1.msra.mxu0 0.0
          %1039 = vmatprep.subr.mxu0 0.0
          %1040 = vmatpush1.msra.mxu0 0.0
          %1041 = vmatprep.subr.mxu0 0.0
          %1042 = vmatpush1.msra.mxu0 0.0
          %1043 = vmatprep.subr.mxu0 0.0
          %1044 = vmatpush1.msra.mxu0 0.0
          %1045 = vmatprep.subr.mxu0 0.0
          %1046 = vmatpush1.msra.mxu0 0.0
          %1047 = vmatprep.subr.mxu0 0.0
          %1048 = vmatpush1.msra.mxu0 0.0
          %1049 = vmatprep.subr.mxu0 0.0
          %1050 = vmatpush1.msra.mxu0 0.0
          %1051 = vmatprep.subr.mxu0 0.0
          %1052 = vmatpush1.msra.mxu0 0.0
          %1053 = vmatprep.subr.mxu0 0.0
          %1054 = vmatpush1.msra.mxu0 0.0
          %1055 = vmatprep.subr.mxu0 0.0
          %1056 = vmatpush1.msra.mxu0 0.0
          %1057 = vmatprep.subr.mxu0 0.0
          %1058 = vmatpush1.msra.mxu0 0.0
          %1059 = vmatprep.subr.mxu0 0.0
          %1060 = vmatpush1.msra.mxu0 0.0
          %1061 = vmatprep.subr.mxu0 0.0
          %1062 = vmatpush1.msra.mxu0 0.0
          %1063 = vmatprep.subr.mxu0 0.0
          %1064 = vmatpush1.msra.mxu0 0.0
          %1065 = vmatprep.subr.mxu0 0.0
          %1066 = vmatpush1.msra.mxu0 0.0
          %1067 = vmatprep.subr.mxu0 0.0
          %1068 = vmatpush1.msra.mxu0 0.0
          %1069 = vmatprep.subr.mxu0 0.0
          %1070 = vmatpush1.msra.mxu0 0.0
          %1071 = vmatprep.subr.mxu0 0.0
          %1072 = vmatpush1.msra.mxu0 0.0
          %1073 = vmatprep.subr.mxu0 0.0
          %1074 = vmatpush1.msra.mxu0 0.0
          %1075 = vmatprep.subr.mxu0 0.0
          %1076 = vmatpush1.msra.mxu0 0.0
          %1077 = vmatprep.subr.mxu0 0.0
          %1078 = vmatpush1.msra.mxu0 0.0
          %1079 = vmatprep.subr.mxu0 0.0
          %1080 = vmatpush1.msra.mxu0 0.0
          %1081 = vmatprep.subr.mxu0 0.0
          %1082 = vmatpush1.msra.mxu0 0.0
          %1083 = vmatprep.subr.mxu0 0.0
          %1084 = vmatpush1.msra.mxu0 0.0
          %1085 = vmatprep.subr.mxu0 0.0
          %1086 = vmatpush1.msra.mxu0 0.0
          %1087 = vmatprep.subr.mxu0 0.0
          %1088 = vmatpush1.msra.mxu0 0.0
          %1089 = vmatprep.mubr.f32.mxu0 0.0
          %1090 = vmatmul.mubr.f32.gmra.mrb[0].mxu0 %v1020
          %v1091 = vpop.f32.mrb[0].mxu0
          %v1092 = vadd.f32 %v1017, %v1091
          %v1093 = vpop.f32.mrb[0].mxu0
          %1094 = vmatprep.mubr.f32.mxu0 0.0
          %1095 = vmatmul.mubr.f32.gmra.mrb[0].mxu0 %v1023
          %v1096 = vpop.f32.mrb[0].mxu0
          %v1097 = vadd.f32 %v1017, %v1096
          %v1098 = vpop.f32.mrb[0].mxu0
          %1099 = vdwg.mxu0
          %v1100 = vadd.f32 %v1092, %v907
          %v1101 = vadd.f32 %v1097, %v1011
          %vm1102 = vcmask 261120
          %1103 = vst.msk [vmem:[#allocation2] sm:$0xff] %vm1102, %v1100
          %1104 = vst.msk [vmem:[#allocation2 + $0x8] sm:$0xff] %vm1102, %v1101
        $region88: #{attnhp_forward.1} parent=83 // pred_fallthru
          _
        %v1105 = vld [vmem:[#allocation2] sm:$0xff]
        %v1106 = vld [vmem:[#allocation2 + $0x8] sm:$0xff]
        %v1107 = vld [vmem:[%s719] sm:$0x1]
        %v1108 = vld [vmem:[%s719 + $0x1] sm:$0x1]
        %v1109 = vlaneseq
        %v1110 = vand.u32 %v1109, 127
        %v1111 = vlaneseq
        %v1112 = vshrl.u32 %v1111, 7
        %v1113 = vlaneseq
        %v1114 = vshrl.u32 %v1113, 7
        %v1115 = vsub.s32 0, %v1114
        %v1116 = vrot.slane %v1107, %v1115
        %v1117 = vlaneseq
        %v1118 = vshrl.u32 %v1117, 7
        %v1119 = vsub.s32 0, %v1118
        %v1120 = vrot.slane %v1108, %v1119
        %1121 = vset.pattern.permute.xlu0 0
        %1122 = vperm.xlu0 %1121, %v1116
        %v1123 = vpop.permute.xlu0 %1122
        %1124 = vset.pattern.permute.xlu0 0
        %1125 = vperm.xlu0 %1124, %v1120
        %v1126 = vpop.permute.xlu0 %1125
        %vm1127 = vcmp.ge.s32.totalorder %v1110, %v1123
        %vm1128 = vcmp.ge.s32.totalorder %v1110, %v1126
        %vm1129 = vcmp.le.s32.totalorder %v1112, %v1110
        %vm1130 = vmor %vm1127, %vm1129
        %vm1131 = vmor %vm1128, %vm1129
        %v1132 = vsel %vm1130, -1000000.0, 0.0
        %v1133 = vsel %vm1131, -1000000.0, 0.0
        %vm1134 = vcmp.lt.s32.totalorder %v1112, 1
        %vm1135 = vcmp.lt.s32.totalorder %v1107, 1
        %vm1136 = vcmp.lt.s32.totalorder %v1108, 1
        %v1137 = vsel %vm1135, 1, 0
        %v1138 = vsel %vm1136, 1, 0
        %v1139 = vlaneseq
        %v1140 = vshrl.u32 %v1139, 7
        %v1141 = vsub.s32 0, %v1140
        %v1142 = vrot.slane %v1137, %v1141
        %v1143 = vlaneseq
        %v1144 = vshrl.u32 %v1143, 7
        %v1145 = vsub.s32 0, %v1144
        %v1146 = vrot.slane %v1138, %v1145
        %vm1147 = vcmp.eq.s32.totalorder %v1142, 1
        %vm1148 = vcmp.eq.s32.totalorder %v1146, 1
        %vm1149 = vmor %vm1134, %vm1147
        %vm1150 = vmor %vm1134, %vm1148
        %v1151 = vsel %vm1149, 1, 0
        %v1152 = vsel %vm1150, 1, 0
        %v1153 = vcvt.s32.f32 %v1151
        %v1154 = vcvt.s32.f32 %v1152
        %v1155 = vld [vmem:[%s725] sm:$0xff]
        %v1156 = vld [vmem:[%s725 + $0x8] sm:$0xff]
        %v1157 = vld [vmem:[%s725 + $0x10] sm:$0xff]
        %v1158 = vld [vmem:[%s725 + $0x18] sm:$0xff]
        %v1159 = vld [vmem:[%s739] sm:$0x1]
        %v1161 = vlaneseq
        %v1162 = vshrl.u32 %v1161, 7
        %v1163 = vsub.s32 0, %v1162
        %v1164 = vrot.slane %v1159, %v1163
        %vm1166 = vcmask 261120
        %v1168 = vsel %vm1166, %v1105, 0
        %v1171 = vsel %vm1166, %v1106, 0
        %1173 = vmatprep.subr.mxu0 0.0
        %1174 = vmatpush1.msra.mxu0 %v1155
        %1175 = vmatprep.subr.mxu0 0.0
        %1176 = vmatpush1.msra.mxu0 %v1156
        %1177 = vmatprep.subr.mxu0 0.0
        %1178 = vmatpush1.msra.mxu0 %v1157
        %1179 = vmatprep.subr.mxu0 0.0
        %1180 = vmatpush1.msra.mxu0 %v1158
        %1181 = vmatprep.subr.mxu0 0.0
        %1182 = vmatpush1.msra.mxu0 0.0
        %1183 = vmatprep.subr.mxu0 0.0
        %1184 = vmatpush1.msra.mxu0 0.0
        %1185 = vmatprep.subr.mxu0 0.0
        %1186 = vmatpush1.msra.mxu0 0.0
        %1187 = vmatprep.subr.mxu0 0.0
        %1188 = vmatpush1.msra.mxu0 0.0
        %1189 = vmatprep.subr.mxu0 0.0
        %1190 = vmatpush1.msra.mxu0 0.0
        %1191 = vmatprep.subr.mxu0 0.0
        %1192 = vmatpush1.msra.mxu0 0.0
        %1193 = vmatprep.subr.mxu0 0.0
        %1194 = vmatpush1.msra.mxu0 0.0
        %1195 = vmatprep.subr.mxu0 0.0
        %1196 = vmatpush1.msra.mxu0 0.0
        %1197 = vmatprep.subr.mxu0 0.0
        %1198 = vmatpush1.msra.mxu0 0.0
        %1199 = vmatprep.subr.mxu0 0.0
        %1200 = vmatpush1.msra.mxu0 0.0
        %1201 = vmatprep.subr.mxu0 0.0
        %1202 = vmatpush1.msra.mxu0 0.0
        %1203 = vmatprep.subr.mxu0 0.0
        %1204 = vmatpush1.msra.mxu0 0.0
        %1205 = vmatprep.subr.mxu0 0.0
        %1206 = vmatpush1.msra.mxu0 0.0
        %1207 = vmatprep.subr.mxu0 0.0
        %1208 = vmatpush1.msra.mxu0 0.0
        %1209 = vmatprep.subr.mxu0 0.0
        %1210 = vmatpush1.msra.mxu0 0.0
        %1211 = vmatprep.subr.mxu0 0.0
        %1212 = vmatpush1.msra.mxu0 0.0
        %1213 = vmatprep.subr.mxu0 0.0
        %1214 = vmatpush1.msra.mxu0 0.0
        %1215 = vmatprep.subr.mxu0 0.0
        %1216 = vmatpush1.msra.mxu0 0.0
        %1217 = vmatprep.subr.mxu0 0.0
        %1218 = vmatpush1.msra.mxu0 0.0
        %1219 = vmatprep.subr.mxu0 0.0
        %1220 = vmatpush1.msra.mxu0 0.0
        %1221 = vmatprep.subr.mxu0 0.0
        %1222 = vmatpush1.msra.mxu0 0.0
        %1223 = vmatprep.subr.mxu0 0.0
        %1224 = vmatpush1.msra.mxu0 0.0
        %1225 = vmatprep.subr.mxu0 0.0
        %1226 = vmatpush1.msra.mxu0 0.0
        %1227 = vmatprep.subr.mxu0 0.0
        %1228 = vmatpush1.msra.mxu0 0.0
        %1229 = vmatprep.subr.mxu0 0.0
        %1230 = vmatpush1.msra.mxu0 0.0
        %1231 = vmatprep.subr.mxu0 0.0
        %1232 = vmatpush1.msra.mxu0 0.0
        %1233 = vmatprep.subr.mxu0 0.0
        %1234 = vmatpush1.msra.mxu0 0.0
        %1235 = vmatprep.subr.mxu0 0.0
        %1236 = vmatpush1.msra.mxu0 0.0
        %1237 = vmatprep.mubr.f32.mxu0 0.0
        %1238 = vmatmul.mubr.f32.gmra.mrb[0].mxu0 %v1168
        %v1239 = vpop.f32.mrb[0].mxu0
        %v1240 = vadd.f32 %v1164, %v1239
        %v1241 = vpop.f32.mrb[0].mxu0
        %1242 = vmatprep.mubr.f32.mxu0 0.0
        %1243 = vmatmul.mubr.f32.gmra.mrb[0].mxu0 %v1171
        %v1244 = vpop.f32.mrb[0].mxu0
        %v1245 = vadd.f32 %v1164, %v1244
        %v1246 = vpop.f32.mrb[0].mxu0
        %1247 = vdwg.mxu0
        %v1248 = vld [vmem:[%s730] sm:$0xff]
        %v1249 = vld [vmem:[%s730 + $0x8] sm:$0xff]
        %v1250 = vld [vmem:[%s730 + $0x10] sm:$0xff]
        %v1251 = vld [vmem:[%s730 + $0x18] sm:$0xff]
        %v1252 = vld [vmem:[%s743] sm:$0x1]
        %v1254 = vlaneseq
        %v1255 = vshrl.u32 %v1254, 7
        %v1256 = vsub.s32 0, %v1255
        %v1257 = vrot.slane %v1252, %v1256
        %1259 = vmatprep.subr.mxu0 0.0
        %1260 = vmatpush1.msra.mxu0 %v1248
        %1261 = vmatprep.subr.mxu0 0.0
        %1262 = vmatpush1.msra.mxu0 %v1249
        %1263 = vmatprep.subr.mxu0 0.0
        %1264 = vmatpush1.msra.mxu0 %v1250
        %1265 = vmatprep.subr.mxu0 0.0
        %1266 = vmatpush1.msra.mxu0 %v1251
        %1267 = vmatprep.subr.mxu0 0.0
        %1268 = vmatpush1.msra.mxu0 0.0
        %1269 = vmatprep.subr.mxu0 0.0
        %1270 = vmatpush1.msra.mxu0 0.0
        %1271 = vmatprep.subr.mxu0 0.0
        %1272 = vmatpush1.msra.mxu0 0.0
        %1273 = vmatprep.subr.mxu0 0.0
        %1274 = vmatpush1.msra.mxu0 0.0
        %1275 = vmatprep.subr.mxu0 0.0
        %1276 = vmatpush1.msra.mxu0 0.0
        %1277 = vmatprep.subr.mxu0 0.0
        %1278 = vmatpush1.msra.mxu0 0.0
        %1279 = vmatprep.subr.mxu0 0.0
        %1280 = vmatpush1.msra.mxu0 0.0
        %1281 = vmatprep.subr.mxu0 0.0
        %1282 = vmatpush1.msra.mxu0 0.0
        %1283 = vmatprep.subr.mxu0 0.0
        %1284 = vmatpush1.msra.mxu0 0.0
        %1285 = vmatprep.subr.mxu0 0.0
        %1286 = vmatpush1.msra.mxu0 0.0
        %1287 = vmatprep.subr.mxu0 0.0
        %1288 = vmatpush1.msra.mxu0 0.0
        %1289 = vmatprep.subr.mxu0 0.0
        %1290 = vmatpush1.msra.mxu0 0.0
        %1291 = vmatprep.subr.mxu0 0.0
        %1292 = vmatpush1.msra.mxu0 0.0
        %1293 = vmatprep.subr.mxu0 0.0
        %1294 = vmatpush1.msra.mxu0 0.0
        %1295 = vmatprep.subr.mxu0 0.0
        %1296 = vmatpush1.msra.mxu0 0.0
        %1297 = vmatprep.subr.mxu0 0.0
        %1298 = vmatpush1.msra.mxu0 0.0
        %1299 = vmatprep.subr.mxu0 0.0
        %1300 = vmatpush1.msra.mxu0 0.0
        %1301 = vmatprep.subr.mxu0 0.0
        %1302 = vmatpush1.msra.mxu0 0.0
        %1303 = vmatprep.subr.mxu0 0.0
        %1304 = vmatpush1.msra.mxu0 0.0
        %1305 = vmatprep.subr.mxu0 0.0
        %1306 = vmatpush1.msra.mxu0 0.0
        %1307 = vmatprep.subr.mxu0 0.0
        %1308 = vmatpush1.msra.mxu0 0.0
        %1309 = vmatprep.subr.mxu0 0.0
        %1310 = vmatpush1.msra.mxu0 0.0
        %1311 = vmatprep.subr.mxu0 0.0
        %1312 = vmatpush1.msra.mxu0 0.0
        %1313 = vmatprep.subr.mxu0 0.0
        %1314 = vmatpush1.msra.mxu0 0.0
        %1315 = vmatprep.subr.mxu0 0.0
        %1316 = vmatpush1.msra.mxu0 0.0
        %1317 = vmatprep.subr.mxu0 0.0
        %1318 = vmatpush1.msra.mxu0 0.0
        %1319 = vmatprep.subr.mxu0 0.0
        %1320 = vmatpush1.msra.mxu0 0.0
        %1321 = vmatprep.subr.mxu0 0.0
        %1322 = vmatpush1.msra.mxu0 0.0
        %1323 = vmatprep.mubr.f32.mxu0 0.0
        %1324 = vmatmul.mubr.f32.gmra.mrb[0].mxu0 %v1168
        %v1325 = vpop.f32.mrb[0].mxu0
        %v1326 = vadd.f32 %v1257, %v1325
        %v1327 = vpop.f32.mrb[0].mxu0
        %1328 = vmatprep.mubr.f32.mxu0 0.0
        %1329 = vmatmul.mubr.f32.gmra.mrb[0].mxu0 %v1171
        %v1330 = vpop.f32.mrb[0].mxu0
        %v1331 = vadd.f32 %v1257, %v1330
        %v1332 = vpop.f32.mrb[0].mxu0
        %1333 = vdwg.mxu0
        %v1334 = vld [vmem:[%s735] sm:$0xff]
        %v1335 = vld [vmem:[%s735 + $0x8] sm:$0xff]
        %v1336 = vld [vmem:[%s735 + $0x10] sm:$0xff]
        %v1337 = vld [vmem:[%s735 + $0x18] sm:$0xff]
        %v1338 = vld [vmem:[%s747] sm:$0x1]
        %v1340 = vlaneseq
        %v1341 = vshrl.u32 %v1340, 7
        %v1342 = vsub.s32 0, %v1341
        %v1343 = vrot.slane %v1338, %v1342
        %1345 = vmatprep.subr.mxu0 0.0
        %1346 = vmatpush1.msra.mxu0 %v1334
        %1347 = vmatprep.subr.mxu0 0.0
        %1348 = vmatpush1.msra.mxu0 %v1335
        %1349 = vmatprep.subr.mxu0 0.0
        %1350 = vmatpush1.msra.mxu0 %v1336
        %1351 = vmatprep.subr.mxu0 0.0
        %1352 = vmatpush1.msra.mxu0 %v1337
        %1353 = vmatprep.subr.mxu0 0.0
        %1354 = vmatpush1.msra.mxu0 0.0
        %1355 = vmatprep.subr.mxu0 0.0
        %1356 = vmatpush1.msra.mxu0 0.0
        %1357 = vmatprep.subr.mxu0 0.0
        %1358 = vmatpush1.msra.mxu0 0.0
        %1359 = vmatprep.subr.mxu0 0.0
        %1360 = vmatpush1.msra.mxu0 0.0
        %1361 = vmatprep.subr.mxu0 0.0
        %1362 = vmatpush1.msra.mxu0 0.0
        %1363 = vmatprep.subr.mxu0 0.0
        %1364 = vmatpush1.msra.mxu0 0.0
        %1365 = vmatprep.subr.mxu0 0.0
        %1366 = vmatpush1.msra.mxu0 0.0
        %1367 = vmatprep.subr.mxu0 0.0
        %1368 = vmatpush1.msra.mxu0 0.0
        %1369 = vmatprep.subr.mxu0 0.0
        %1370 = vmatpush1.msra.mxu0 0.0
        %1371 = vmatprep.subr.mxu0 0.0
        %1372 = vmatpush1.msra.mxu0 0.0
        %1373 = vmatprep.subr.mxu0 0.0
        %1374 = vmatpush1.msra.mxu0 0.0
        %1375 = vmatprep.subr.mxu0 0.0
        %1376 = vmatpush1.msra.mxu0 0.0
        %1377 = vmatprep.subr.mxu0 0.0
        %1378 = vmatpush1.msra.mxu0 0.0
        %1379 = vmatprep.subr.mxu0 0.0
        %1380 = vmatpush1.msra.mxu0 0.0
        %1381 = vmatprep.subr.mxu0 0.0
        %1382 = vmatpush1.msra.mxu0 0.0
        %1383 = vmatprep.subr.mxu0 0.0
        %1384 = vmatpush1.msra.mxu0 0.0
        %1385 = vmatprep.subr.mxu0 0.0
        %1386 = vmatpush1.msra.mxu0 0.0
        %1387 = vmatprep.subr.mxu0 0.0
        %1388 = vmatpush1.msra.mxu0 0.0
        %1389 = vmatprep.subr.mxu0 0.0
        %1390 = vmatpush1.msra.mxu0 0.0
        %1391 = vmatprep.subr.mxu0 0.0
        %1392 = vmatpush1.msra.mxu0 0.0
        %1393 = vmatprep.subr.mxu0 0.0
        %1394 = vmatpush1.msra.mxu0 0.0
        %1395 = vmatprep.subr.mxu0 0.0
        %1396 = vmatpush1.msra.mxu0 0.0
        %1397 = vmatprep.subr.mxu0 0.0
        %1398 = vmatpush1.msra.mxu0 0.0
        %1399 = vmatprep.subr.mxu0 0.0
        %1400 = vmatpush1.msra.mxu0 0.0
        %1401 = vmatprep.subr.mxu0 0.0
        %1402 = vmatpush1.msra.mxu0 0.0
        %1403 = vmatprep.subr.mxu0 0.0
        %1404 = vmatpush1.msra.mxu0 0.0
        %1405 = vmatprep.subr.mxu0 0.0
        %1406 = vmatpush1.msra.mxu0 0.0
        %1407 = vmatprep.subr.mxu0 0.0
        %1408 = vmatpush1.msra.mxu0 0.0
        %1409 = vmatprep.mubr.f32.mxu0 0.0
        %1410 = vmatmul.mubr.f32.gmra.mrb[0].mxu0 %v1168
        %v1411 = vpop.f32.mrb[0].mxu0
        %v1412 = vadd.f32 %v1343, %v1411
        %v1413 = vpop.f32.mrb[0].mxu0
        %1414 = vmatprep.mubr.f32.mxu0 0.0
        %1415 = vmatmul.mubr.f32.gmra.mrb[0].mxu0 %v1171
        %v1416 = vpop.f32.mrb[0].mxu0
        %v1417 = vadd.f32 %v1343, %v1416
        %v1418 = vpop.f32.mrb[0].mxu0
        %1419 = vdwg.mxu0
        %v1421 = vsel %vm1166, %v1240, 0
        %v1424 = vsel %vm1166, %v1326, 0
        %1426 = vmatprep.subr.mxu0 0.0
        %1427 = vmatpush1.xpose.msra.mxu0 %v1424
        %1428 = vmatprep.subr.mxu0 0.0
        %1429 = vmatpush1.xpose.msra.mxu0 0.0
        %1430 = vmatprep.subr.mxu0 0.0
        %1431 = vmatpush1.xpose.msra.mxu0 0.0
        %1432 = vmatprep.subr.mxu0 0.0
        %1433 = vmatpush1.xpose.msra.mxu0 0.0
        %1434 = vmatprep.subr.mxu0 0.0
        %1435 = vmatpush1.xpose.msra.mxu0 0.0
        %1436 = vmatprep.subr.mxu0 0.0
        %1437 = vmatpush1.xpose.msra.mxu0 0.0
        %1438 = vmatprep.subr.mxu0 0.0
        %1439 = vmatpush1.xpose.msra.mxu0 0.0
        %1440 = vmatprep.subr.mxu0 0.0
        %1441 = vmatpush1.xpose.msra.mxu0 0.0
        %1442 = vmatprep.subr.mxu0 0.0
        %1443 = vmatpush1.xpose.msra.mxu0 0.0
        %1444 = vmatprep.subr.mxu0 0.0
        %1445 = vmatpush1.xpose.msra.mxu0 0.0
        %1446 = vmatprep.subr.mxu0 0.0
        %1447 = vmatpush1.xpose.msra.mxu0 0.0
        %1448 = vmatprep.subr.mxu0 0.0
        %1449 = vmatpush1.xpose.msra.mxu0 0.0
        %1450 = vmatprep.subr.mxu0 0.0
        %1451 = vmatpush1.xpose.msra.mxu0 0.0
        %1452 = vmatprep.subr.mxu0 0.0
        %1453 = vmatpush1.xpose.msra.mxu0 0.0
        %1454 = vmatprep.subr.mxu0 0.0
        %1455 = vmatpush1.xpose.msra.mxu0 0.0
        %1456 = vmatprep.subr.mxu0 0.0
        %1457 = vmatpush1.xpose.msra.mxu0 0.0
        %1458 = vmatprep.subr.mxu0 0.0
        %1459 = vmatpush1.xpose.msra.mxu0 0.0
        %1460 = vmatprep.subr.mxu0 0.0
        %1461 = vmatpush1.xpose.msra.mxu0 0.0
        %1462 = vmatprep.subr.mxu0 0.0
        %1463 = vmatpush1.xpose.msra.mxu0 0.0
        %1464 = vmatprep.subr.mxu0 0.0
        %1465 = vmatpush1.xpose.msra.mxu0 0.0
        %1466 = vmatprep.subr.mxu0 0.0
        %1467 = vmatpush1.xpose.msra.mxu0 0.0
        %1468 = vmatprep.subr.mxu0 0.0
        %1469 = vmatpush1.xpose.msra.mxu0 0.0
        %1470 = vmatprep.subr.mxu0 0.0
        %1471 = vmatpush1.xpose.msra.mxu0 0.0
        %1472 = vmatprep.subr.mxu0 0.0
        %1473 = vmatpush1.xpose.msra.mxu0 0.0
        %1474 = vmatprep.subr.mxu0 0.0
        %1475 = vmatpush1.xpose.msra.mxu0 0.0
        %1476 = vmatprep.subr.mxu0 0.0
        %1477 = vmatpush1.xpose.msra.mxu0 0.0
        %1478 = vmatprep.subr.mxu0 0.0
        %1479 = vmatpush1.xpose.msra.mxu0 0.0
        %1480 = vmatprep.subr.mxu0 0.0
        %1481 = vmatpush1.xpose.msra.mxu0 0.0
        %1482 = vmatprep.subr.mxu0 0.0
        %1483 = vmatpush1.xpose.msra.mxu0 0.0
        %1484 = vmatprep.subr.mxu0 0.0
        %1485 = vmatpush1.xpose.msra.mxu0 0.0
        %1486 = vmatprep.subr.mxu0 0.0
        %1487 = vmatpush1.xpose.msra.mxu0 0.0
        %1488 = vmatprep.subr.mxu0 0.0
        %1489 = vmatpush1.xpose.msra.mxu0 0.0
        %1490 = vmatprep.mubr.f32.mxu0 0.0
        %1491 = vmatmul.mubr.f32.gmra.mrb[0].mxu0 %v1421
        %v1492 = vpop.f32.mrb[0].mxu0
        %v1493 = vadd.f32 %v1132, %v1492
        %v1494 = vpop.f32.mrb[0].mxu0
        %1495 = vdwg.mxu0
        %v1497 = vsel %vm1166, %v1245, 0
        %v1500 = vsel %vm1166, %v1331, 0
        %1502 = vmatprep.subr.mxu0 0.0
        %1503 = vmatpush1.xpose.msra.mxu0 %v1500
        %1504 = vmatprep.subr.mxu0 0.0
        %1505 = vmatpush1.xpose.msra.mxu0 0.0
        %1506 = vmatprep.subr.mxu0 0.0
        %1507 = vmatpush1.xpose.msra.mxu0 0.0
        %1508 = vmatprep.subr.mxu0 0.0
        %1509 = vmatpush1.xpose.msra.mxu0 0.0
        %1510 = vmatprep.subr.mxu0 0.0
        %1511 = vmatpush1.xpose.msra.mxu0 0.0
        %1512 = vmatprep.subr.mxu0 0.0
        %1513 = vmatpush1.xpose.msra.mxu0 0.0
        %1514 = vmatprep.subr.mxu0 0.0
        %1515 = vmatpush1.xpose.msra.mxu0 0.0
        %1516 = vmatprep.subr.mxu0 0.0
        %1517 = vmatpush1.xpose.msra.mxu0 0.0
        %1518 = vmatprep.subr.mxu0 0.0
        %1519 = vmatpush1.xpose.msra.mxu0 0.0
        %1520 = vmatprep.subr.mxu0 0.0
        %1521 = vmatpush1.xpose.msra.mxu0 0.0
        %1522 = vmatprep.subr.mxu0 0.0
        %1523 = vmatpush1.xpose.msra.mxu0 0.0
        %1524 = vmatprep.subr.mxu0 0.0
        %1525 = vmatpush1.xpose.msra.mxu0 0.0
        %1526 = vmatprep.subr.mxu0 0.0
        %1527 = vmatpush1.xpose.msra.mxu0 0.0
        %1528 = vmatprep.subr.mxu0 0.0
        %1529 = vmatpush1.xpose.msra.mxu0 0.0
        %1530 = vmatprep.subr.mxu0 0.0
        %1531 = vmatpush1.xpose.msra.mxu0 0.0
        %1532 = vmatprep.subr.mxu0 0.0
        %1533 = vmatpush1.xpose.msra.mxu0 0.0
        %1534 = vmatprep.subr.mxu0 0.0
        %1535 = vmatpush1.xpose.msra.mxu0 0.0
        %1536 = vmatprep.subr.mxu0 0.0
        %1537 = vmatpush1.xpose.msra.mxu0 0.0
        %1538 = vmatprep.subr.mxu0 0.0
        %1539 = vmatpush1.xpose.msra.mxu0 0.0
        %1540 = vmatprep.subr.mxu0 0.0
        %1541 = vmatpush1.xpose.msra.mxu0 0.0
        %1542 = vmatprep.subr.mxu0 0.0
        %1543 = vmatpush1.xpose.msra.mxu0 0.0
        %1544 = vmatprep.subr.mxu0 0.0
        %1545 = vmatpush1.xpose.msra.mxu0 0.0
        %1546 = vmatprep.subr.mxu0 0.0
        %1547 = vmatpush1.xpose.msra.mxu0 0.0
        %1548 = vmatprep.subr.mxu0 0.0
        %1549 = vmatpush1.xpose.msra.mxu0 0.0
        %1550 = vmatprep.subr.mxu0 0.0
        %1551 = vmatpush1.xpose.msra.mxu0 0.0
        %1552 = vmatprep.subr.mxu0 0.0
        %1553 = vmatpush1.xpose.msra.mxu0 0.0
        %1554 = vmatprep.subr.mxu0 0.0
        %1555 = vmatpush1.xpose.msra.mxu0 0.0
        %1556 = vmatprep.subr.mxu0 0.0
        %1557 = vmatpush1.xpose.msra.mxu0 0.0
        %1558 = vmatprep.subr.mxu0 0.0
        %1559 = vmatpush1.xpose.msra.mxu0 0.0
        %1560 = vmatprep.subr.mxu0 0.0
        %1561 = vmatpush1.xpose.msra.mxu0 0.0
        %1562 = vmatprep.subr.mxu0 0.0
        %1563 = vmatpush1.xpose.msra.mxu0 0.0
        %1564 = vmatprep.subr.mxu0 0.0
        %1565 = vmatpush1.xpose.msra.mxu0 0.0
        %1566 = vmatprep.mubr.f32.mxu0 0.0
        %1567 = vmatmul.mubr.f32.gmra.mrb[0].mxu0 %v1497
        %v1568 = vpop.f32.mrb[0].mxu0
        %v1569 = vadd.f32 %v1133, %v1568
        %v1570 = vpop.f32.mrb[0].mxu0
        %1571 = vdwg.mxu0
        %vm1572 = vcmask 64512
        %v1573 = vsel %vm1572, %v1493, -inf
        %1574 = vmax.xlane.f32.xlu0 %v1573
        %v1575 = vpop.xlane.xlu0 %1574
        %v1576 = vsel %vm1572, %v1569, -inf
        %1577 = vmax.xlane.f32.xlu0 %v1576
        %v1578 = vpop.xlane.xlu0 %1577
        %v1579 = vsub.f32 %v1493, %v1575
        %v1580 = vsub.f32 %v1569, %v1578
        %v1581 = vmul.f32 %v1579, 1.442695
        %v1582 = vpow.pop %v1581
        %v1583 = vmul.f32 %v1580, 1.442695
        %v1584 = vpow.pop %v1583
        %v1585 = vsel %vm1572, %v1582, 0.0
        %1586 = vadd.xlane.f32.xlu0 %v1585
        %v1587 = vpop.xlane.xlu0 %1586
        %v1588 = vsel %vm1572, %v1584, 0.0
        %1589 = vadd.xlane.f32.xlu0 %v1588
        %v1590 = vpop.xlane.xlu0 %1589
        %v1591 = vrcp.pop %v1587
        %v1592 = vrcp.pop %v1590
        %v1593 = vmul.f32 %v1582, %v1591
        %v1594 = vmul.f32 %v1584, %v1592
        %v1596 = vsel %vm1572, %v1593, 0
        %1598 = vmatprep.subr.mxu0 0.0
        %1599 = vmatpush1.msra.mxu0 %v1412
        %1600 = vmatprep.subr.mxu0 0.0
        %1601 = vmatpush1.msra.mxu0 0.0
        %1602 = vmatprep.subr.mxu0 0.0
        %1603 = vmatpush1.msra.mxu0 0.0
        %1604 = vmatprep.subr.mxu0 0.0
        %1605 = vmatpush1.msra.mxu0 0.0
        %1606 = vmatprep.subr.mxu0 0.0
        %1607 = vmatpush1.msra.mxu0 0.0
        %1608 = vmatprep.subr.mxu0 0.0
        %1609 = vmatpush1.msra.mxu0 0.0
        %1610 = vmatprep.subr.mxu0 0.0
        %1611 = vmatpush1.msra.mxu0 0.0
        %1612 = vmatprep.subr.mxu0 0.0
        %1613 = vmatpush1.msra.mxu0 0.0
        %1614 = vmatprep.subr.mxu0 0.0
        %1615 = vmatpush1.msra.mxu0 0.0
        %1616 = vmatprep.subr.mxu0 0.0
        %1617 = vmatpush1.msra.mxu0 0.0
        %1618 = vmatprep.subr.mxu0 0.0
        %1619 = vmatpush1.msra.mxu0 0.0
        %1620 = vmatprep.subr.mxu0 0.0
        %1621 = vmatpush1.msra.mxu0 0.0
        %1622 = vmatprep.subr.mxu0 0.0
        %1623 = vmatpush1.msra.mxu0 0.0
        %1624 = vmatprep.subr.mxu0 0.0
        %1625 = vmatpush1.msra.mxu0 0.0
        %1626 = vmatprep.subr.mxu0 0.0
        %1627 = vmatpush1.msra.mxu0 0.0
        %1628 = vmatprep.subr.mxu0 0.0
        %1629 = vmatpush1.msra.mxu0 0.0
        %1630 = vmatprep.subr.mxu0 0.0
        %1631 = vmatpush1.msra.mxu0 0.0
        %1632 = vmatprep.subr.mxu0 0.0
        %1633 = vmatpush1.msra.mxu0 0.0
        %1634 = vmatprep.subr.mxu0 0.0
        %1635 = vmatpush1.msra.mxu0 0.0
        %1636 = vmatprep.subr.mxu0 0.0
        %1637 = vmatpush1.msra.mxu0 0.0
        %1638 = vmatprep.subr.mxu0 0.0
        %1639 = vmatpush1.msra.mxu0 0.0
        %1640 = vmatprep.subr.mxu0 0.0
        %1641 = vmatpush1.msra.mxu0 0.0
        %1642 = vmatprep.subr.mxu0 0.0
        %1643 = vmatpush1.msra.mxu0 0.0
        %1644 = vmatprep.subr.mxu0 0.0
        %1645 = vmatpush1.msra.mxu0 0.0
        %1646 = vmatprep.subr.mxu0 0.0
        %1647 = vmatpush1.msra.mxu0 0.0
        %1648 = vmatprep.subr.mxu0 0.0
        %1649 = vmatpush1.msra.mxu0 0.0
        %1650 = vmatprep.subr.mxu0 0.0
        %1651 = vmatpush1.msra.mxu0 0.0
        %1652 = vmatprep.subr.mxu0 0.0
        %1653 = vmatpush1.msra.mxu0 0.0
        %1654 = vmatprep.subr.mxu0 0.0
        %1655 = vmatpush1.msra.mxu0 0.0
        %1656 = vmatprep.subr.mxu0 0.0
        %1657 = vmatpush1.msra.mxu0 0.0
        %1658 = vmatprep.subr.mxu0 0.0
        %1659 = vmatpush1.msra.mxu0 0.0
        %1660 = vmatprep.subr.mxu0 0.0
        %1661 = vmatpush1.msra.mxu0 0.0
        %1662 = vmatprep.mubr.f32.mxu0 0.0
        %1663 = vmatmul.mubr.f32.gmra.mrb[0].mxu0 %v1596
        %v1664 = vpop.f32.mrb[0].mxu0
        %v1665 = vadd.f32 0.0, %v1664
        %v1666 = vpop.f32.mrb[0].mxu0
        %1667 = vdwg.mxu0
        %v1669 = vsel %vm1572, %v1594, 0
        %1671 = vmatprep.subr.mxu0 0.0
        %1672 = vmatpush1.msra.mxu0 %v1417
        %1673 = vmatprep.subr.mxu0 0.0
        %1674 = vmatpush1.msra.mxu0 0.0
        %1675 = vmatprep.subr.mxu0 0.0
        %1676 = vmatpush1.msra.mxu0 0.0
        %1677 = vmatprep.subr.mxu0 0.0
        %1678 = vmatpush1.msra.mxu0 0.0
        %1679 = vmatprep.subr.mxu0 0.0
        %1680 = vmatpush1.msra.mxu0 0.0
        %1681 = vmatprep.subr.mxu0 0.0
        %1682 = vmatpush1.msra.mxu0 0.0
        %1683 = vmatprep.subr.mxu0 0.0
        %1684 = vmatpush1.msra.mxu0 0.0
        %1685 = vmatprep.subr.mxu0 0.0
        %1686 = vmatpush1.msra.mxu0 0.0
        %1687 = vmatprep.subr.mxu0 0.0
        %1688 = vmatpush1.msra.mxu0 0.0
        %1689 = vmatprep.subr.mxu0 0.0
        %1690 = vmatpush1.msra.mxu0 0.0
        %1691 = vmatprep.subr.mxu0 0.0
        %1692 = vmatpush1.msra.mxu0 0.0
        %1693 = vmatprep.subr.mxu0 0.0
        %1694 = vmatpush1.msra.mxu0 0.0
        %1695 = vmatprep.subr.mxu0 0.0
        %1696 = vmatpush1.msra.mxu0 0.0
        %1697 = vmatprep.subr.mxu0 0.0
        %1698 = vmatpush1.msra.mxu0 0.0
        %1699 = vmatprep.subr.mxu0 0.0
        %1700 = vmatpush1.msra.mxu0 0.0
        %1701 = vmatprep.subr.mxu0 0.0
        %1702 = vmatpush1.msra.mxu0 0.0
        %1703 = vmatprep.subr.mxu0 0.0
        %1704 = vmatpush1.msra.mxu0 0.0
        %1705 = vmatprep.subr.mxu0 0.0
        %1706 = vmatpush1.msra.mxu0 0.0
        %1707 = vmatprep.subr.mxu0 0.0
        %1708 = vmatpush1.msra.mxu0 0.0
        %1709 = vmatprep.subr.mxu0 0.0
        %1710 = vmatpush1.msra.mxu0 0.0
        %1711 = vmatprep.subr.mxu0 0.0
        %1712 = vmatpush1.msra.mxu0 0.0
        %1713 = vmatprep.subr.mxu0 0.0
        %1714 = vmatpush1.msra.mxu0 0.0
        %1715 = vmatprep.subr.mxu0 0.0
        %1716 = vmatpush1.msra.mxu0 0.0
        %1717 = vmatprep.subr.mxu0 0.0
        %1718 = vmatpush1.msra.mxu0 0.0
        %1719 = vmatprep.subr.mxu0 0.0
        %1720 = vmatpush1.msra.mxu0 0.0
        %1721 = vmatprep.subr.mxu0 0.0
        %1722 = vmatpush1.msra.mxu0 0.0
        %1723 = vmatprep.subr.mxu0 0.0
        %1724 = vmatpush1.msra.mxu0 0.0
        %1725 = vmatprep.subr.mxu0 0.0
        %1726 = vmatpush1.msra.mxu0 0.0
        %1727 = vmatprep.subr.mxu0 0.0
        %1728 = vmatpush1.msra.mxu0 0.0
        %1729 = vmatprep.subr.mxu0 0.0
        %1730 = vmatpush1.msra.mxu0 0.0
        %1731 = vmatprep.subr.mxu0 0.0
        %1732 = vmatpush1.msra.mxu0 0.0
        %1733 = vmatprep.subr.mxu0 0.0
        %1734 = vmatpush1.msra.mxu0 0.0
        %1735 = vmatprep.mubr.f32.mxu0 0.0
        %1736 = vmatmul.mubr.f32.gmra.mrb[0].mxu0 %v1669
        %v1737 = vpop.f32.mrb[0].mxu0
        %v1738 = vadd.f32 0.0, %v1737
        %v1739 = vpop.f32.mrb[0].mxu0
        %1740 = vdwg.mxu0
        %v1741 = vld [vmem:[%s752] sm:$0xff]
        %v1742 = vld [vmem:[%s752 + $0x8] sm:$0xff]
        %v1743 = vld [vmem:[%s752 + $0x10] sm:$0xff]
        %v1744 = vld [vmem:[%s752 + $0x18] sm:$0xff]
        %s1745 = scalar_lea.vmem %s725, 32
        %v1746 = vld [vmem:[%s1745] sm:$0xff]
        %v1747 = vld [vmem:[%s1745 + $0x8] sm:$0xff]
        %v1748 = vld [vmem:[%s1745 + $0x10] sm:$0xff]
        %v1749 = vld [vmem:[%s1745 + $0x18] sm:$0xff]
        %s1750 = scalar_lea.vmem %s739, 1
        %v1751 = vld [vmem:[%s1750] sm:$0x1]
        %v1753 = vlaneseq
        %v1754 = vshrl.u32 %v1753, 7
        %v1755 = vsub.s32 0, %v1754
        %v1756 = vrot.slane %v1751, %v1755
        %1758 = vmatprep.subr.mxu0 0.0
        %1759 = vmatpush1.msra.mxu0 %v1746
        %1760 = vmatprep.subr.mxu0 0.0
        %1761 = vmatpush1.msra.mxu0 %v1747
        %1762 = vmatprep.subr.mxu0 0.0
        %1763 = vmatpush1.msra.mxu0 %v1748
        %1764 = vmatprep.subr.mxu0 0.0
        %1765 = vmatpush1.msra.mxu0 %v1749
        %1766 = vmatprep.subr.mxu0 0.0
        %1767 = vmatpush1.msra.mxu0 0.0
        %1768 = vmatprep.subr.mxu0 0.0
        %1769 = vmatpush1.msra.mxu0 0.0
        %1770 = vmatprep.subr.mxu0 0.0
        %1771 = vmatpush1.msra.mxu0 0.0
        %1772 = vmatprep.subr.mxu0 0.0
        %1773 = vmatpush1.msra.mxu0 0.0
        %1774 = vmatprep.subr.mxu0 0.0
        %1775 = vmatpush1.msra.mxu0 0.0
        %1776 = vmatprep.subr.mxu0 0.0
        %1777 = vmatpush1.msra.mxu0 0.0
        %1778 = vmatprep.subr.mxu0 0.0
        %1779 = vmatpush1.msra.mxu0 0.0
        %1780 = vmatprep.subr.mxu0 0.0
        %1781 = vmatpush1.msra.mxu0 0.0
        %1782 = vmatprep.subr.mxu0 0.0
        %1783 = vmatpush1.msra.mxu0 0.0
        %1784 = vmatprep.subr.mxu0 0.0
        %1785 = vmatpush1.msra.mxu0 0.0
        %1786 = vmatprep.subr.mxu0 0.0
        %1787 = vmatpush1.msra.mxu0 0.0
        %1788 = vmatprep.subr.mxu0 0.0
        %1789 = vmatpush1.msra.mxu0 0.0
        %1790 = vmatprep.subr.mxu0 0.0
        %1791 = vmatpush1.msra.mxu0 0.0
        %1792 = vmatprep.subr.mxu0 0.0
        %1793 = vmatpush1.msra.mxu0 0.0
        %1794 = vmatprep.subr.mxu0 0.0
        %1795 = vmatpush1.msra.mxu0 0.0
        %1796 = vmatprep.subr.mxu0 0.0
        %1797 = vmatpush1.msra.mxu0 0.0
        %1798 = vmatprep.subr.mxu0 0.0
        %1799 = vmatpush1.msra.mxu0 0.0
        %1800 = vmatprep.subr.mxu0 0.0
        %1801 = vmatpush1.msra.mxu0 0.0
        %1802 = vmatprep.subr.mxu0 0.0
        %1803 = vmatpush1.msra.mxu0 0.0
        %1804 = vmatprep.subr.mxu0 0.0
        %1805 = vmatpush1.msra.mxu0 0.0
        %1806 = vmatprep.subr.mxu0 0.0
        %1807 = vmatpush1.msra.mxu0 0.0
        %1808 = vmatprep.subr.mxu0 0.0
        %1809 = vmatpush1.msra.mxu0 0.0
        %1810 = vmatprep.subr.mxu0 0.0
        %1811 = vmatpush1.msra.mxu0 0.0
        %1812 = vmatprep.subr.mxu0 0.0
        %1813 = vmatpush1.msra.mxu0 0.0
        %1814 = vmatprep.subr.mxu0 0.0
        %1815 = vmatpush1.msra.mxu0 0.0
        %1816 = vmatprep.subr.mxu0 0.0
        %1817 = vmatpush1.msra.mxu0 0.0
        %1818 = vmatprep.subr.mxu0 0.0
        %1819 = vmatpush1.msra.mxu0 0.0
        %1820 = vmatprep.subr.mxu0 0.0
        %1821 = vmatpush1.msra.mxu0 0.0
        %1822 = vmatprep.mubr.f32.mxu0 0.0
        %1823 = vmatmul.mubr.f32.gmra.mrb[0].mxu0 %v1168
        %v1824 = vpop.f32.mrb[0].mxu0
        %v1825 = vadd.f32 %v1756, %v1824
        %v1826 = vpop.f32.mrb[0].mxu0
        %1827 = vmatprep.mubr.f32.mxu0 0.0
        %1828 = vmatmul.mubr.f32.gmra.mrb[0].mxu0 %v1171
        %v1829 = vpop.f32.mrb[0].mxu0
        %v1830 = vadd.f32 %v1756, %v1829
        %v1831 = vpop.f32.mrb[0].mxu0
        %1832 = vdwg.mxu0
        %s1833 = scalar_lea.vmem %s730, 32
        %v1834 = vld [vmem:[%s1833] sm:$0xff]
        %v1835 = vld [vmem:[%s1833 + $0x8] sm:$0xff]
        %v1836 = vld [vmem:[%s1833 + $0x10] sm:$0xff]
        %v1837 = vld [vmem:[%s1833 + $0x18] sm:$0xff]
        %s1838 = scalar_lea.vmem %s743, 1
        %v1839 = vld [vmem:[%s1838] sm:$0x1]
        %v1841 = vlaneseq
        %v1842 = vshrl.u32 %v1841, 7
        %v1843 = vsub.s32 0, %v1842
        %v1844 = vrot.slane %v1839, %v1843
        %1846 = vmatprep.subr.mxu0 0.0
        %1847 = vmatpush1.msra.mxu0 %v1834
        %1848 = vmatprep.subr.mxu0 0.0
        %1849 = vmatpush1.msra.mxu0 %v1835
        %1850 = vmatprep.subr.mxu0 0.0
        %1851 = vmatpush1.msra.mxu0 %v1836
        %1852 = vmatprep.subr.mxu0 0.0
        %1853 = vmatpush1.msra.mxu0 %v1837
        %1854 = vmatprep.subr.mxu0 0.0
        %1855 = vmatpush1.msra.mxu0 0.0
        %1856 = vmatprep.subr.mxu0 0.0
        %1857 = vmatpush1.msra.mxu0 0.0
        %1858 = vmatprep.subr.mxu0 0.0
        %1859 = vmatpush1.msra.mxu0 0.0
        %1860 = vmatprep.subr.mxu0 0.0
        %1861 = vmatpush1.msra.mxu0 0.0
        %1862 = vmatprep.subr.mxu0 0.0
        %1863 = vmatpush1.msra.mxu0 0.0
        %1864 = vmatprep.subr.mxu0 0.0
        %1865 = vmatpush1.msra.mxu0 0.0
        %1866 = vmatprep.subr.mxu0 0.0
        %1867 = vmatpush1.msra.mxu0 0.0
        %1868 = vmatprep.subr.mxu0 0.0
        %1869 = vmatpush1.msra.mxu0 0.0
        %1870 = vmatprep.subr.mxu0 0.0
        %1871 = vmatpush1.msra.mxu0 0.0
        %1872 = vmatprep.subr.mxu0 0.0
        %1873 = vmatpush1.msra.mxu0 0.0
        %1874 = vmatprep.subr.mxu0 0.0
        %1875 = vmatpush1.msra.mxu0 0.0
        %1876 = vmatprep.subr.mxu0 0.0
        %1877 = vmatpush1.msra.mxu0 0.0
        %1878 = vmatprep.subr.mxu0 0.0
        %1879 = vmatpush1.msra.mxu0 0.0
        %1880 = vmatprep.subr.mxu0 0.0
        %1881 = vmatpush1.msra.mxu0 0.0
        %1882 = vmatprep.subr.mxu0 0.0
        %1883 = vmatpush1.msra.mxu0 0.0
        %1884 = vmatprep.subr.mxu0 0.0
        %1885 = vmatpush1.msra.mxu0 0.0
        %1886 = vmatprep.subr.mxu0 0.0
        %1887 = vmatpush1.msra.mxu0 0.0
        %1888 = vmatprep.subr.mxu0 0.0
        %1889 = vmatpush1.msra.mxu0 0.0
        %1890 = vmatprep.subr.mxu0 0.0
        %1891 = vmatpush1.msra.mxu0 0.0
        %1892 = vmatprep.subr.mxu0 0.0
        %1893 = vmatpush1.msra.mxu0 0.0
        %1894 = vmatprep.subr.mxu0 0.0
        %1895 = vmatpush1.msra.mxu0 0.0
        %1896 = vmatprep.subr.mxu0 0.0
        %1897 = vmatpush1.msra.mxu0 0.0
        %1898 = vmatprep.subr.mxu0 0.0
        %1899 = vmatpush1.msra.mxu0 0.0
        %1900 = vmatprep.subr.mxu0 0.0
        %1901 = vmatpush1.msra.mxu0 0.0
        %1902 = vmatprep.subr.mxu0 0.0
        %1903 = vmatpush1.msra.mxu0 0.0
        %1904 = vmatprep.subr.mxu0 0.0
        %1905 = vmatpush1.msra.mxu0 0.0
        %1906 = vmatprep.subr.mxu0 0.0
        %1907 = vmatpush1.msra.mxu0 0.0
        %1908 = vmatprep.subr.mxu0 0.0
        %1909 = vmatpush1.msra.mxu0 0.0
        %1910 = vmatprep.mubr.f32.mxu0 0.0
        %1911 = vmatmul.mubr.f32.gmra.mrb[0].mxu0 %v1168
        %v1912 = vpop.f32.mrb[0].mxu0
        %v1913 = vadd.f32 %v1844, %v1912
        %v1914 = vpop.f32.mrb[0].mxu0
        %1915 = vmatprep.mubr.f32.mxu0 0.0
        %1916 = vmatmul.mubr.f32.gmra.mrb[0].mxu0 %v1171
        %v1917 = vpop.f32.mrb[0].mxu0
        %v1918 = vadd.f32 %v1844, %v1917
        %v1919 = vpop.f32.mrb[0].mxu0
        %1920 = vdwg.mxu0
        %s1921 = scalar_lea.vmem %s735, 32
        %v1922 = vld [vmem:[%s1921] sm:$0xff]
        %v1923 = vld [vmem:[%s1921 + $0x8] sm:$0xff]
        %v1924 = vld [vmem:[%s1921 + $0x10] sm:$0xff]
        %v1925 = vld [vmem:[%s1921 + $0x18] sm:$0xff]
        %s1926 = scalar_lea.vmem %s747, 1
        %v1927 = vld [vmem:[%s1926] sm:$0x1]
        %v1929 = vlaneseq
        %v1930 = vshrl.u32 %v1929, 7
        %v1931 = vsub.s32 0, %v1930
        %v1932 = vrot.slane %v1927, %v1931
        %1934 = vmatprep.subr.mxu0 0.0
        %1935 = vmatpush1.msra.mxu0 %v1922
        %1936 = vmatprep.subr.mxu0 0.0
        %1937 = vmatpush1.msra.mxu0 %v1923
        %1938 = vmatprep.subr.mxu0 0.0
        %1939 = vmatpush1.msra.mxu0 %v1924
        %1940 = vmatprep.subr.mxu0 0.0
        %1941 = vmatpush1.msra.mxu0 %v1925
        %1942 = vmatprep.subr.mxu0 0.0
        %1943 = vmatpush1.msra.mxu0 0.0
        %1944 = vmatprep.subr.mxu0 0.0
        %1945 = vmatpush1.msra.mxu0 0.0
        %1946 = vmatprep.subr.mxu0 0.0
        %1947 = vmatpush1.msra.mxu0 0.0
        %1948 = vmatprep.subr.mxu0 0.0
        %1949 = vmatpush1.msra.mxu0 0.0
        %1950 = vmatprep.subr.mxu0 0.0
        %1951 = vmatpush1.msra.mxu0 0.0
        %1952 = vmatprep.subr.mxu0 0.0
        %1953 = vmatpush1.msra.mxu0 0.0
        %1954 = vmatprep.subr.mxu0 0.0
        %1955 = vmatpush1.msra.mxu0 0.0
        %1956 = vmatprep.subr.mxu0 0.0
        %1957 = vmatpush1.msra.mxu0 0.0
        %1958 = vmatprep.subr.mxu0 0.0
        %1959 = vmatpush1.msra.mxu0 0.0
        %1960 = vmatprep.subr.mxu0 0.0
        %1961 = vmatpush1.msra.mxu0 0.0
        %1962 = vmatprep.subr.mxu0 0.0
        %1963 = vmatpush1.msra.mxu0 0.0
        %1964 = vmatprep.subr.mxu0 0.0
        %1965 = vmatpush1.msra.mxu0 0.0
        %1966 = vmatprep.subr.mxu0 0.0
        %1967 = vmatpush1.msra.mxu0 0.0
        %1968 = vmatprep.subr.mxu0 0.0
        %1969 = vmatpush1.msra.mxu0 0.0
        %1970 = vmatprep.subr.mxu0 0.0
        %1971 = vmatpush1.msra.mxu0 0.0
        %1972 = vmatprep.subr.mxu0 0.0
        %1973 = vmatpush1.msra.mxu0 0.0
        %1974 = vmatprep.subr.mxu0 0.0
        %1975 = vmatpush1.msra.mxu0 0.0
        %1976 = vmatprep.subr.mxu0 0.0
        %1977 = vmatpush1.msra.mxu0 0.0
        %1978 = vmatprep.subr.mxu0 0.0
        %1979 = vmatpush1.msra.mxu0 0.0
        %1980 = vmatprep.subr.mxu0 0.0
        %1981 = vmatpush1.msra.mxu0 0.0
        %1982 = vmatprep.subr.mxu0 0.0
        %1983 = vmatpush1.msra.mxu0 0.0
        %1984 = vmatprep.subr.mxu0 0.0
        %1985 = vmatpush1.msra.mxu0 0.0
        %1986 = vmatprep.subr.mxu0 0.0
        %1987 = vmatpush1.msra.mxu0 0.0
        %1988 = vmatprep.subr.mxu0 0.0
        %1989 = vmatpush1.msra.mxu0 0.0
        %1990 = vmatprep.subr.mxu0 0.0
        %1991 = vmatpush1.msra.mxu0 0.0
        %1992 = vmatprep.subr.mxu0 0.0
        %1993 = vmatpush1.msra.mxu0 0.0
        %1994 = vmatprep.subr.mxu0 0.0
        %1995 = vmatpush1.msra.mxu0 0.0
        %1996 = vmatprep.subr.mxu0 0.0
        %1997 = vmatpush1.msra.mxu0 0.0
        %1998 = vmatprep.mubr.f32.mxu0 0.0
        %1999 = vmatmul.mubr.f32.gmra.mrb[0].mxu0 %v1168
        %v2000 = vpop.f32.mrb[0].mxu0
        %v2001 = vadd.f32 %v1932, %v2000
        %v2002 = vpop.f32.mrb[0].mxu0
        %2003 = vmatprep.mubr.f32.mxu0 0.0
        %2004 = vmatmul.mubr.f32.gmra.mrb[0].mxu0 %v1171
        %v2005 = vpop.f32.mrb[0].mxu0
        %v2006 = vadd.f32 %v1932, %v2005
        %v2007 = vpop.f32.mrb[0].mxu0
        %2008 = vdwg.mxu0
        %v2010 = vsel %vm1166, %v1825, 0
        %v2013 = vsel %vm1166, %v1913, 0
        %2015 = vmatprep.subr.mxu0 0.0
        %2016 = vmatpush1.xpose.msra.mxu0 %v2013
        %2017 = vmatprep.subr.mxu0 0.0
        %2018 = vmatpush1.xpose.msra.mxu0 0.0
        %2019 = vmatprep.subr.mxu0 0.0
        %2020 = vmatpush1.xpose.msra.mxu0 0.0
        %2021 = vmatprep.subr.mxu0 0.0
        %2022 = vmatpush1.xpose.msra.mxu0 0.0
        %2023 = vmatprep.subr.mxu0 0.0
        %2024 = vmatpush1.xpose.msra.mxu0 0.0
        %2025 = vmatprep.subr.mxu0 0.0
        %2026 = vmatpush1.xpose.msra.mxu0 0.0
        %2027 = vmatprep.subr.mxu0 0.0
        %2028 = vmatpush1.xpose.msra.mxu0 0.0
        %2029 = vmatprep.subr.mxu0 0.0
        %2030 = vmatpush1.xpose.msra.mxu0 0.0
        %2031 = vmatprep.subr.mxu0 0.0
        %2032 = vmatpush1.xpose.msra.mxu0 0.0
        %2033 = vmatprep.subr.mxu0 0.0
        %2034 = vmatpush1.xpose.msra.mxu0 0.0
        %2035 = vmatprep.subr.mxu0 0.0
        %2036 = vmatpush1.xpose.msra.mxu0 0.0
        %2037 = vmatprep.subr.mxu0 0.0
        %2038 = vmatpush1.xpose.msra.mxu0 0.0
        %2039 = vmatprep.subr.mxu0 0.0
        %2040 = vmatpush1.xpose.msra.mxu0 0.0
        %2041 = vmatprep.subr.mxu0 0.0
        %2042 = vmatpush1.xpose.msra.mxu0 0.0
        %2043 = vmatprep.subr.mxu0 0.0
        %2044 = vmatpush1.xpose.msra.mxu0 0.0
        %2045 = vmatprep.subr.mxu0 0.0
        %2046 = vmatpush1.xpose.msra.mxu0 0.0
        %2047 = vmatprep.subr.mxu0 0.0
        %2048 = vmatpush1.xpose.msra.mxu0 0.0
        %2049 = vmatprep.subr.mxu0 0.0
        %2050 = vmatpush1.xpose.msra.mxu0 0.0
        %2051 = vmatprep.subr.mxu0 0.0
        %2052 = vmatpush1.xpose.msra.mxu0 0.0
        %2053 = vmatprep.subr.mxu0 0.0
        %2054 = vmatpush1.xpose.msra.mxu0 0.0
        %2055 = vmatprep.subr.mxu0 0.0
        %2056 = vmatpush1.xpose.msra.mxu0 0.0
        %2057 = vmatprep.subr.mxu0 0.0
        %2058 = vmatpush1.xpose.msra.mxu0 0.0
        %2059 = vmatprep.subr.mxu0 0.0
        %2060 = vmatpush1.xpose.msra.mxu0 0.0
        %2061 = vmatprep.subr.mxu0 0.0
        %2062 = vmatpush1.xpose.msra.mxu0 0.0
        %2063 = vmatprep.subr.mxu0 0.0
        %2064 = vmatpush1.xpose.msra.mxu0 0.0
        %2065 = vmatprep.subr.mxu0 0.0
        %2066 = vmatpush1.xpose.msra.mxu0 0.0
        %2067 = vmatprep.subr.mxu0 0.0
        %2068 = vmatpush1.xpose.msra.mxu0 0.0
        %2069 = vmatprep.subr.mxu0 0.0
        %2070 = vmatpush1.xpose.msra.mxu0 0.0
        %2071 = vmatprep.subr.mxu0 0.0
        %2072 = vmatpush1.xpose.msra.mxu0 0.0
        %2073 = vmatprep.subr.mxu0 0.0
        %2074 = vmatpush1.xpose.msra.mxu0 0.0
        %2075 = vmatprep.subr.mxu0 0.0
        %2076 = vmatpush1.xpose.msra.mxu0 0.0
        %2077 = vmatprep.subr.mxu0 0.0
        %2078 = vmatpush1.xpose.msra.mxu0 0.0
        %2079 = vmatprep.mubr.f32.mxu0 0.0
        %2080 = vmatmul.mubr.f32.gmra.mrb[0].mxu0 %v2010
        %v2081 = vpop.f32.mrb[0].mxu0
        %v2082 = vadd.f32 %v1132, %v2081
        %v2083 = vpop.f32.mrb[0].mxu0
        %2084 = vdwg.mxu0
        %v2086 = vsel %vm1166, %v1830, 0
        %v2089 = vsel %vm1166, %v1918, 0
        %2091 = vmatprep.subr.mxu0 0.0
        %2092 = vmatpush1.xpose.msra.mxu0 %v2089
        %2093 = vmatprep.subr.mxu0 0.0
        %2094 = vmatpush1.xpose.msra.mxu0 0.0
        %2095 = vmatprep.subr.mxu0 0.0
        %2096 = vmatpush1.xpose.msra.mxu0 0.0
        %2097 = vmatprep.subr.mxu0 0.0
        %2098 = vmatpush1.xpose.msra.mxu0 0.0
        %2099 = vmatprep.subr.mxu0 0.0
        %2100 = vmatpush1.xpose.msra.mxu0 0.0
        %2101 = vmatprep.subr.mxu0 0.0
        %2102 = vmatpush1.xpose.msra.mxu0 0.0
        %2103 = vmatprep.subr.mxu0 0.0
        %2104 = vmatpush1.xpose.msra.mxu0 0.0
        %2105 = vmatprep.subr.mxu0 0.0
        %2106 = vmatpush1.xpose.msra.mxu0 0.0
        %2107 = vmatprep.subr.mxu0 0.0
        %2108 = vmatpush1.xpose.msra.mxu0 0.0
        %2109 = vmatprep.subr.mxu0 0.0
        %2110 = vmatpush1.xpose.msra.mxu0 0.0
        %2111 = vmatprep.subr.mxu0 0.0
        %2112 = vmatpush1.xpose.msra.mxu0 0.0
        %2113 = vmatprep.subr.mxu0 0.0
        %2114 = vmatpush1.xpose.msra.mxu0 0.0
        %2115 = vmatprep.subr.mxu0 0.0
        %2116 = vmatpush1.xpose.msra.mxu0 0.0
        %2117 = vmatprep.subr.mxu0 0.0
        %2118 = vmatpush1.xpose.msra.mxu0 0.0
        %2119 = vmatprep.subr.mxu0 0.0
        %2120 = vmatpush1.xpose.msra.mxu0 0.0
        %2121 = vmatprep.subr.mxu0 0.0
        %2122 = vmatpush1.xpose.msra.mxu0 0.0
        %2123 = vmatprep.subr.mxu0 0.0
        %2124 = vmatpush1.xpose.msra.mxu0 0.0
        %2125 = vmatprep.subr.mxu0 0.0
        %2126 = vmatpush1.xpose.msra.mxu0 0.0
        %2127 = vmatprep.subr.mxu0 0.0
        %2128 = vmatpush1.xpose.msra.mxu0 0.0
        %2129 = vmatprep.subr.mxu0 0.0
        %2130 = vmatpush1.xpose.msra.mxu0 0.0
        %2131 = vmatprep.subr.mxu0 0.0
        %2132 = vmatpush1.xpose.msra.mxu0 0.0
        %2133 = vmatprep.subr.mxu0 0.0
        %2134 = vmatpush1.xpose.msra.mxu0 0.0
        %2135 = vmatprep.subr.mxu0 0.0
        %2136 = vmatpush1.xpose.msra.mxu0 0.0
        %2137 = vmatprep.subr.mxu0 0.0
        %2138 = vmatpush1.xpose.msra.mxu0 0.0
        %2139 = vmatprep.subr.mxu0 0.0
        %2140 = vmatpush1.xpose.msra.mxu0 0.0
        %2141 = vmatprep.subr.mxu0 0.0
        %2142 = vmatpush1.xpose.msra.mxu0 0.0
        %2143 = vmatprep.subr.mxu0 0.0
        %2144 = vmatpush1.xpose.msra.mxu0 0.0
        %2145 = vmatprep.subr.mxu0 0.0
        %2146 = vmatpush1.xpose.msra.mxu0 0.0
        %2147 = vmatprep.subr.mxu0 0.0
        %2148 = vmatpush1.xpose.msra.mxu0 0.0
        %2149 = vmatprep.subr.mxu0 0.0
        %2150 = vmatpush1.xpose.msra.mxu0 0.0
        %2151 = vmatprep.subr.mxu0 0.0
        %2152 = vmatpush1.xpose.msra.mxu0 0.0
        %2153 = vmatprep.subr.mxu0 0.0
        %2154 = vmatpush1.xpose.msra.mxu0 0.0
        %2155 = vmatprep.mubr.f32.mxu0 0.0
        %2156 = vmatmul.mubr.f32.gmra.mrb[0].mxu0 %v2086
        %v2157 = vpop.f32.mrb[0].mxu0
        %v2158 = vadd.f32 %v1133, %v2157
        %v2159 = vpop.f32.mrb[0].mxu0
        %2160 = vdwg.mxu0
        %v2161 = vsel %vm1572, %v2082, -inf
        %2162 = vmax.xlane.f32.xlu0 %v2161
        %v2163 = vpop.xlane.xlu0 %2162
        %v2164 = vsel %vm1572, %v2158, -inf
        %2165 = vmax.xlane.f32.xlu0 %v2164
        %v2166 = vpop.xlane.xlu0 %2165
        %v2167 = vsub.f32 %v2082, %v2163
        %v2168 = vsub.f32 %v2158, %v2166
        %v2169 = vmul.f32 %v2167, 1.442695
        %v2170 = vpow.pop %v2169
        %v2171 = vmul.f32 %v2168, 1.442695
        %v2172 = vpow.pop %v2171
        %v2173 = vsel %vm1572, %v2170, 0.0
        %2174 = vadd.xlane.f32.xlu0 %v2173
        %v2175 = vpop.xlane.xlu0 %2174
        %v2176 = vsel %vm1572, %v2172, 0.0
        %2177 = vadd.xlane.f32.xlu0 %v2176
        %v2178 = vpop.xlane.xlu0 %2177
        %v2179 = vrcp.pop %v2175
        %v2180 = vrcp.pop %v2178
        %v2181 = vmul.f32 %v2170, %v2179
        %v2182 = vmul.f32 %v2172, %v2180
        %v2184 = vsel %vm1572, %v2181, 0
        %2186 = vmatprep.subr.mxu0 0.0
        %2187 = vmatpush1.msra.mxu0 %v2001
        %2188 = vmatprep.subr.mxu0 0.0
        %2189 = vmatpush1.msra.mxu0 0.0
        %2190 = vmatprep.subr.mxu0 0.0
        %2191 = vmatpush1.msra.mxu0 0.0
        %2192 = vmatprep.subr.mxu0 0.0
        %2193 = vmatpush1.msra.mxu0 0.0
        %2194 = vmatprep.subr.mxu0 0.0
        %2195 = vmatpush1.msra.mxu0 0.0
        %2196 = vmatprep.subr.mxu0 0.0
        %2197 = vmatpush1.msra.mxu0 0.0
        %2198 = vmatprep.subr.mxu0 0.0
        %2199 = vmatpush1.msra.mxu0 0.0
        %2200 = vmatprep.subr.mxu0 0.0
        %2201 = vmatpush1.msra.mxu0 0.0
        %2202 = vmatprep.subr.mxu0 0.0
        %2203 = vmatpush1.msra.mxu0 0.0
        %2204 = vmatprep.subr.mxu0 0.0
        %2205 = vmatpush1.msra.mxu0 0.0
        %2206 = vmatprep.subr.mxu0 0.0
        %2207 = vmatpush1.msra.mxu0 0.0
        %2208 = vmatprep.subr.mxu0 0.0
        %2209 = vmatpush1.msra.mxu0 0.0
        %2210 = vmatprep.subr.mxu0 0.0
        %2211 = vmatpush1.msra.mxu0 0.0
        %2212 = vmatprep.subr.mxu0 0.0
        %2213 = vmatpush1.msra.mxu0 0.0
        %2214 = vmatprep.subr.mxu0 0.0
        %2215 = vmatpush1.msra.mxu0 0.0
        %2216 = vmatprep.subr.mxu0 0.0
        %2217 = vmatpush1.msra.mxu0 0.0
        %2218 = vmatprep.subr.mxu0 0.0
        %2219 = vmatpush1.msra.mxu0 0.0
        %2220 = vmatprep.subr.mxu0 0.0
        %2221 = vmatpush1.msra.mxu0 0.0
        %2222 = vmatprep.subr.mxu0 0.0
        %2223 = vmatpush1.msra.mxu0 0.0
        %2224 = vmatprep.subr.mxu0 0.0
        %2225 = vmatpush1.msra.mxu0 0.0
        %2226 = vmatprep.subr.mxu0 0.0
        %2227 = vmatpush1.msra.mxu0 0.0
        %2228 = vmatprep.subr.mxu0 0.0
        %2229 = vmatpush1.msra.mxu0 0.0
        %2230 = vmatprep.subr.mxu0 0.0
        %2231 = vmatpush1.msra.mxu0 0.0
        %2232 = vmatprep.subr.mxu0 0.0
        %2233 = vmatpush1.msra.mxu0 0.0
        %2234 = vmatprep.subr.mxu0 0.0
        %2235 = vmatpush1.msra.mxu0 0.0
        %2236 = vmatprep.subr.mxu0 0.0
        %2237 = vmatpush1.msra.mxu0 0.0
        %2238 = vmatprep.subr.mxu0 0.0
        %2239 = vmatpush1.msra.mxu0 0.0
        %2240 = vmatprep.subr.mxu0 0.0
        %2241 = vmatpush1.msra.mxu0 0.0
        %2242 = vmatprep.subr.mxu0 0.0
        %2243 = vmatpush1.msra.mxu0 0.0
        %2244 = vmatprep.subr.mxu0 0.0
        %2245 = vmatpush1.msra.mxu0 0.0
        %2246 = vmatprep.subr.mxu0 0.0
        %2247 = vmatpush1.msra.mxu0 0.0
        %2248 = vmatprep.subr.mxu0 0.0
        %2249 = vmatpush1.msra.mxu0 0.0
        %2250 = vmatprep.mubr.f32.mxu0 0.0
        %2251 = vmatmul.mubr.f32.gmra.mrb[0].mxu0 %v2184
        %v2252 = vpop.f32.mrb[0].mxu0
        %v2253 = vadd.f32 0.0, %v2252
        %v2254 = vpop.f32.mrb[0].mxu0
        %2255 = vdwg.mxu0
        %v2257 = vsel %vm1572, %v2182, 0
        %2259 = vmatprep.subr.mxu0 0.0
        %2260 = vmatpush1.msra.mxu0 %v2006
        %2261 = vmatprep.subr.mxu0 0.0
        %2262 = vmatpush1.msra.mxu0 0.0
        %2263 = vmatprep.subr.mxu0 0.0
        %2264 = vmatpush1.msra.mxu0 0.0
        %2265 = vmatprep.subr.mxu0 0.0
        %2266 = vmatpush1.msra.mxu0 0.0
        %2267 = vmatprep.subr.mxu0 0.0
        %2268 = vmatpush1.msra.mxu0 0.0
        %2269 = vmatprep.subr.mxu0 0.0
        %2270 = vmatpush1.msra.mxu0 0.0
        %2271 = vmatprep.subr.mxu0 0.0
        %2272 = vmatpush1.msra.mxu0 0.0
        %2273 = vmatprep.subr.mxu0 0.0
        %2274 = vmatpush1.msra.mxu0 0.0
        %2275 = vmatprep.subr.mxu0 0.0
        %2276 = vmatpush1.msra.mxu0 0.0
        %2277 = vmatprep.subr.mxu0 0.0
        %2278 = vmatpush1.msra.mxu0 0.0
        %2279 = vmatprep.subr.mxu0 0.0
        %2280 = vmatpush1.msra.mxu0 0.0
        %2281 = vmatprep.subr.mxu0 0.0
        %2282 = vmatpush1.msra.mxu0 0.0
        %2283 = vmatprep.subr.mxu0 0.0
        %2284 = vmatpush1.msra.mxu0 0.0
        %2285 = vmatprep.subr.mxu0 0.0
        %2286 = vmatpush1.msra.mxu0 0.0
        %2287 = vmatprep.subr.mxu0 0.0
        %2288 = vmatpush1.msra.mxu0 0.0
        %2289 = vmatprep.subr.mxu0 0.0
        %2290 = vmatpush1.msra.mxu0 0.0
        %2291 = vmatprep.subr.mxu0 0.0
        %2292 = vmatpush1.msra.mxu0 0.0
        %2293 = vmatprep.subr.mxu0 0.0
        %2294 = vmatpush1.msra.mxu0 0.0
        %2295 = vmatprep.subr.mxu0 0.0
        %2296 = vmatpush1.msra.mxu0 0.0
        %2297 = vmatprep.subr.mxu0 0.0
        %2298 = vmatpush1.msra.mxu0 0.0
        %2299 = vmatprep.subr.mxu0 0.0
        %2300 = vmatpush1.msra.mxu0 0.0
        %2301 = vmatprep.subr.mxu0 0.0
        %2302 = vmatpush1.msra.mxu0 0.0
        %2303 = vmatprep.subr.mxu0 0.0
        %2304 = vmatpush1.msra.mxu0 0.0
        %2305 = vmatprep.subr.mxu0 0.0
        %2306 = vmatpush1.msra.mxu0 0.0
        %2307 = vmatprep.subr.mxu0 0.0
        %2308 = vmatpush1.msra.mxu0 0.0
        %2309 = vmatprep.subr.mxu0 0.0
        %2310 = vmatpush1.msra.mxu0 0.0
        %2311 = vmatprep.subr.mxu0 0.0
        %2312 = vmatpush1.msra.mxu0 0.0
        %2313 = vmatprep.subr.mxu0 0.0
        %2314 = vmatpush1.msra.mxu0 0.0
        %2315 = vmatprep.subr.mxu0 0.0
        %2316 = vmatpush1.msra.mxu0 0.0
        %2317 = vmatprep.subr.mxu0 0.0
        %2318 = vmatpush1.msra.mxu0 0.0
        %2319 = vmatprep.subr.mxu0 0.0
        %2320 = vmatpush1.msra.mxu0 0.0
        %2321 = vmatprep.subr.mxu0 0.0
        %2322 = vmatpush1.msra.mxu0 0.0
        %2323 = vmatprep.mubr.f32.mxu0 0.0
        %2324 = vmatmul.mubr.f32.gmra.mrb[0].mxu0 %v2257
        %v2325 = vpop.f32.mrb[0].mxu0
        %v2326 = vadd.f32 0.0, %v2325
        %v2327 = vpop.f32.mrb[0].mxu0
        %2328 = vdwg.mxu0
        %s2329 = scalar_lea.vmem %s752, 32
        %v2330 = vld [vmem:[%s2329] sm:$0xff]
        %v2331 = vld [vmem:[%s2329 + $0x8] sm:$0xff]
        %v2332 = vld [vmem:[%s2329 + $0x10] sm:$0xff]
        %v2333 = vld [vmem:[%s2329 + $0x18] sm:$0xff]
        %v2335 = vsel %vm1166, %v2253, 0
        %v2338 = vsel %vm1166, %v2326, 0
        %2340 = vmatprep.subr.mxu0 0.0
        %2341 = vmatpush1.msra.mxu0 %v2330
        %2342 = vmatprep.subr.mxu0 0.0
        %2343 = vmatpush1.msra.mxu0 %v2331
        %2344 = vmatprep.subr.mxu0 0.0
        %2345 = vmatpush1.msra.mxu0 %v2332
        %2346 = vmatprep.subr.mxu0 0.0
        %2347 = vmatpush1.msra.mxu0 %v2333
        %2348 = vmatprep.subr.mxu0 0.0
        %2349 = vmatpush1.msra.mxu0 0.0
        %2350 = vmatprep.subr.mxu0 0.0
        %2351 = vmatpush1.msra.mxu0 0.0
        %2352 = vmatprep.subr.mxu0 0.0
        %2353 = vmatpush1.msra.mxu0 0.0
        %2354 = vmatprep.subr.mxu0 0.0
        %2355 = vmatpush1.msra.mxu0 0.0
        %2356 = vmatprep.subr.mxu0 0.0
        %2357 = vmatpush1.msra.mxu0 0.0
        %2358 = vmatprep.subr.mxu0 0.0
        %2359 = vmatpush1.msra.mxu0 0.0
        %2360 = vmatprep.subr.mxu0 0.0
        %2361 = vmatpush1.msra.mxu0 0.0
        %2362 = vmatprep.subr.mxu0 0.0
        %2363 = vmatpush1.msra.mxu0 0.0
        %2364 = vmatprep.subr.mxu0 0.0
        %2365 = vmatpush1.msra.mxu0 0.0
        %2366 = vmatprep.subr.mxu0 0.0
        %2367 = vmatpush1.msra.mxu0 0.0
        %2368 = vmatprep.subr.mxu0 0.0
        %2369 = vmatpush1.msra.mxu0 0.0
        %2370 = vmatprep.subr.mxu0 0.0
        %2371 = vmatpush1.msra.mxu0 0.0
        %2372 = vmatprep.subr.mxu0 0.0
        %2373 = vmatpush1.msra.mxu0 0.0
        %2374 = vmatprep.subr.mxu0 0.0
        %2375 = vmatpush1.msra.mxu0 0.0
        %2376 = vmatprep.subr.mxu0 0.0
        %2377 = vmatpush1.msra.mxu0 0.0
        %2378 = vmatprep.subr.mxu0 0.0
        %2379 = vmatpush1.msra.mxu0 0.0
        %2380 = vmatprep.subr.mxu0 0.0
        %2381 = vmatpush1.msra.mxu0 0.0
        %2382 = vmatprep.subr.mxu0 0.0
        %2383 = vmatpush1.msra.mxu0 0.0
        %2384 = vmatprep.subr.mxu0 0.0
        %2385 = vmatpush1.msra.mxu0 0.0
        %2386 = vmatprep.subr.mxu0 0.0
        %2387 = vmatpush1.msra.mxu0 0.0
        %2388 = vmatprep.subr.mxu0 0.0
        %2389 = vmatpush1.msra.mxu0 0.0
        %2390 = vmatprep.subr.mxu0 0.0
        %2391 = vmatpush1.msra.mxu0 0.0
        %2392 = vmatprep.subr.mxu0 0.0
        %2393 = vmatpush1.msra.mxu0 0.0
        %2394 = vmatprep.subr.mxu0 0.0
        %2395 = vmatpush1.msra.mxu0 0.0
        %2396 = vmatprep.subr.mxu0 0.0
        %2397 = vmatpush1.msra.mxu0 0.0
        %2398 = vmatprep.subr.mxu0 0.0
        %2399 = vmatpush1.msra.mxu0 0.0
        %2400 = vmatprep.subr.mxu0 0.0
        %2401 = vmatpush1.msra.mxu0 0.0
        %2402 = vmatprep.subr.mxu0 0.0
        %2403 = vmatpush1.msra.mxu0 0.0
        %2404 = vmatprep.mubr.f32.mxu0 0.0
        %2405 = vmatmul.mubr.f32.gmra.mrb[0].mxu0 %v2335
        %v2406 = vpop.f32.mrb[0].mxu0
        %v2407 = vadd.f32 0.0, %v2406
        %v2408 = vpop.f32.mrb[0].mxu0
        %2409 = vmatprep.mubr.f32.mxu0 0.0
        %2410 = vmatmul.mubr.f32.gmra.mrb[0].mxu0 %v2338
        %v2411 = vpop.f32.mrb[0].mxu0
        %v2412 = vadd.f32 0.0, %v2411
        %v2413 = vpop.f32.mrb[0].mxu0
        %2414 = vdwg.mxu0
        %v2416 = vsel %vm1166, %v1665, 0
        %v2419 = vsel %vm1166, %v1738, 0
        %2421 = vmatprep.subr.mxu0 0.0
        %2422 = vmatpush1.msra.mxu0 %v1741
        %2423 = vmatprep.subr.mxu0 0.0
        %2424 = vmatpush1.msra.mxu0 %v1742
        %2425 = vmatprep.subr.mxu0 0.0
        %2426 = vmatpush1.msra.mxu0 %v1743
        %2427 = vmatprep.subr.mxu0 0.0
        %2428 = vmatpush1.msra.mxu0 %v1744
        %2429 = vmatprep.subr.mxu0 0.0
        %2430 = vmatpush1.msra.mxu0 0.0
        %2431 = vmatprep.subr.mxu0 0.0
        %2432 = vmatpush1.msra.mxu0 0.0
        %2433 = vmatprep.subr.mxu0 0.0
        %2434 = vmatpush1.msra.mxu0 0.0
        %2435 = vmatprep.subr.mxu0 0.0
        %2436 = vmatpush1.msra.mxu0 0.0
        %2437 = vmatprep.subr.mxu0 0.0
        %2438 = vmatpush1.msra.mxu0 0.0
        %2439 = vmatprep.subr.mxu0 0.0
        %2440 = vmatpush1.msra.mxu0 0.0
        %2441 = vmatprep.subr.mxu0 0.0
        %2442 = vmatpush1.msra.mxu0 0.0
        %2443 = vmatprep.subr.mxu0 0.0
        %2444 = vmatpush1.msra.mxu0 0.0
        %2445 = vmatprep.subr.mxu0 0.0
        %2446 = vmatpush1.msra.mxu0 0.0
        %2447 = vmatprep.subr.mxu0 0.0
        %2448 = vmatpush1.msra.mxu0 0.0
        %2449 = vmatprep.subr.mxu0 0.0
        %2450 = vmatpush1.msra.mxu0 0.0
        %2451 = vmatprep.subr.mxu0 0.0
        %2452 = vmatpush1.msra.mxu0 0.0
        %2453 = vmatprep.subr.mxu0 0.0
        %2454 = vmatpush1.msra.mxu0 0.0
        %2455 = vmatprep.subr.mxu0 0.0
        %2456 = vmatpush1.msra.mxu0 0.0
        %2457 = vmatprep.subr.mxu0 0.0
        %2458 = vmatpush1.msra.mxu0 0.0
        %2459 = vmatprep.subr.mxu0 0.0
        %2460 = vmatpush1.msra.mxu0 0.0
        %2461 = vmatprep.subr.mxu0 0.0
        %2462 = vmatpush1.msra.mxu0 0.0
        %2463 = vmatprep.subr.mxu0 0.0
        %2464 = vmatpush1.msra.mxu0 0.0
        %2465 = vmatprep.subr.mxu0 0.0
        %2466 = vmatpush1.msra.mxu0 0.0
        %2467 = vmatprep.subr.mxu0 0.0
        %2468 = vmatpush1.msra.mxu0 0.0
        %2469 = vmatprep.subr.mxu0 0.0
        %2470 = vmatpush1.msra.mxu0 0.0
        %2471 = vmatprep.subr.mxu0 0.0
        %2472 = vmatpush1.msra.mxu0 0.0
        %2473 = vmatprep.subr.mxu0 0.0
        %2474 = vmatpush1.msra.mxu0 0.0
        %2475 = vmatprep.subr.mxu0 0.0
        %2476 = vmatpush1.msra.mxu0 0.0
        %2477 = vmatprep.subr.mxu0 0.0
        %2478 = vmatpush1.msra.mxu0 0.0
        %2479 = vmatprep.subr.mxu0 0.0
        %2480 = vmatpush1.msra.mxu0 0.0
        %2481 = vmatprep.subr.mxu0 0.0
        %2482 = vmatpush1.msra.mxu0 0.0
        %2483 = vmatprep.subr.mxu0 0.0
        %2484 = vmatpush1.msra.mxu0 0.0
        %2485 = vmatprep.mubr.f32.mxu0 0.0
        %2486 = vmatmul.mubr.f32.gmra.mrb[0].mxu0 %v2416
        %v2487 = vpop.f32.mrb[0].mxu0
        %v2488 = vadd.f32 %v2407, %v2487
        %v2489 = vpop.f32.mrb[0].mxu0
        %2490 = vmatprep.mubr.f32.mxu0 0.0
        %2491 = vmatmul.mubr.f32.gmra.mrb[0].mxu0 %v2419
        %v2492 = vpop.f32.mrb[0].mxu0
        %v2493 = vadd.f32 %v2412, %v2492
        %v2494 = vpop.f32.mrb[0].mxu0
        %2495 = vdwg.mxu0
        %v2496 = vld [vmem:[%s756] sm:$0x1]
        %v2497 = vlaneseq
        %v2498 = vshrl.u32 %v2497, 7
        %v2499 = vsub.s32 0, %v2498
        %v2500 = vrot.slane %v2496, %v2499
        %v2501 = vadd.f32 %v2488, %v2500
        %v2502 = vadd.f32 %v2493, %v2500
        %vm2503 = vcmp.gt.f32.partialorder %v1153, 0.5
        %vm2504 = vcmp.gt.f32.partialorder %v1154, 0.5
        %v2505 = vsel %vm2503, 1, 0
        %v2506 = vsel %vm2504, 1, 0
        %2507 = vset.pattern.permute.xlu0 0
        %2508 = vperm.xlu0 %2507, %v2505
        %v2509 = vpop.permute.xlu0 %2508
        %2510 = vset.pattern.permute.xlu0 0
        %2511 = vperm.xlu0 %2510, %v2506
        %v2512 = vpop.permute.xlu0 %2511
        %vm2513 = vcmp.eq.s32.totalorder %v2509, 1
        %vm2514 = vcmp.eq.s32.totalorder %v2512, 1
        %v2515 = vsel %vm2513, 0.0, %v2501
        %v2516 = vsel %vm2514, 0.0, %v2502
        %v2517 = vadd.f32 %v1105, %v2515
        %v2518 = vadd.f32 %v1106, %v2516
        %v2519 = vld [vmem:[%s756 + $0x1] sm:$0x1]
        %v2520 = vld [vmem:[%s756 + $0x2] sm:$0x1]
        %v2521 = vsel %vm1166, %v2517, 0.0
        %2522 = vadd.xlane.f32.xlu0 %v2521
        %v2523 = vpop.xlane.xlu0 %2522
        %v2524 = vsel %vm1166, %v2518, 0.0
        %2525 = vadd.xlane.f32.xlu0 %v2524
        %v2526 = vpop.xlane.xlu0 %2525
        %v2527 = vrcp.pop 32.0
        %v2528 = vmul.f32 %v2523, %v2527
        %v2529 = vmul.f32 %v2526, %v2527
        %v2530 = vmul.f32 %v2517, %v2517
        %v2531 = vmul.f32 %v2518, %v2518
        %v2532 = vsel %vm1166, %v2530, 0.0
        %2533 = vadd.xlane.f32.xlu0 %v2532
        %v2534 = vpop.xlane.xlu0 %2533
        %v2535 = vsel %vm1166, %v2531, 0.0
        %2536 = vadd.xlane.f32.xlu0 %v2535
        %v2537 = vpop.xlane.xlu0 %2536
        %v2538 = vmul.f32 %v2534, %v2527
        %v2539 = vmul.f32 %v2537, %v2527
        %v2540 = vmul.f32 %v2528, %v2528
        %v2541 = vmul.f32 %v2529, %v2529
        %v2542 = vsub.f32 %v2538, %v2540
        %v2543 = vsub.f32 %v2539, %v2541
        %v2544 = vmax.f32 %v2542, 0.0
        %v2545 = vmax.f32 %v2543, 0.0
        %v2546 = vsub.f32 %v2517, %v2528
        %v2547 = vsub.f32 %v2518, %v2529
        %v2548 = vadd.f32 %v2544, 1e-05
        %v2549 = vadd.f32 %v2545, 1e-05
        %v2550 = vrsqrt.pop %v2548
        %v2551 = vrsqrt.pop %v2549
        %v2552 = vmul.f32 %v2546, %v2550
        %v2553 = vmul.f32 %v2547, %v2551
        %v2554 = vlaneseq
        %v2555 = vshrl.u32 %v2554, 7
        %v2556 = vsub.s32 0, %v2555
        %v2557 = vrot.slane %v2519, %v2556
        %v2558 = vmul.f32 %v2552, %v2557
        %v2559 = vmul.f32 %v2553, %v2557
        %v2560 = vlaneseq
        %v2561 = vshrl.u32 %v2560, 7
        %v2562 = vsub.s32 0, %v2561
        %v2563 = vrot.slane %v2520, %v2562
        %v2564 = vadd.f32 %v2558, %v2563
        %v2565 = vadd.f32 %v2559, %v2563
        %v2566 = vld [vmem:[%s761] sm:$0xff]
        %v2567 = vld [vmem:[%s761 + $0x8] sm:$0xff]
        %v2568 = vld [vmem:[%s761 + $0x10] sm:$0xff]
        %v2569 = vld [vmem:[%s761 + $0x18] sm:$0xff]
        %v2570 = vld [vmem:[%s764] sm:$0x1]
        %v2572 = vlaneseq
        %v2573 = vshrl.u32 %v2572, 7
        %v2574 = vsub.s32 0, %v2573
        %v2575 = vrot.slane %v2570, %v2574
        %v2578 = vsel %vm1166, %v2564, 0
        %v2581 = vsel %vm1166, %v2565, 0
        %2583 = vmatprep.subr.mxu0 0.0
        %2584 = vmatpush1.msra.mxu0 %v2566
        %2585 = vmatprep.subr.mxu0 0.0
        %2586 = vmatpush1.msra.mxu0 %v2567
        %2587 = vmatprep.subr.mxu0 0.0
        %2588 = vmatpush1.msra.mxu0 %v2568
        %2589 = vmatprep.subr.mxu0 0.0
        %2590 = vmatpush1.msra.mxu0 %v2569
        %2591 = vmatprep.subr.mxu0 0.0
        %2592 = vmatpush1.msra.mxu0 0.0
        %2593 = vmatprep.subr.mxu0 0.0
        %2594 = vmatpush1.msra.mxu0 0.0
        %2595 = vmatprep.subr.mxu0 0.0
        %2596 = vmatpush1.msra.mxu0 0.0
        %2597 = vmatprep.subr.mxu0 0.0
        %2598 = vmatpush1.msra.mxu0 0.0
        %2599 = vmatprep.subr.mxu0 0.0
        %2600 = vmatpush1.msra.mxu0 0.0
        %2601 = vmatprep.subr.mxu0 0.0
        %2602 = vmatpush1.msra.mxu0 0.0
        %2603 = vmatprep.subr.mxu0 0.0
        %2604 = vmatpush1.msra.mxu0 0.0
        %2605 = vmatprep.subr.mxu0 0.0
        %2606 = vmatpush1.msra.mxu0 0.0
        %2607 = vmatprep.subr.mxu0 0.0
        %2608 = vmatpush1.msra.mxu0 0.0
        %2609 = vmatprep.subr.mxu0 0.0
        %2610 = vmatpush1.msra.mxu0 0.0
        %2611 = vmatprep.subr.mxu0 0.0
        %2612 = vmatpush1.msra.mxu0 0.0
        %2613 = vmatprep.subr.mxu0 0.0
        %2614 = vmatpush1.msra.mxu0 0.0
        %2615 = vmatprep.subr.mxu0 0.0
        %2616 = vmatpush1.msra.mxu0 0.0
        %2617 = vmatprep.subr.mxu0 0.0
        %2618 = vmatpush1.msra.mxu0 0.0
        %2619 = vmatprep.subr.mxu0 0.0
        %2620 = vmatpush1.msra.mxu0 0.0
        %2621 = vmatprep.subr.mxu0 0.0
        %2622 = vmatpush1.msra.mxu0 0.0
        %2623 = vmatprep.subr.mxu0 0.0
        %2624 = vmatpush1.msra.mxu0 0.0
        %2625 = vmatprep.subr.mxu0 0.0
        %2626 = vmatpush1.msra.mxu0 0.0
        %2627 = vmatprep.subr.mxu0 0.0
        %2628 = vmatpush1.msra.mxu0 0.0
        %2629 = vmatprep.subr.mxu0 0.0
        %2630 = vmatpush1.msra.mxu0 0.0
        %2631 = vmatprep.subr.mxu0 0.0
        %2632 = vmatpush1.msra.mxu0 0.0
        %2633 = vmatprep.subr.mxu0 0.0
        %2634 = vmatpush1.msra.mxu0 0.0
        %2635 = vmatprep.subr.mxu0 0.0
        %2636 = vmatpush1.msra.mxu0 0.0
        %2637 = vmatprep.subr.mxu0 0.0
        %2638 = vmatpush1.msra.mxu0 0.0
        %2639 = vmatprep.subr.mxu0 0.0
        %2640 = vmatpush1.msra.mxu0 0.0
        %2641 = vmatprep.subr.mxu0 0.0
        %2642 = vmatpush1.msra.mxu0 0.0
        %2643 = vmatprep.subr.mxu0 0.0
        %2644 = vmatpush1.msra.mxu0 0.0
        %2645 = vmatprep.subr.mxu0 0.0
        %2646 = vmatpush1.msra.mxu0 0.0
        %2647 = vmatprep.mubr.f32.mxu0 0.0
        %2648 = vmatmul.mubr.f32.gmra.mrb[0].mxu0 %v2578
        %v2649 = vpop.f32.mrb[0].mxu0
        %v2650 = vadd.f32 %v2575, %v2649
        %v2651 = vpop.f32.mrb[0].mxu0
        %2652 = vmatprep.mubr.f32.mxu0 0.0
        %2653 = vmatmul.mubr.f32.gmra.mrb[0].mxu0 %v2581
        %v2654 = vpop.f32.mrb[0].mxu0
        %v2655 = vadd.f32 %v2575, %v2654
        %v2656 = vpop.f32.mrb[0].mxu0
        %2657 = vdwg.mxu0
        %v2658 = vmax.f32 %v2650, 0.0
        %v2659 = vmax.f32 %v2655, 0.0
        %v2660 = vld [vmem:[%s769] sm:$0xff]
        %v2661 = vld [vmem:[%s769 + $0x8] sm:$0xff]
        %v2662 = vld [vmem:[%s769 + $0x10] sm:$0xff]
        %v2663 = vld [vmem:[%s769 + $0x18] sm:$0xff]
        %v2665 = vsel %vm1166, %v2658, 0
        %v2668 = vsel %vm1166, %v2659, 0
        %2670 = vmatprep.subr.mxu0 0.0
        %2671 = vmatpush1.msra.mxu0 %v2660
        %2672 = vmatprep.subr.mxu0 0.0
        %2673 = vmatpush1.msra.mxu0 %v2661
        %2674 = vmatprep.subr.mxu0 0.0
        %2675 = vmatpush1.msra.mxu0 %v2662
        %2676 = vmatprep.subr.mxu0 0.0
        %2677 = vmatpush1.msra.mxu0 %v2663
        %2678 = vmatprep.subr.mxu0 0.0
        %2679 = vmatpush1.msra.mxu0 0.0
        %2680 = vmatprep.subr.mxu0 0.0
        %2681 = vmatpush1.msra.mxu0 0.0
        %2682 = vmatprep.subr.mxu0 0.0
        %2683 = vmatpush1.msra.mxu0 0.0
        %2684 = vmatprep.subr.mxu0 0.0
        %2685 = vmatpush1.msra.mxu0 0.0
        %2686 = vmatprep.subr.mxu0 0.0
        %2687 = vmatpush1.msra.mxu0 0.0
        %2688 = vmatprep.subr.mxu0 0.0
        %2689 = vmatpush1.msra.mxu0 0.0
        %2690 = vmatprep.subr.mxu0 0.0
        %2691 = vmatpush1.msra.mxu0 0.0
        %2692 = vmatprep.subr.mxu0 0.0
        %2693 = vmatpush1.msra.mxu0 0.0
        %2694 = vmatprep.subr.mxu0 0.0
        %2695 = vmatpush1.msra.mxu0 0.0
        %2696 = vmatprep.subr.mxu0 0.0
        %2697 = vmatpush1.msra.mxu0 0.0
        %2698 = vmatprep.subr.mxu0 0.0
        %2699 = vmatpush1.msra.mxu0 0.0
        %2700 = vmatprep.subr.mxu0 0.0
        %2701 = vmatpush1.msra.mxu0 0.0
        %2702 = vmatprep.subr.mxu0 0.0
        %2703 = vmatpush1.msra.mxu0 0.0
        %2704 = vmatprep.subr.mxu0 0.0
        %2705 = vmatpush1.msra.mxu0 0.0
        %2706 = vmatprep.subr.mxu0 0.0
        %2707 = vmatpush1.msra.mxu0 0.0
        %2708 = vmatprep.subr.mxu0 0.0
        %2709 = vmatpush1.msra.mxu0 0.0
        %2710 = vmatprep.subr.mxu0 0.0
        %2711 = vmatpush1.msra.mxu0 0.0
        %2712 = vmatprep.subr.mxu0 0.0
        %2713 = vmatpush1.msra.mxu0 0.0
        %2714 = vmatprep.subr.mxu0 0.0
        %2715 = vmatpush1.msra.mxu0 0.0
        %2716 = vmatprep.subr.mxu0 0.0
        %2717 = vmatpush1.msra.mxu0 0.0
        %2718 = vmatprep.subr.mxu0 0.0
        %2719 = vmatpush1.msra.mxu0 0.0
        %2720 = vmatprep.subr.mxu0 0.0
        %2721 = vmatpush1.msra.mxu0 0.0
        %2722 = vmatprep.subr.mxu0 0.0
        %2723 = vmatpush1.msra.mxu0 0.0
        %2724 = vmatprep.subr.mxu0 0.0
        %2725 = vmatpush1.msra.mxu0 0.0
        %2726 = vmatprep.subr.mxu0 0.0
        %2727 = vmatpush1.msra.mxu0 0.0
        %2728 = vmatprep.subr.mxu0 0.0
        %2729 = vmatpush1.msra.mxu0 0.0
        %2730 = vmatprep.subr.mxu0 0.0
        %2731 = vmatpush1.msra.mxu0 0.0
        %2732 = vmatprep.subr.mxu0 0.0
        %2733 = vmatpush1.msra.mxu0 0.0
        %2734 = vmatprep.mubr.f32.mxu0 0.0
        %2735 = vmatmul.mubr.f32.gmra.mrb[0].mxu0 %v2665
        %v2736 = vpop.f32.mrb[0].mxu0
        %v2737 = vadd.f32 0.0, %v2736
        %v2738 = vpop.f32.mrb[0].mxu0
        %2739 = vmatprep.mubr.f32.mxu0 0.0
        %2740 = vmatmul.mubr.f32.gmra.mrb[0].mxu0 %v2668
        %v2741 = vpop.f32.mrb[0].mxu0
        %v2742 = vadd.f32 0.0, %v2741
        %v2743 = vpop.f32.mrb[0].mxu0
        %2744 = vdwg.mxu0
        %v2745 = vadd.f32 %v2564, %v2737
        %v2746 = vadd.f32 %v2565, %v2742
        %v2747 = vld [vmem:[%s756 + $0x3] sm:$0x1]
        %v2748 = vlaneseq
        %v2749 = vshrl.u32 %v2748, 7
        %v2750 = vsub.s32 0, %v2749
        %v2751 = vrot.slane %v2747, %v2750
        %v2752 = vadd.f32 %v2745, %v2751
        %v2753 = vadd.f32 %v2746, %v2751
        %v2754 = vld [vmem:[%s756 + $0x4] sm:$0x1]
        %v2755 = vld [vmem:[%s756 + $0x5] sm:$0x1]
        %v2756 = vsel %vm1166, %v2752, 0.0
        %2757 = vadd.xlane.f32.xlu0 %v2756
        %v2758 = vpop.xlane.xlu0 %2757
        %v2759 = vsel %vm1166, %v2753, 0.0
        %2760 = vadd.xlane.f32.xlu0 %v2759
        %v2761 = vpop.xlane.xlu0 %2760
        %v2762 = vmul.f32 %v2758, %v2527
        %v2763 = vmul.f32 %v2761, %v2527
        %v2764 = vmul.f32 %v2752, %v2752
        %v2765 = vmul.f32 %v2753, %v2753
        %v2766 = vsel %vm1166, %v2764, 0.0
        %2767 = vadd.xlane.f32.xlu0 %v2766
        %v2768 = vpop.xlane.xlu0 %2767
        %v2769 = vsel %vm1166, %v2765, 0.0
        %2770 = vadd.xlane.f32.xlu0 %v2769
        %v2771 = vpop.xlane.xlu0 %2770
        %v2772 = vmul.f32 %v2768, %v2527
        %v2773 = vmul.f32 %v2771, %v2527
        %v2774 = vmul.f32 %v2762, %v2762
        %v2775 = vmul.f32 %v2763, %v2763
        %v2776 = vsub.f32 %v2772, %v2774
        %v2777 = vsub.f32 %v2773, %v2775
        %v2778 = vmax.f32 %v2776, 0.0
        %v2779 = vmax.f32 %v2777, 0.0
        %v2780 = vsub.f32 %v2752, %v2762
        %v2781 = vsub.f32 %v2753, %v2763
        %v2782 = vadd.f32 %v2778, 1e-05
        %v2783 = vadd.f32 %v2779, 1e-05
        %v2784 = vrsqrt.pop %v2782
        %v2785 = vrsqrt.pop %v2783
        %v2786 = vmul.f32 %v2780, %v2784
        %v2787 = vmul.f32 %v2781, %v2785
        %v2788 = vlaneseq
        %v2789 = vshrl.u32 %v2788, 7
        %v2790 = vsub.s32 0, %v2789
        %v2791 = vrot.slane %v2754, %v2790
        %v2792 = vmul.f32 %v2786, %v2791
        %v2793 = vmul.f32 %v2787, %v2791
        %v2794 = vlaneseq
        %v2795 = vshrl.u32 %v2794, 7
        %v2796 = vsub.s32 0, %v2795
        %v2797 = vrot.slane %v2755, %v2796
        %v2798 = vadd.f32 %v2792, %v2797
        %v2799 = vadd.f32 %v2793, %v2797
        %2800 = vst.msk [vmem:[#allocation2] sm:$0xff] %vm1166, %v2798
        %2801 = vst.msk [vmem:[#allocation2 + $0x8] sm:$0xff] %vm1166, %v2799
        %p2802 = scmp.eq.s32.totalorder %s33, 1
        // Predicated region
        $region89: #{attnhp_forward.1} parent=83 // pred_check
          %p2803 = pneg %p2802
        $region90: #{attnhp_forward.1} parent=83 // pred_check_branch
          %2805 = sbr.rel (%p2803) target = $region92
        $region91: #{attnhp_forward.1} parent=83 // pred_region
          %2806 = vst.msk [vmem:[#allocation3] sm:$0xff] %vm1166, %v2798
          %2807 = vst.msk [vmem:[#allocation3 + $0x8] sm:$0xff] %vm1166, %v2799
        $region92: #{attnhp_forward.1} parent=83 // pred_fallthru
          _
        // Predicated region
        $region93: #{attnhp_forward.1} parent=83 // pred_check
          %p2808 = pneg %p464
        $region94: #{attnhp_forward.1} parent=83 // pred_check_branch
          %2810 = sbr.rel (%p2808) target = $region96
        $region95: #{attnhp_forward.1} parent=83 // pred_region
          %s2811 = smul.u32 2, %s32
          %s2813 = ssub.s32 256, 256
          %2814 = vsyncadd [#allocation4], %s2813
          %s2815 = smul.addr %s2811, 128
          %s2816 = scalar_lea.hbm %s16, %s2815
          %s2817 = sshll.u32 [#allocation3], 4
          %s2818 = int_to_ptr.vmem [resolvable:$true] %s2817
          %2823 = dma.vmem_to_hbm [thread:$0]  %s2818, 256, %s2816, [#allocation4], 128, 128, 8
        $region96: #{attnhp_forward.1} parent=83 // pred_fallthru
          _
        // Predicated region
        $region97: #{attnhp_forward.1} parent=83 // pred_check
          %p2824 = pneg %p464
        $region98: #{attnhp_forward.1} parent=83 // pred_check_branch
          %2826 = sbr.rel (%p2824) target = $region100
        $region99: #{attnhp_forward.1} parent=83 // pred_region
          %2827 = dma.done [#allocation4], 256
        $region100: #{attnhp_forward.1} parent=83 // pred_fallthru
          _
      $region84: #{attnhp_forward.1} parent=5 // pred_fallthru
        _
      %p2828 = scmp.le.s32.totalorder 2, %s23
      // Predicated region
      $region101: #{attnhp_forward.1} parent=5 // pred_check
        %p2829 = pneg %p2828
      $region102: #{attnhp_forward.1} parent=5 // pred_check_branch
        %2831 = sbr.rel (%p2829) target = $region104
      $region103: #{attnhp_forward.1} parent=5 // pred_region
        %s2832 = ssub.s32 %s23, 2
      $region104: #{attnhp_forward.1} parent=5 // pred_fallthru
        _
    $region6: #{attnhp_forward.1} parent=1 // loop_footer
      %s27 = sadd.s32 1, %s23
    $region7: #{attnhp_forward.1} parent=1 // loop_footer_branch
      %22 = sbr.rel target = $region3
    $region8: #{attnhp_forward.1} parent=1 // loop_exit
      _
    %2833 = vsyncpa [#allocation4], 1
    %s2834 = scalar_lea.sflag [#allocation4], 1
    %2835 = vsyncpa %s2834, 1

</llo_original>
